<compile_context>
chip_gen: v5e
topology: v5e:2x2
jax: 0.10.0
libtpu: 0.0.40
codegen_flags: <defaults>
</compile_context>

<pallas_src>
import functools
import math

import jax
import jax.numpy as jnp
import numpy as np
from jax import lax
from jax.experimental import pallas as pl
from jax.experimental.pallas import tpu as pltpu


# ----------------------------------------------------------------------------
# Pallas kernel: one grid step == a chunk of `time_chunk` LSTM time steps.
# Only the recurrent part runs here; the input projection for layer 0 was
# precomputed (gx_ref already holds  z_t @ W_ih0^T + b_ih0 + b_hh0).
# ----------------------------------------------------------------------------
def _lstm_recurrence_kernel(num_layers, hidden_size, time_chunk,
                            gx_ref, h0_ref, c0_ref, whh_ref, wih_hi_ref,
                            b_hi_ref, hout_ref, h_sc, c_sc):
    L, H = num_layers, hidden_size

    # Initialize the recurrent state from (h_0, c_0) on the first chunk only.
    @pl.when(pl.program_id(0) == 0)
    def _():
        h_sc[...] = h0_ref[...].astype(jnp.float32)
        c_sc[...] = c0_ref[...].astype(jnp.float32)

    def step(s, carry):
        gates_in = gx_ref[s]                       # (B, 4H) precomputed layer-0 gates
        h_below = None
        for l in range(L):                         # static unroll over layers
            h_prev = h_sc[l]                       # (B, H)
            c_prev = c_sc[l]                       # (B, H)
            if l == 0:
                gates = gates_in + jnp.dot(
                    h_prev, whh_ref[0], preferred_element_type=jnp.float32)
            else:
                gates = (jnp.dot(h_below, wih_hi_ref[l - 1],
                                 preferred_element_type=jnp.float32)
                         + jnp.dot(h_prev, whh_ref[l],
                                   preferred_element_type=jnp.float32)
                         + b_hi_ref[l - 1])        # (B, 4H)

            # Gate order is (i, f, o, g): one fused sigmoid over the first 3H
            # lanes, one tanh over the last H lanes.
            sig = jax.nn.sigmoid(gates[:, :3 * H])
            i_g = sig[:, 0 * H:1 * H]
            f_g = sig[:, 1 * H:2 * H]
            o_g = sig[:, 2 * H:3 * H]
            g_g = jnp.tanh(gates[:, 3 * H:])

            c_new = f_g * c_prev + i_g * g_g
            h_new = o_g * jnp.tanh(c_new)

            h_sc[l] = h_new
            c_sc[l] = c_new
            h_below = h_new

        hout_ref[s] = h_below.astype(hout_ref.dtype)   # top-layer h for this step
        return carry

    lax.fori_loop(0, time_chunk, step, 0, unroll=True)


# ----------------------------------------------------------------------------
# Weight packing helpers
# ----------------------------------------------------------------------------
def _reorder_gates(w):
    """PyTorch gate order (i, f, g, o) -> kernel order (i, f, o, g) along axis 0."""
    i, f, g, o = jnp.split(w, 4, axis=0)
    return jnp.concatenate([i, f, o, g], axis=0)


# ----------------------------------------------------------------------------
# Wrapper: hoisted projections + pallas_call for the recurrence
# ----------------------------------------------------------------------------
def decoder_forward(z, h0, c0, params, *, time_chunk=16):
    """z: (B, T, In), h0/c0: (L, B, H).  Returns (B, T, O)."""
    B, T, In = z.shape
    L, _, H = h0.shape
    f32 = jnp.float32

    # --- pack weights: gate order (i,f,o,g), transposed so the kernel does x @ W
    wih0_t = _reorder_gates(params["w_ih"][0]).T.astype(f32)              # (In, 4H)
    b0 = _reorder_gates(params["b_ih"][0] + params["b_hh"][0]).astype(f32)  # (4H,)
    whh_t = jnp.stack([_reorder_gates(params["w_hh"][l]).T
                       for l in range(L)]).astype(f32)                    # (L, H, 4H)
    if L > 1:
        wih_hi = jnp.stack([_reorder_gates(params["w_ih"][l]).T
                            for l in range(1, L)]).astype(f32)            # (L-1, H, 4H)
        b_hi = jnp.stack([_reorder_gates(params["b_ih"][l] + params["b_hh"][l])
                          for l in range(1, L)])[:, None, :].astype(f32)  # (L-1, 1, 4H)
    else:
        wih_hi = jnp.zeros((1, H, 4 * H), f32)        # never read when L == 1
        b_hi = jnp.zeros((1, 1, 4 * H), f32)
    Lm1 = wih_hi.shape[0]

    # --- hoisted input projection: one large matmul over all T*B rows,
    #     producing the layer-0 pre-gates time-major for the kernel.
    gates_x = jnp.einsum('bti,ig->tbg', z.astype(f32), wih0_t) + b0       # (T, B, 4H)

    # --- chunk the time axis (amortize per-grid-step overhead)
    tc = max(1, min(time_chunk, T))
    T_pad = math.ceil(T / tc) * tc
    if T_pad > T:
        gates_x = jnp.pad(gates_x, ((0, T_pad - T), (0, 0), (0, 0)))

    kernel = functools.partial(_lstm_recurrence_kernel, L, H, tc)
    const3 = lambda shape: pl.BlockSpec(shape, lambda t: (0, 0, 0))

    # Resident weights can get large for big H/L: raise the scoped VMEM limit
    # only when needed (keeps the small-model path at compiler defaults).
    weight_bytes = int(whh_t.size + wih_hi.size + b_hi.size) * 4
    compiler_kwargs = dict(dimension_semantics=("arbitrary",))   # time is sequential
    if weight_bytes > 24 * 1024 * 1024:
        compiler_kwargs["vmem_limit_bytes"] = int(
            min(2 * weight_bytes + (16 << 20), 100 * 1024 * 1024))
    # TODO(synk): for v7x, optionally cast W_hh/W_ih to bf16 (fp32 accumulate) and
    # add a "parallel" batch-shard grid axis to feed the second TensorCore.

    h_top = pl.pallas_call(
        kernel,
        out_shape=jax.ShapeDtypeStruct((T_pad, B, H), f32),
        grid_spec=pltpu.PrefetchScalarGridSpec(
            num_scalar_prefetch=0,
            grid=(T_pad // tc,),
            in_specs=[
                pl.BlockSpec((tc, B, 4 * H), lambda t: (t, 0, 0)),  # layer-0 pre-gates
                const3((L, B, H)),                                   # h0
                const3((L, B, H)),                                   # c0
                const3((L, H, 4 * H)),                               # W_hh^T (all layers)
                const3((Lm1, H, 4 * H)),                             # W_ih^T (layers 1..)
                const3((Lm1, 1, 4 * H)),                             # bias   (layers 1..)
            ],
            out_specs=pl.BlockSpec((tc, B, H), lambda t: (t, 0, 0)),
            scratch_shapes=[
                pltpu.VMEM((L, B, H), f32),                          # h state
                pltpu.VMEM((L, B, H), f32),                          # c state
            ],
        ),
        compiler_params=pltpu.CompilerParams(**compiler_kwargs),
    )(gates_x, h0.astype(f32), c0.astype(f32), whh_t, wih_hi, b_hi)

    h_top = h_top[:T]                                                 # (T, B, H)

    # --- hoisted final FC: one large matmul, output directly batch-first.
    out = (jnp.einsum('tbh,oh->bto', h_top, params["fc_w"].astype(f32))
           + params["fc_b"].astype(f32))                              # (B, T, O)
    return out


# ----------------------------------------------------------------------------
# Pure-JAX reference (for a correctness check)
# ----------------------------------------------------------------------------
def decoder_ref(z, h0, c0, params):
    B, T, _ = z.shape
    L = h0.shape[0]
    h = [h0[l] for l in range(L)]
    c = [c0[l] for l in range(L)]
    outs = []
    for t in range(T):
        x = z[:, t, :]
        for l in range(L):
            gates = (x @ params["w_ih"][l].T + h[l] @ params["w_hh"][l].T
                     + params["b_ih"][l] + params["b_hh"][l])
            i, f, g, o = jnp.split(gates, 4, axis=-1)
            c[l] = jax.nn.sigmoid(f) * c[l] + jax.nn.sigmoid(i) * jnp.tanh(g)
            h[l] = jax.nn.sigmoid(o) * jnp.tanh(c[l])
            x = h[l]
        outs.append(x @ params["fc_w"].T + params["fc_b"])
    return jnp.stack(outs, axis=1)


# ----------------------------------------------------------------------------
# Deterministic parameter init (PyTorch-style uniform(-1/sqrt(H), 1/sqrt(H)))
# ----------------------------------------------------------------------------
def init_params(key, input_size, hidden_size, num_layers, output_size):
    k = 1.0 / math.sqrt(hidden_size)
    params = {"w_ih": [], "w_hh": [], "b_ih": [], "b_hh": []}
    for l in range(num_layers):
        in_dim = input_size if l == 0 else hidden_size
        key, k1, k2, k3, k4 = jax.random.split(key, 5)
        params["w_ih"].append(jax.random.uniform(
            k1, (4 * hidden_size, in_dim), jnp.float32, -k, k))
        params["w_hh"].append(jax.random.uniform(
            k2, (4 * hidden_size, hidden_size), jnp.float32, -k, k))
        params["b_ih"].append(jax.random.uniform(
            k3, (4 * hidden_size,), jnp.float32, -k, k))
        params["b_hh"].append(jax.random.uniform(
            k4, (4 * hidden_size,), jnp.float32, -k, k))
    key, k5, k6 = jax.random.split(key, 3)
    kf = 1.0 / math.sqrt(hidden_size)
    params["fc_w"] = jax.random.uniform(
        k5, (output_size, hidden_size), jnp.float32, -kf, kf)
    params["fc_b"] = jax.random.uniform(
        k6, (output_size,), jnp.float32, -kf, kf)
    return params


if __name__ == "__main__":
    B, T = 2, 8
    input_size, hidden_size, num_layers, output_size = 16, 32, 2, 8

    key = jax.random.PRNGKey(0)
    kp, kz, kh, kc = jax.random.split(key, 4)
    params = init_params(kp, input_size, hidden_size, num_layers, output_size)

    z = jax.random.normal(kz, (B, T, input_size), jnp.float32)
    h0 = jax.random.normal(kh, (num_layers, B, hidden_size), jnp.float32)
    c0 = jax.random.normal(kc, (num_layers, B, hidden_size), jnp.float32)

    out = decoder_forward(z, h0, c0, params)
    out = jax.block_until_ready(out)

    ref = jax.block_until_ready(decoder_ref(z, h0, c0, params))
    assert out.shape == (B, T, output_size)
    np.testing.assert_allclose(np.asarray(out), np.asarray(ref),
                               rtol=1e-4, atol=1e-4)
    print("KERNEL_OK")
</pallas_src>

<mosaic_0001>
module attributes {stable_mosaic.version = 11 : i64} {
  func.func @_lstm_recurrence_kernel(%arg0: i32, %arg1: memref<8x2x128xf32, #tpu.memory_space<vmem>>, %arg2: memref<2x2x32xf32, #tpu.memory_space<vmem>>, %arg3: memref<2x2x32xf32, #tpu.memory_space<vmem>>, %arg4: memref<2x32x128xf32, #tpu.memory_space<vmem>>, %arg5: memref<1x32x128xf32, #tpu.memory_space<vmem>>, %arg6: memref<1x1x128xf32, #tpu.memory_space<vmem>>, %arg7: memref<8x2x32xf32, #tpu.memory_space<vmem>>, %arg8: memref<2x2x32xf32, #tpu.memory_space<vmem>>, %arg9: memref<2x2x32xf32, #tpu.memory_space<vmem>>) attributes {dimension_semantics = [#tpu.dimension_semantics<arbitrary>], iteration_bounds = array<i64: 1>, scalar_prefetch = 0 : i64, scratch_operands = 2 : i64, tpu.core_type = #tpu.core_type<tc>, window_params = [{transform_indices = @transform_0, window_bounds = array<i64: 8, 2, 128>}, {pipeline_mode = #tpu.pipeline_mode<synchronous>, transform_indices = @transform_1, window_bounds = array<i64: 2, 2, 32>}, {pipeline_mode = #tpu.pipeline_mode<synchronous>, transform_indices = @transform_2, window_bounds = array<i64: 2, 2, 32>}, {pipeline_mode = #tpu.pipeline_mode<synchronous>, transform_indices = @transform_3, window_bounds = array<i64: 2, 32, 128>}, {pipeline_mode = #tpu.pipeline_mode<synchronous>, transform_indices = @transform_4, window_bounds = array<i64: 1, 32, 128>}, {pipeline_mode = #tpu.pipeline_mode<synchronous>, transform_indices = @transform_5, window_bounds = array<i64: 1, 1, 128>}, {transform_indices = @transform_6, window_bounds = array<i64: 8, 2, 32>}]} {
    %c0_i32 = arith.constant 0 : i32
    %0 = arith.cmpi eq, %arg0, %c0_i32 : i32
    %1 = arith.extui %0 : i1 to i32
    %c0_i32_0 = arith.constant 0 : i32
    %2 = arith.cmpi ne, %1, %c0_i32_0 : i32
    scf.if %2 {
      %c0_359 = arith.constant 0 : index
      %c0_360 = arith.constant 0 : index
      %c0_361 = arith.constant 0 : index
      %595 = vector.load %arg2[%c0_359, %c0_360, %c0_361] : memref<2x2x32xf32, #tpu.memory_space<vmem>>, vector<2x2x32xf32>
      %c0_362 = arith.constant 0 : index
      %c0_363 = arith.constant 0 : index
      %c0_364 = arith.constant 0 : index
      %596 = vector.load %arg8[%c0_362, %c0_363, %c0_364] : memref<2x2x32xf32, #tpu.memory_space<vmem>>, vector<2x2x32xf32>
      tpu.vector_store %arg8[%c0_362, %c0_363, %c0_364], %595 {strides = array<i32>} : memref<2x2x32xf32, #tpu.memory_space<vmem>>, vector<2x2x32xf32>,
      %c0_365 = arith.constant 0 : index
      %c0_366 = arith.constant 0 : index
      %c0_367 = arith.constant 0 : index
      %597 = vector.load %arg3[%c0_365, %c0_366, %c0_367] : memref<2x2x32xf32, #tpu.memory_space<vmem>>, vector<2x2x32xf32>
      %c0_368 = arith.constant 0 : index
      %c0_369 = arith.constant 0 : index
      %c0_370 = arith.constant 0 : index
      %598 = vector.load %arg9[%c0_368, %c0_369, %c0_370] : memref<2x2x32xf32, #tpu.memory_space<vmem>>, vector<2x2x32xf32>
      tpu.vector_store %arg9[%c0_368, %c0_369, %c0_370], %597 {strides = array<i32>} : memref<2x2x32xf32, #tpu.memory_space<vmem>>, vector<2x2x32xf32>,
    } else {
    }
    %c0_i32_1 = arith.constant 0 : i32
    %3 = arith.index_cast %c0_i32_1 : i32 to index
    %c0 = arith.constant 0 : index
    %c0_2 = arith.constant 0 : index
    %4 = vector.load %arg1[%3, %c0, %c0_2] : memref<8x2x128xf32, #tpu.memory_space<vmem>>, vector<1x2x128xf32>
    %5 = vector.shape_cast %4 : vector<1x2x128xf32> to vector<2x128xf32>
    %c0_3 = arith.constant 0 : index
    %c0_4 = arith.constant 0 : index
    %c0_5 = arith.constant 0 : index
    %6 = vector.load %arg8[%c0_3, %c0_4, %c0_5] : memref<2x2x32xf32, #tpu.memory_space<vmem>>, vector<1x2x32xf32>
    %7 = vector.shape_cast %6 : vector<1x2x32xf32> to vector<2x32xf32>
    %c0_6 = arith.constant 0 : index
    %c0_7 = arith.constant 0 : index
    %c0_8 = arith.constant 0 : index
    %8 = vector.load %arg9[%c0_6, %c0_7, %c0_8] : memref<2x2x32xf32, #tpu.memory_space<vmem>>, vector<1x2x32xf32>
    %9 = vector.shape_cast %8 : vector<1x2x32xf32> to vector<2x32xf32>
    %c0_9 = arith.constant 0 : index
    %c0_10 = arith.constant 0 : index
    %c0_11 = arith.constant 0 : index
    %10 = vector.load %arg4[%c0_9, %c0_10, %c0_11] : memref<2x32x128xf32, #tpu.memory_space<vmem>>, vector<1x32x128xf32>
    %11 = vector.shape_cast %10 : vector<1x32x128xf32> to vector<32x128xf32>
    %cst = arith.constant dense<0.000000e+00> : vector<2x128xf32>
    %12 = tpu.matmul %7, %11, %cst {dimension_numbers = #tpu.dot_dimension_numbers<[1], [0], [0], [1], [0, 0, 1, 1], [], []>} : vector<2x32xf32>, vector<32x128xf32>, vector<2x128xf32> -> vector<2x128xf32>
    %13 = arith.addf %5, %12 : vector<2x128xf32>
    %14 = vector.extract_strided_slice %13 {offsets = [0, 0], sizes = [2, 96], strides = [1, 1]} : vector<2x128xf32> to vector<2x96xf32>
    %15 = arith.negf %14 : vector<2x96xf32>
    %16 = math.exp %15 : vector<2x96xf32>
    %cst_12 = arith.constant 1.000000e+00 : f32
    %17 = vector.broadcast %cst_12 : f32 to vector<2x96xf32>
    %18 = arith.addf %17, %16 : vector<2x96xf32>
    %19 = arith.divf %17, %18 : vector<2x96xf32>
    %20 = vector.extract_strided_slice %19 {offsets = [0, 0], sizes = [2, 32], strides = [1, 1]} : vector<2x96xf32> to vector<2x32xf32>
    %21 = vector.extract_strided_slice %19 {offsets = [0, 32], sizes = [2, 32], strides = [1, 1]} : vector<2x96xf32> to vector<2x32xf32>
    %22 = vector.extract_strided_slice %19 {offsets = [0, 64], sizes = [2, 32], strides = [1, 1]} : vector<2x96xf32> to vector<2x32xf32>
    %23 = vector.extract_strided_slice %13 {offsets = [0, 96], sizes = [2, 32], strides = [1, 1]} : vector<2x128xf32> to vector<2x32xf32>
    %24 = math.tanh %23 : vector<2x32xf32>
    %25 = arith.mulf %21, %9 : vector<2x32xf32>
    %26 = arith.mulf %20, %24 : vector<2x32xf32>
    %27 = arith.addf %25, %26 : vector<2x32xf32>
    %28 = math.tanh %27 : vector<2x32xf32>
    %29 = arith.mulf %22, %28 : vector<2x32xf32>
    %c0_13 = arith.constant 0 : index
    %c0_14 = arith.constant 0 : index
    %c0_15 = arith.constant 0 : index
    %30 = vector.load %arg8[%c0_13, %c0_14, %c0_15] : memref<2x2x32xf32, #tpu.memory_space<vmem>>, vector<1x2x32xf32>
    %31 = vector.shape_cast %30 : vector<1x2x32xf32> to vector<2x32xf32>
    %32 = vector.shape_cast %29 : vector<2x32xf32> to vector<1x2x32xf32>
    tpu.vector_store %arg8[%c0_13, %c0_14, %c0_15], %32 {strides = array<i32>} : memref<2x2x32xf32, #tpu.memory_space<vmem>>, vector<1x2x32xf32>,
    %c0_16 = arith.constant 0 : index
    %c0_17 = arith.constant 0 : index
    %c0_18 = arith.constant 0 : index
    %33 = vector.load %arg9[%c0_16, %c0_17, %c0_18] : memref<2x2x32xf32, #tpu.memory_space<vmem>>, vector<1x2x32xf32>
    %34 = vector.shape_cast %33 : vector<1x2x32xf32> to vector<2x32xf32>
    %35 = vector.shape_cast %27 : vector<2x32xf32> to vector<1x2x32xf32>
    tpu.vector_store %arg9[%c0_16, %c0_17, %c0_18], %35 {strides = array<i32>} : memref<2x2x32xf32, #tpu.memory_space<vmem>>, vector<1x2x32xf32>,
    %c1 = arith.constant 1 : index
    %c0_19 = arith.constant 0 : index
    %c0_20 = arith.constant 0 : index
    %36 = vector.load %arg8[%c1, %c0_19, %c0_20] : memref<2x2x32xf32, #tpu.memory_space<vmem>>, vector<1x2x32xf32>
    %37 = vector.shape_cast %36 : vector<1x2x32xf32> to vector<2x32xf32>
    %c1_21 = arith.constant 1 : index
    %c0_22 = arith.constant 0 : index
    %c0_23 = arith.constant 0 : index
    %38 = vector.load %arg9[%c1_21, %c0_22, %c0_23] : memref<2x2x32xf32, #tpu.memory_space<vmem>>, vector<1x2x32xf32>
    %39 = vector.shape_cast %38 : vector<1x2x32xf32> to vector<2x32xf32>
    %c0_24 = arith.constant 0 : index
    %c0_25 = arith.constant 0 : index
    %c0_26 = arith.constant 0 : index
    %40 = vector.load %arg5[%c0_24, %c0_25, %c0_26] : memref<1x32x128xf32, #tpu.memory_space<vmem>>, vector<1x32x128xf32>
    %41 = vector.shape_cast %40 : vector<1x32x128xf32> to vector<32x128xf32>
    %cst_27 = arith.constant dense<0.000000e+00> : vector<2x128xf32>
    %42 = tpu.matmul %29, %41, %cst_27 {dimension_numbers = #tpu.dot_dimension_numbers<[1], [0], [0], [1], [0, 0, 1, 1], [], []>} : vector<2x32xf32>, vector<32x128xf32>, vector<2x128xf32> -> vector<2x128xf32>
    %c1_28 = arith.constant 1 : index
    %c0_29 = arith.constant 0 : index
    %c0_30 = arith.constant 0 : index
    %43 = vector.load %arg4[%c1_28, %c0_29, %c0_30] : memref<2x32x128xf32, #tpu.memory_space<vmem>>, vector<1x32x128xf32>
    %44 = vector.shape_cast %43 : vector<1x32x128xf32> to vector<32x128xf32>
    %cst_31 = arith.constant dense<0.000000e+00> : vector<2x128xf32>
    %45 = tpu.matmul %37, %44, %cst_31 {dimension_numbers = #tpu.dot_dimension_numbers<[1], [0], [0], [1], [0, 0, 1, 1], [], []>} : vector<2x32xf32>, vector<32x128xf32>, vector<2x128xf32> -> vector<2x128xf32>
    %46 = arith.addf %42, %45 : vector<2x128xf32>
    %c0_32 = arith.constant 0 : index
    %c0_33 = arith.constant 0 : index
    %c0_34 = arith.constant 0 : index
    %47 = vector.load %arg6[%c0_32, %c0_33, %c0_34] : memref<1x1x128xf32, #tpu.memory_space<vmem>>, vector<1x1x128xf32>
    %48 = vector.shape_cast %47 : vector<1x1x128xf32> to vector<1x128xf32>
    %49 = vector.broadcast %48 : vector<1x128xf32> to vector<2x128xf32>
    %50 = arith.addf %46, %49 : vector<2x128xf32>
    %51 = vector.extract_strided_slice %50 {offsets = [0, 0], sizes = [2, 96], strides = [1, 1]} : vector<2x128xf32> to vector<2x96xf32>
    %52 = arith.negf %51 : vector<2x96xf32>
    %53 = math.exp %52 : vector<2x96xf32>
    %cst_35 = arith.constant 1.000000e+00 : f32
    %54 = vector.broadcast %cst_35 : f32 to vector<2x96xf32>
    %55 = arith.addf %54, %53 : vector<2x96xf32>
    %56 = arith.divf %54, %55 : vector<2x96xf32>
    %57 = vector.extract_strided_slice %56 {offsets = [0, 0], sizes = [2, 32], strides = [1, 1]} : vector<2x96xf32> to vector<2x32xf32>
    %58 = vector.extract_strided_slice %56 {offsets = [0, 32], sizes = [2, 32], strides = [1, 1]} : vector<2x96xf32> to vector<2x32xf32>
    %59 = vector.extract_strided_slice %56 {offsets = [0, 64], sizes = [2, 32], strides = [1, 1]} : vector<2x96xf32> to vector<2x32xf32>
    %60 = vector.extract_strided_slice %50 {offsets = [0, 96], sizes = [2, 32], strides = [1, 1]} : vector<2x128xf32> to vector<2x32xf32>
    %61 = math.tanh %60 : vector<2x32xf32>
    %62 = arith.mulf %58, %39 : vector<2x32xf32>
    %63 = arith.mulf %57, %61 : vector<2x32xf32>
    %64 = arith.addf %62, %63 : vector<2x32xf32>
    %65 = math.tanh %64 : vector<2x32xf32>
    %66 = arith.mulf %59, %65 : vector<2x32xf32>
    %c1_36 = arith.constant 1 : index
    %c0_37 = arith.constant 0 : index
    %c0_38 = arith.constant 0 : index
    %67 = vector.load %arg8[%c1_36, %c0_37, %c0_38] : memref<2x2x32xf32, #tpu.memory_space<vmem>>, vector<1x2x32xf32>
    %68 = vector.shape_cast %67 : vector<1x2x32xf32> to vector<2x32xf32>
    %69 = vector.shape_cast %66 : vector<2x32xf32> to vector<1x2x32xf32>
    tpu.vector_store %arg8[%c1_36, %c0_37, %c0_38], %69 {strides = array<i32>} : memref<2x2x32xf32, #tpu.memory_space<vmem>>, vector<1x2x32xf32>,
    %c1_39 = arith.constant 1 : index
    %c0_40 = arith.constant 0 : index
    %c0_41 = arith.constant 0 : index
    %70 = vector.load %arg9[%c1_39, %c0_40, %c0_41] : memref<2x2x32xf32, #tpu.memory_space<vmem>>, vector<1x2x32xf32>
    %71 = vector.shape_cast %70 : vector<1x2x32xf32> to vector<2x32xf32>
    %72 = vector.shape_cast %64 : vector<2x32xf32> to vector<1x2x32xf32>
    tpu.vector_store %arg9[%c1_39, %c0_40, %c0_41], %72 {strides = array<i32>} : memref<2x2x32xf32, #tpu.memory_space<vmem>>, vector<1x2x32xf32>,
    %73 = arith.index_cast %c0_i32_1 : i32 to index
    %c0_42 = arith.constant 0 : index
    %c0_43 = arith.constant 0 : index
    %74 = vector.load %arg7[%73, %c0_42, %c0_43] : memref<8x2x32xf32, #tpu.memory_space<vmem>>, vector<1x2x32xf32>
    %75 = vector.shape_cast %74 : vector<1x2x32xf32> to vector<2x32xf32>
    %76 = vector.shape_cast %66 : vector<2x32xf32> to vector<1x2x32xf32>
    tpu.vector_store %arg7[%73, %c0_42, %c0_43], %76 {strides = array<i32>} : memref<8x2x32xf32, #tpu.memory_space<vmem>>, vector<1x2x32xf32>,
    %c1_i32 = arith.constant 1 : i32
    %77 = arith.index_cast %c1_i32 : i32 to index
    %c0_44 = arith.constant 0 : index
    %c0_45 = arith.constant 0 : index
    %78 = vector.load %arg1[%77, %c0_44, %c0_45] : memref<8x2x128xf32, #tpu.memory_space<vmem>>, vector<1x2x128xf32>
    %79 = vector.shape_cast %78 : vector<1x2x128xf32> to vector<2x128xf32>
    %c0_46 = arith.constant 0 : index
    %c0_47 = arith.constant 0 : index
    %c0_48 = arith.constant 0 : index
    %80 = vector.load %arg8[%c0_46, %c0_47, %c0_48] : memref<2x2x32xf32, #tpu.memory_space<vmem>>, vector<1x2x32xf32>
    %81 = vector.shape_cast %80 : vector<1x2x32xf32> to vector<2x32xf32>
    %c0_49 = arith.constant 0 : index
    %c0_50 = arith.constant 0 : index
    %c0_51 = arith.constant 0 : index
    %82 = vector.load %arg9[%c0_49, %c0_50, %c0_51] : memref<2x2x32xf32, #tpu.memory_space<vmem>>, vector<1x2x32xf32>
    %83 = vector.shape_cast %82 : vector<1x2x32xf32> to vector<2x32xf32>
    %c0_52 = arith.constant 0 : index
    %c0_53 = arith.constant 0 : index
    %c0_54 = arith.constant 0 : index
    %84 = vector.load %arg4[%c0_52, %c0_53, %c0_54] : memref<2x32x128xf32, #tpu.memory_space<vmem>>, vector<1x32x128xf32>
    %85 = vector.shape_cast %84 : vector<1x32x128xf32> to vector<32x128xf32>
    %cst_55 = arith.constant dense<0.000000e+00> : vector<2x128xf32>
    %86 = tpu.matmul %81, %85, %cst_55 {dimension_numbers = #tpu.dot_dimension_numbers<[1], [0], [0], [1], [0, 0, 1, 1], [], []>} : vector<2x32xf32>, vector<32x128xf32>, vector<2x128xf32> -> vector<2x128xf32>
    %87 = arith.addf %79, %86 : vector<2x128xf32>
    %88 = vector.extract_strided_slice %87 {offsets = [0, 0], sizes = [2, 96], strides = [1, 1]} : vector<2x128xf32> to vector<2x96xf32>
    %89 = arith.negf %88 : vector<2x96xf32>
    %90 = math.exp %89 : vector<2x96xf32>
    %cst_56 = arith.constant 1.000000e+00 : f32
    %91 = vector.broadcast %cst_56 : f32 to vector<2x96xf32>
    %92 = arith.addf %91, %90 : vector<2x96xf32>
    %93 = arith.divf %91, %92 : vector<2x96xf32>
    %94 = vector.extract_strided_slice %93 {offsets = [0, 0], sizes = [2, 32], strides = [1, 1]} : vector<2x96xf32> to vector<2x32xf32>
    %95 = vector.extract_strided_slice %93 {offsets = [0, 32], sizes = [2, 32], strides = [1, 1]} : vector<2x96xf32> to vector<2x32xf32>
    %96 = vector.extract_strided_slice %93 {offsets = [0, 64], sizes = [2, 32], strides = [1, 1]} : vector<2x96xf32> to vector<2x32xf32>
    %97 = vector.extract_strided_slice %87 {offsets = [0, 96], sizes = [2, 32], strides = [1, 1]} : vector<2x128xf32> to vector<2x32xf32>
    %98 = math.tanh %97 : vector<2x32xf32>
    %99 = arith.mulf %95, %83 : vector<2x32xf32>
    %100 = arith.mulf %94, %98 : vector<2x32xf32>
    %101 = arith.addf %99, %100 : vector<2x32xf32>
    %102 = math.tanh %101 : vector<2x32xf32>
    %103 = arith.mulf %96, %102 : vector<2x32xf32>
    %c0_57 = arith.constant 0 : index
    %c0_58 = arith.constant 0 : index
    %c0_59 = arith.constant 0 : index
    %104 = vector.load %arg8[%c0_57, %c0_58, %c0_59] : memref<2x2x32xf32, #tpu.memory_space<vmem>>, vector<1x2x32xf32>
    %105 = vector.shape_cast %104 : vector<1x2x32xf32> to vector<2x32xf32>
    %106 = vector.shape_cast %103 : vector<2x32xf32> to vector<1x2x32xf32>
    tpu.vector_store %arg8[%c0_57, %c0_58, %c0_59], %106 {strides = array<i32>} : memref<2x2x32xf32, #tpu.memory_space<vmem>>, vector<1x2x32xf32>,
    %c0_60 = arith.constant 0 : index
    %c0_61 = arith.constant 0 : index
    %c0_62 = arith.constant 0 : index
    %107 = vector.load %arg9[%c0_60, %c0_61, %c0_62] : memref<2x2x32xf32, #tpu.memory_space<vmem>>, vector<1x2x32xf32>
    %108 = vector.shape_cast %107 : vector<1x2x32xf32> to vector<2x32xf32>
    %109 = vector.shape_cast %101 : vector<2x32xf32> to vector<1x2x32xf32>
    tpu.vector_store %arg9[%c0_60, %c0_61, %c0_62], %109 {strides = array<i32>} : memref<2x2x32xf32, #tpu.memory_space<vmem>>, vector<1x2x32xf32>,
    %c1_63 = arith.constant 1 : index
    %c0_64 = arith.constant 0 : index
    %c0_65 = arith.constant 0 : index
    %110 = vector.load %arg8[%c1_63, %c0_64, %c0_65] : memref<2x2x32xf32, #tpu.memory_space<vmem>>, vector<1x2x32xf32>
    %111 = vector.shape_cast %110 : vector<1x2x32xf32> to vector<2x32xf32>
    %c1_66 = arith.constant 1 : index
    %c0_67 = arith.constant 0 : index
    %c0_68 = arith.constant 0 : index
    %112 = vector.load %arg9[%c1_66, %c0_67, %c0_68] : memref<2x2x32xf32, #tpu.memory_space<vmem>>, vector<1x2x32xf32>
    %113 = vector.shape_cast %112 : vector<1x2x32xf32> to vector<2x32xf32>
    %c0_69 = arith.constant 0 : index
    %c0_70 = arith.constant 0 : index
    %c0_71 = arith.constant 0 : index
    %114 = vector.load %arg5[%c0_69, %c0_70, %c0_71] : memref<1x32x128xf32, #tpu.memory_space<vmem>>, vector<1x32x128xf32>
    %115 = vector.shape_cast %114 : vector<1x32x128xf32> to vector<32x128xf32>
    %cst_72 = arith.constant dense<0.000000e+00> : vector<2x128xf32>
    %116 = tpu.matmul %103, %115, %cst_72 {dimension_numbers = #tpu.dot_dimension_numbers<[1], [0], [0], [1], [0, 0, 1, 1], [], []>} : vector<2x32xf32>, vector<32x128xf32>, vector<2x128xf32> -> vector<2x128xf32>
    %c1_73 = arith.constant 1 : index
    %c0_74 = arith.constant 0 : index
    %c0_75 = arith.constant 0 : index
    %117 = vector.load %arg4[%c1_73, %c0_74, %c0_75] : memref<2x32x128xf32, #tpu.memory_space<vmem>>, vector<1x32x128xf32>
    %118 = vector.shape_cast %117 : vector<1x32x128xf32> to vector<32x128xf32>
    %cst_76 = arith.constant dense<0.000000e+00> : vector<2x128xf32>
    %119 = tpu.matmul %111, %118, %cst_76 {dimension_numbers = #tpu.dot_dimension_numbers<[1], [0], [0], [1], [0, 0, 1, 1], [], []>} : vector<2x32xf32>, vector<32x128xf32>, vector<2x128xf32> -> vector<2x128xf32>
    %120 = arith.addf %116, %119 : vector<2x128xf32>
    %c0_77 = arith.constant 0 : index
    %c0_78 = arith.constant 0 : index
    %c0_79 = arith.constant 0 : index
    %121 = vector.load %arg6[%c0_77, %c0_78, %c0_79] : memref<1x1x128xf32, #tpu.memory_space<vmem>>, vector<1x1x128xf32>
    %122 = vector.shape_cast %121 : vector<1x1x128xf32> to vector<1x128xf32>
    %123 = vector.broadcast %122 : vector<1x128xf32> to vector<2x128xf32>
    %124 = arith.addf %120, %123 : vector<2x128xf32>
    %125 = vector.extract_strided_slice %124 {offsets = [0, 0], sizes = [2, 96], strides = [1, 1]} : vector<2x128xf32> to vector<2x96xf32>
    %126 = arith.negf %125 : vector<2x96xf32>
    %127 = math.exp %126 : vector<2x96xf32>
    %cst_80 = arith.constant 1.000000e+00 : f32
    %128 = vector.broadcast %cst_80 : f32 to vector<2x96xf32>
    %129 = arith.addf %128, %127 : vector<2x96xf32>
    %130 = arith.divf %128, %129 : vector<2x96xf32>
    %131 = vector.extract_strided_slice %130 {offsets = [0, 0], sizes = [2, 32], strides = [1, 1]} : vector<2x96xf32> to vector<2x32xf32>
    %132 = vector.extract_strided_slice %130 {offsets = [0, 32], sizes = [2, 32], strides = [1, 1]} : vector<2x96xf32> to vector<2x32xf32>
    %133 = vector.extract_strided_slice %130 {offsets = [0, 64], sizes = [2, 32], strides = [1, 1]} : vector<2x96xf32> to vector<2x32xf32>
    %134 = vector.extract_strided_slice %124 {offsets = [0, 96], sizes = [2, 32], strides = [1, 1]} : vector<2x128xf32> to vector<2x32xf32>
    %135 = math.tanh %134 : vector<2x32xf32>
    %136 = arith.mulf %132, %113 : vector<2x32xf32>
    %137 = arith.mulf %131, %135 : vector<2x32xf32>
    %138 = arith.addf %136, %137 : vector<2x32xf32>
    %139 = math.tanh %138 : vector<2x32xf32>
    %140 = arith.mulf %133, %139 : vector<2x32xf32>
    %c1_81 = arith.constant 1 : index
    %c0_82 = arith.constant 0 : index
    %c0_83 = arith.constant 0 : index
    %141 = vector.load %arg8[%c1_81, %c0_82, %c0_83] : memref<2x2x32xf32, #tpu.memory_space<vmem>>, vector<1x2x32xf32>
    %142 = vector.shape_cast %141 : vector<1x2x32xf32> to vector<2x32xf32>
    %143 = vector.shape_cast %140 : vector<2x32xf32> to vector<1x2x32xf32>
    tpu.vector_store %arg8[%c1_81, %c0_82, %c0_83], %143 {strides = array<i32>} : memref<2x2x32xf32, #tpu.memory_space<vmem>>, vector<1x2x32xf32>,
    %c1_84 = arith.constant 1 : index
    %c0_85 = arith.constant 0 : index
    %c0_86 = arith.constant 0 : index
    %144 = vector.load %arg9[%c1_84, %c0_85, %c0_86] : memref<2x2x32xf32, #tpu.memory_space<vmem>>, vector<1x2x32xf32>
    %145 = vector.shape_cast %144 : vector<1x2x32xf32> to vector<2x32xf32>
    %146 = vector.shape_cast %138 : vector<2x32xf32> to vector<1x2x32xf32>
    tpu.vector_store %arg9[%c1_84, %c0_85, %c0_86], %146 {strides = array<i32>} : memref<2x2x32xf32, #tpu.memory_space<vmem>>, vector<1x2x32xf32>,
    %147 = arith.index_cast %c1_i32 : i32 to index
    %c0_87 = arith.constant 0 : index
    %c0_88 = arith.constant 0 : index
    %148 = vector.load %arg7[%147, %c0_87, %c0_88] : memref<8x2x32xf32, #tpu.memory_space<vmem>>, vector<1x2x32xf32>
    %149 = vector.shape_cast %148 : vector<1x2x32xf32> to vector<2x32xf32>
    %150 = vector.shape_cast %140 : vector<2x32xf32> to vector<1x2x32xf32>
    tpu.vector_store %arg7[%147, %c0_87, %c0_88], %150 {strides = array<i32>} : memref<8x2x32xf32, #tpu.memory_space<vmem>>, vector<1x2x32xf32>,
    %c2_i32 = arith.constant 2 : i32
    %151 = arith.index_cast %c2_i32 : i32 to index
    %c0_89 = arith.constant 0 : index
    %c0_90 = arith.constant 0 : index
    %152 = vector.load %arg1[%151, %c0_89, %c0_90] : memref<8x2x128xf32, #tpu.memory_space<vmem>>, vector<1x2x128xf32>
    %153 = vector.shape_cast %152 : vector<1x2x128xf32> to vector<2x128xf32>
    %c0_91 = arith.constant 0 : index
    %c0_92 = arith.constant 0 : index
    %c0_93 = arith.constant 0 : index
    %154 = vector.load %arg8[%c0_91, %c0_92, %c0_93] : memref<2x2x32xf32, #tpu.memory_space<vmem>>, vector<1x2x32xf32>
    %155 = vector.shape_cast %154 : vector<1x2x32xf32> to vector<2x32xf32>
    %c0_94 = arith.constant 0 : index
    %c0_95 = arith.constant 0 : index
    %c0_96 = arith.constant 0 : index
    %156 = vector.load %arg9[%c0_94, %c0_95, %c0_96] : memref<2x2x32xf32, #tpu.memory_space<vmem>>, vector<1x2x32xf32>
    %157 = vector.shape_cast %156 : vector<1x2x32xf32> to vector<2x32xf32>
    %c0_97 = arith.constant 0 : index
    %c0_98 = arith.constant 0 : index
    %c0_99 = arith.constant 0 : index
    %158 = vector.load %arg4[%c0_97, %c0_98, %c0_99] : memref<2x32x128xf32, #tpu.memory_space<vmem>>, vector<1x32x128xf32>
    %159 = vector.shape_cast %158 : vector<1x32x128xf32> to vector<32x128xf32>
    %cst_100 = arith.constant dense<0.000000e+00> : vector<2x128xf32>
    %160 = tpu.matmul %155, %159, %cst_100 {dimension_numbers = #tpu.dot_dimension_numbers<[1], [0], [0], [1], [0, 0, 1, 1], [], []>} : vector<2x32xf32>, vector<32x128xf32>, vector<2x128xf32> -> vector<2x128xf32>
    %161 = arith.addf %153, %160 : vector<2x128xf32>
    %162 = vector.extract_strided_slice %161 {offsets = [0, 0], sizes = [2, 96], strides = [1, 1]} : vector<2x128xf32> to vector<2x96xf32>
    %163 = arith.negf %162 : vector<2x96xf32>
    %164 = math.exp %163 : vector<2x96xf32>
    %cst_101 = arith.constant 1.000000e+00 : f32
    %165 = vector.broadcast %cst_101 : f32 to vector<2x96xf32>
    %166 = arith.addf %165, %164 : vector<2x96xf32>
    %167 = arith.divf %165, %166 : vector<2x96xf32>
    %168 = vector.extract_strided_slice %167 {offsets = [0, 0], sizes = [2, 32], strides = [1, 1]} : vector<2x96xf32> to vector<2x32xf32>
    %169 = vector.extract_strided_slice %167 {offsets = [0, 32], sizes = [2, 32], strides = [1, 1]} : vector<2x96xf32> to vector<2x32xf32>
    %170 = vector.extract_strided_slice %167 {offsets = [0, 64], sizes = [2, 32], strides = [1, 1]} : vector<2x96xf32> to vector<2x32xf32>
    %171 = vector.extract_strided_slice %161 {offsets = [0, 96], sizes = [2, 32], strides = [1, 1]} : vector<2x128xf32> to vector<2x32xf32>
    %172 = math.tanh %171 : vector<2x32xf32>
    %173 = arith.mulf %169, %157 : vector<2x32xf32>
    %174 = arith.mulf %168, %172 : vector<2x32xf32>
    %175 = arith.addf %173, %174 : vector<2x32xf32>
    %176 = math.tanh %175 : vector<2x32xf32>
    %177 = arith.mulf %170, %176 : vector<2x32xf32>
    %c0_102 = arith.constant 0 : index
    %c0_103 = arith.constant 0 : index
    %c0_104 = arith.constant 0 : index
    %178 = vector.load %arg8[%c0_102, %c0_103, %c0_104] : memref<2x2x32xf32, #tpu.memory_space<vmem>>, vector<1x2x32xf32>
    %179 = vector.shape_cast %178 : vector<1x2x32xf32> to vector<2x32xf32>
    %180 = vector.shape_cast %177 : vector<2x32xf32> to vector<1x2x32xf32>
    tpu.vector_store %arg8[%c0_102, %c0_103, %c0_104], %180 {strides = array<i32>} : memref<2x2x32xf32, #tpu.memory_space<vmem>>, vector<1x2x32xf32>,
    %c0_105 = arith.constant 0 : index
    %c0_106 = arith.constant 0 : index
    %c0_107 = arith.constant 0 : index
    %181 = vector.load %arg9[%c0_105, %c0_106, %c0_107] : memref<2x2x32xf32, #tpu.memory_space<vmem>>, vector<1x2x32xf32>
    %182 = vector.shape_cast %181 : vector<1x2x32xf32> to vector<2x32xf32>
    %183 = vector.shape_cast %175 : vector<2x32xf32> to vector<1x2x32xf32>
    tpu.vector_store %arg9[%c0_105, %c0_106, %c0_107], %183 {strides = array<i32>} : memref<2x2x32xf32, #tpu.memory_space<vmem>>, vector<1x2x32xf32>,
    %c1_108 = arith.constant 1 : index
    %c0_109 = arith.constant 0 : index
    %c0_110 = arith.constant 0 : index
    %184 = vector.load %arg8[%c1_108, %c0_109, %c0_110] : memref<2x2x32xf32, #tpu.memory_space<vmem>>, vector<1x2x32xf32>
    %185 = vector.shape_cast %184 : vector<1x2x32xf32> to vector<2x32xf32>
    %c1_111 = arith.constant 1 : index
    %c0_112 = arith.constant 0 : index
    %c0_113 = arith.constant 0 : index
    %186 = vector.load %arg9[%c1_111, %c0_112, %c0_113] : memref<2x2x32xf32, #tpu.memory_space<vmem>>, vector<1x2x32xf32>
    %187 = vector.shape_cast %186 : vector<1x2x32xf32> to vector<2x32xf32>
    %c0_114 = arith.constant 0 : index
    %c0_115 = arith.constant 0 : index
    %c0_116 = arith.constant 0 : index
    %188 = vector.load %arg5[%c0_114, %c0_115, %c0_116] : memref<1x32x128xf32, #tpu.memory_space<vmem>>, vector<1x32x128xf32>
    %189 = vector.shape_cast %188 : vector<1x32x128xf32> to vector<32x128xf32>
    %cst_117 = arith.constant dense<0.000000e+00> : vector<2x128xf32>
    %190 = tpu.matmul %177, %189, %cst_117 {dimension_numbers = #tpu.dot_dimension_numbers<[1], [0], [0], [1], [0, 0, 1, 1], [], []>} : vector<2x32xf32>, vector<32x128xf32>, vector<2x128xf32> -> vector<2x128xf32>
    %c1_118 = arith.constant 1 : index
    %c0_119 = arith.constant 0 : index
    %c0_120 = arith.constant 0 : index
    %191 = vector.load %arg4[%c1_118, %c0_119, %c0_120] : memref<2x32x128xf32, #tpu.memory_space<vmem>>, vector<1x32x128xf32>
    %192 = vector.shape_cast %191 : vector<1x32x128xf32> to vector<32x128xf32>
    %cst_121 = arith.constant dense<0.000000e+00> : vector<2x128xf32>
    %193 = tpu.matmul %185, %192, %cst_121 {dimension_numbers = #tpu.dot_dimension_numbers<[1], [0], [0], [1], [0, 0, 1, 1], [], []>} : vector<2x32xf32>, vector<32x128xf32>, vector<2x128xf32> -> vector<2x128xf32>
    %194 = arith.addf %190, %193 : vector<2x128xf32>
    %c0_122 = arith.constant 0 : index
    %c0_123 = arith.constant 0 : index
    %c0_124 = arith.constant 0 : index
    %195 = vector.load %arg6[%c0_122, %c0_123, %c0_124] : memref<1x1x128xf32, #tpu.memory_space<vmem>>, vector<1x1x128xf32>
    %196 = vector.shape_cast %195 : vector<1x1x128xf32> to vector<1x128xf32>
    %197 = vector.broadcast %196 : vector<1x128xf32> to vector<2x128xf32>
    %198 = arith.addf %194, %197 : vector<2x128xf32>
    %199 = vector.extract_strided_slice %198 {offsets = [0, 0], sizes = [2, 96], strides = [1, 1]} : vector<2x128xf32> to vector<2x96xf32>
    %200 = arith.negf %199 : vector<2x96xf32>
    %201 = math.exp %200 : vector<2x96xf32>
    %cst_125 = arith.constant 1.000000e+00 : f32
    %202 = vector.broadcast %cst_125 : f32 to vector<2x96xf32>
    %203 = arith.addf %202, %201 : vector<2x96xf32>
    %204 = arith.divf %202, %203 : vector<2x96xf32>
    %205 = vector.extract_strided_slice %204 {offsets = [0, 0], sizes = [2, 32], strides = [1, 1]} : vector<2x96xf32> to vector<2x32xf32>
    %206 = vector.extract_strided_slice %204 {offsets = [0, 32], sizes = [2, 32], strides = [1, 1]} : vector<2x96xf32> to vector<2x32xf32>
    %207 = vector.extract_strided_slice %204 {offsets = [0, 64], sizes = [2, 32], strides = [1, 1]} : vector<2x96xf32> to vector<2x32xf32>
    %208 = vector.extract_strided_slice %198 {offsets = [0, 96], sizes = [2, 32], strides = [1, 1]} : vector<2x128xf32> to vector<2x32xf32>
    %209 = math.tanh %208 : vector<2x32xf32>
    %210 = arith.mulf %206, %187 : vector<2x32xf32>
    %211 = arith.mulf %205, %209 : vector<2x32xf32>
    %212 = arith.addf %210, %211 : vector<2x32xf32>
    %213 = math.tanh %212 : vector<2x32xf32>
    %214 = arith.mulf %207, %213 : vector<2x32xf32>
    %c1_126 = arith.constant 1 : index
    %c0_127 = arith.constant 0 : index
    %c0_128 = arith.constant 0 : index
    %215 = vector.load %arg8[%c1_126, %c0_127, %c0_128] : memref<2x2x32xf32, #tpu.memory_space<vmem>>, vector<1x2x32xf32>
    %216 = vector.shape_cast %215 : vector<1x2x32xf32> to vector<2x32xf32>
    %217 = vector.shape_cast %214 : vector<2x32xf32> to vector<1x2x32xf32>
    tpu.vector_store %arg8[%c1_126, %c0_127, %c0_128], %217 {strides = array<i32>} : memref<2x2x32xf32, #tpu.memory_space<vmem>>, vector<1x2x32xf32>,
    %c1_129 = arith.constant 1 : index
    %c0_130 = arith.constant 0 : index
    %c0_131 = arith.constant 0 : index
    %218 = vector.load %arg9[%c1_129, %c0_130, %c0_131] : memref<2x2x32xf32, #tpu.memory_space<vmem>>, vector<1x2x32xf32>
    %219 = vector.shape_cast %218 : vector<1x2x32xf32> to vector<2x32xf32>
    %220 = vector.shape_cast %212 : vector<2x32xf32> to vector<1x2x32xf32>
    tpu.vector_store %arg9[%c1_129, %c0_130, %c0_131], %220 {strides = array<i32>} : memref<2x2x32xf32, #tpu.memory_space<vmem>>, vector<1x2x32xf32>,
    %221 = arith.index_cast %c2_i32 : i32 to index
    %c0_132 = arith.constant 0 : index
    %c0_133 = arith.constant 0 : index
    %222 = vector.load %arg7[%221, %c0_132, %c0_133] : memref<8x2x32xf32, #tpu.memory_space<vmem>>, vector<1x2x32xf32>
    %223 = vector.shape_cast %222 : vector<1x2x32xf32> to vector<2x32xf32>
    %224 = vector.shape_cast %214 : vector<2x32xf32> to vector<1x2x32xf32>
    tpu.vector_store %arg7[%221, %c0_132, %c0_133], %224 {strides = array<i32>} : memref<8x2x32xf32, #tpu.memory_space<vmem>>, vector<1x2x32xf32>,
    %c3_i32 = arith.constant 3 : i32
    %225 = arith.index_cast %c3_i32 : i32 to index
    %c0_134 = arith.constant 0 : index
    %c0_135 = arith.constant 0 : index
    %226 = vector.load %arg1[%225, %c0_134, %c0_135] : memref<8x2x128xf32, #tpu.memory_space<vmem>>, vector<1x2x128xf32>
    %227 = vector.shape_cast %226 : vector<1x2x128xf32> to vector<2x128xf32>
    %c0_136 = arith.constant 0 : index
    %c0_137 = arith.constant 0 : index
    %c0_138 = arith.constant 0 : index
    %228 = vector.load %arg8[%c0_136, %c0_137, %c0_138] : memref<2x2x32xf32, #tpu.memory_space<vmem>>, vector<1x2x32xf32>
    %229 = vector.shape_cast %228 : vector<1x2x32xf32> to vector<2x32xf32>
    %c0_139 = arith.constant 0 : index
    %c0_140 = arith.constant 0 : index
    %c0_141 = arith.constant 0 : index
    %230 = vector.load %arg9[%c0_139, %c0_140, %c0_141] : memref<2x2x32xf32, #tpu.memory_space<vmem>>, vector<1x2x32xf32>
    %231 = vector.shape_cast %230 : vector<1x2x32xf32> to vector<2x32xf32>
    %c0_142 = arith.constant 0 : index
    %c0_143 = arith.constant 0 : index
    %c0_144 = arith.constant 0 : index
    %232 = vector.load %arg4[%c0_142, %c0_143, %c0_144] : memref<2x32x128xf32, #tpu.memory_space<vmem>>, vector<1x32x128xf32>
    %233 = vector.shape_cast %232 : vector<1x32x128xf32> to vector<32x128xf32>
    %cst_145 = arith.constant dense<0.000000e+00> : vector<2x128xf32>
    %234 = tpu.matmul %229, %233, %cst_145 {dimension_numbers = #tpu.dot_dimension_numbers<[1], [0], [0], [1], [0, 0, 1, 1], [], []>} : vector<2x32xf32>, vector<32x128xf32>, vector<2x128xf32> -> vector<2x128xf32>
    %235 = arith.addf %227, %234 : vector<2x128xf32>
    %236 = vector.extract_strided_slice %235 {offsets = [0, 0], sizes = [2, 96], strides = [1, 1]} : vector<2x128xf32> to vector<2x96xf32>
    %237 = arith.negf %236 : vector<2x96xf32>
    %238 = math.exp %237 : vector<2x96xf32>
    %cst_146 = arith.constant 1.000000e+00 : f32
    %239 = vector.broadcast %cst_146 : f32 to vector<2x96xf32>
    %240 = arith.addf %239, %238 : vector<2x96xf32>
    %241 = arith.divf %239, %240 : vector<2x96xf32>
    %242 = vector.extract_strided_slice %241 {offsets = [0, 0], sizes = [2, 32], strides = [1, 1]} : vector<2x96xf32> to vector<2x32xf32>
    %243 = vector.extract_strided_slice %241 {offsets = [0, 32], sizes = [2, 32], strides = [1, 1]} : vector<2x96xf32> to vector<2x32xf32>
    %244 = vector.extract_strided_slice %241 {offsets = [0, 64], sizes = [2, 32], strides = [1, 1]} : vector<2x96xf32> to vector<2x32xf32>
    %245 = vector.extract_strided_slice %235 {offsets = [0, 96], sizes = [2, 32], strides = [1, 1]} : vector<2x128xf32> to vector<2x32xf32>
    %246 = math.tanh %245 : vector<2x32xf32>
    %247 = arith.mulf %243, %231 : vector<2x32xf32>
    %248 = arith.mulf %242, %246 : vector<2x32xf32>
    %249 = arith.addf %247, %248 : vector<2x32xf32>
    %250 = math.tanh %249 : vector<2x32xf32>
    %251 = arith.mulf %244, %250 : vector<2x32xf32>
    %c0_147 = arith.constant 0 : index
    %c0_148 = arith.constant 0 : index
    %c0_149 = arith.constant 0 : index
    %252 = vector.load %arg8[%c0_147, %c0_148, %c0_149] : memref<2x2x32xf32, #tpu.memory_space<vmem>>, vector<1x2x32xf32>
    %253 = vector.shape_cast %252 : vector<1x2x32xf32> to vector<2x32xf32>
    %254 = vector.shape_cast %251 : vector<2x32xf32> to vector<1x2x32xf32>
    tpu.vector_store %arg8[%c0_147, %c0_148, %c0_149], %254 {strides = array<i32>} : memref<2x2x32xf32, #tpu.memory_space<vmem>>, vector<1x2x32xf32>,
    %c0_150 = arith.constant 0 : index
    %c0_151 = arith.constant 0 : index
    %c0_152 = arith.constant 0 : index
    %255 = vector.load %arg9[%c0_150, %c0_151, %c0_152] : memref<2x2x32xf32, #tpu.memory_space<vmem>>, vector<1x2x32xf32>
    %256 = vector.shape_cast %255 : vector<1x2x32xf32> to vector<2x32xf32>
    %257 = vector.shape_cast %249 : vector<2x32xf32> to vector<1x2x32xf32>
    tpu.vector_store %arg9[%c0_150, %c0_151, %c0_152], %257 {strides = array<i32>} : memref<2x2x32xf32, #tpu.memory_space<vmem>>, vector<1x2x32xf32>,
    %c1_153 = arith.constant 1 : index
    %c0_154 = arith.constant 0 : index
    %c0_155 = arith.constant 0 : index
    %258 = vector.load %arg8[%c1_153, %c0_154, %c0_155] : memref<2x2x32xf32, #tpu.memory_space<vmem>>, vector<1x2x32xf32>
    %259 = vector.shape_cast %258 : vector<1x2x32xf32> to vector<2x32xf32>
    %c1_156 = arith.constant 1 : index
    %c0_157 = arith.constant 0 : index
    %c0_158 = arith.constant 0 : index
    %260 = vector.load %arg9[%c1_156, %c0_157, %c0_158] : memref<2x2x32xf32, #tpu.memory_space<vmem>>, vector<1x2x32xf32>
    %261 = vector.shape_cast %260 : vector<1x2x32xf32> to vector<2x32xf32>
    %c0_159 = arith.constant 0 : index
    %c0_160 = arith.constant 0 : index
    %c0_161 = arith.constant 0 : index
    %262 = vector.load %arg5[%c0_159, %c0_160, %c0_161] : memref<1x32x128xf32, #tpu.memory_space<vmem>>, vector<1x32x128xf32>
    %263 = vector.shape_cast %262 : vector<1x32x128xf32> to vector<32x128xf32>
    %cst_162 = arith.constant dense<0.000000e+00> : vector<2x128xf32>
    %264 = tpu.matmul %251, %263, %cst_162 {dimension_numbers = #tpu.dot_dimension_numbers<[1], [0], [0], [1], [0, 0, 1, 1], [], []>} : vector<2x32xf32>, vector<32x128xf32>, vector<2x128xf32> -> vector<2x128xf32>
    %c1_163 = arith.constant 1 : index
    %c0_164 = arith.constant 0 : index
    %c0_165 = arith.constant 0 : index
    %265 = vector.load %arg4[%c1_163, %c0_164, %c0_165] : memref<2x32x128xf32, #tpu.memory_space<vmem>>, vector<1x32x128xf32>
    %266 = vector.shape_cast %265 : vector<1x32x128xf32> to vector<32x128xf32>
    %cst_166 = arith.constant dense<0.000000e+00> : vector<2x128xf32>
    %267 = tpu.matmul %259, %266, %cst_166 {dimension_numbers = #tpu.dot_dimension_numbers<[1], [0], [0], [1], [0, 0, 1, 1], [], []>} : vector<2x32xf32>, vector<32x128xf32>, vector<2x128xf32> -> vector<2x128xf32>
    %268 = arith.addf %264, %267 : vector<2x128xf32>
    %c0_167 = arith.constant 0 : index
    %c0_168 = arith.constant 0 : index
    %c0_169 = arith.constant 0 : index
    %269 = vector.load %arg6[%c0_167, %c0_168, %c0_169] : memref<1x1x128xf32, #tpu.memory_space<vmem>>, vector<1x1x128xf32>
    %270 = vector.shape_cast %269 : vector<1x1x128xf32> to vector<1x128xf32>
    %271 = vector.broadcast %270 : vector<1x128xf32> to vector<2x128xf32>
    %272 = arith.addf %268, %271 : vector<2x128xf32>
    %273 = vector.extract_strided_slice %272 {offsets = [0, 0], sizes = [2, 96], strides = [1, 1]} : vector<2x128xf32> to vector<2x96xf32>
    %274 = arith.negf %273 : vector<2x96xf32>
    %275 = math.exp %274 : vector<2x96xf32>
    %cst_170 = arith.constant 1.000000e+00 : f32
    %276 = vector.broadcast %cst_170 : f32 to vector<2x96xf32>
    %277 = arith.addf %276, %275 : vector<2x96xf32>
    %278 = arith.divf %276, %277 : vector<2x96xf32>
    %279 = vector.extract_strided_slice %278 {offsets = [0, 0], sizes = [2, 32], strides = [1, 1]} : vector<2x96xf32> to vector<2x32xf32>
    %280 = vector.extract_strided_slice %278 {offsets = [0, 32], sizes = [2, 32], strides = [1, 1]} : vector<2x96xf32> to vector<2x32xf32>
    %281 = vector.extract_strided_slice %278 {offsets = [0, 64], sizes = [2, 32], strides = [1, 1]} : vector<2x96xf32> to vector<2x32xf32>
    %282 = vector.extract_strided_slice %272 {offsets = [0, 96], sizes = [2, 32], strides = [1, 1]} : vector<2x128xf32> to vector<2x32xf32>
    %283 = math.tanh %282 : vector<2x32xf32>
    %284 = arith.mulf %280, %261 : vector<2x32xf32>
    %285 = arith.mulf %279, %283 : vector<2x32xf32>
    %286 = arith.addf %284, %285 : vector<2x32xf32>
    %287 = math.tanh %286 : vector<2x32xf32>
    %288 = arith.mulf %281, %287 : vector<2x32xf32>
    %c1_171 = arith.constant 1 : index
    %c0_172 = arith.constant 0 : index
    %c0_173 = arith.constant 0 : index
    %289 = vector.load %arg8[%c1_171, %c0_172, %c0_173] : memref<2x2x32xf32, #tpu.memory_space<vmem>>, vector<1x2x32xf32>
    %290 = vector.shape_cast %289 : vector<1x2x32xf32> to vector<2x32xf32>
    %291 = vector.shape_cast %288 : vector<2x32xf32> to vector<1x2x32xf32>
    tpu.vector_store %arg8[%c1_171, %c0_172, %c0_173], %291 {strides = array<i32>} : memref<2x2x32xf32, #tpu.memory_space<vmem>>, vector<1x2x32xf32>,
    %c1_174 = arith.constant 1 : index
    %c0_175 = arith.constant 0 : index
    %c0_176 = arith.constant 0 : index
    %292 = vector.load %arg9[%c1_174, %c0_175, %c0_176] : memref<2x2x32xf32, #tpu.memory_space<vmem>>, vector<1x2x32xf32>
    %293 = vector.shape_cast %292 : vector<1x2x32xf32> to vector<2x32xf32>
    %294 = vector.shape_cast %286 : vector<2x32xf32> to vector<1x2x32xf32>
    tpu.vector_store %arg9[%c1_174, %c0_175, %c0_176], %294 {strides = array<i32>} : memref<2x2x32xf32, #tpu.memory_space<vmem>>, vector<1x2x32xf32>,
    %295 = arith.index_cast %c3_i32 : i32 to index
    %c0_177 = arith.constant 0 : index
    %c0_178 = arith.constant 0 : index
    %296 = vector.load %arg7[%295, %c0_177, %c0_178] : memref<8x2x32xf32, #tpu.memory_space<vmem>>, vector<1x2x32xf32>
    %297 = vector.shape_cast %296 : vector<1x2x32xf32> to vector<2x32xf32>
    %298 = vector.shape_cast %288 : vector<2x32xf32> to vector<1x2x32xf32>
    tpu.vector_store %arg7[%295, %c0_177, %c0_178], %298 {strides = array<i32>} : memref<8x2x32xf32, #tpu.memory_space<vmem>>, vector<1x2x32xf32>,
    %c4_i32 = arith.constant 4 : i32
    %299 = arith.index_cast %c4_i32 : i32 to index
    %c0_179 = arith.constant 0 : index
    %c0_180 = arith.constant 0 : index
    %300 = vector.load %arg1[%299, %c0_179, %c0_180] : memref<8x2x128xf32, #tpu.memory_space<vmem>>, vector<1x2x128xf32>
    %301 = vector.shape_cast %300 : vector<1x2x128xf32> to vector<2x128xf32>
    %c0_181 = arith.constant 0 : index
    %c0_182 = arith.constant 0 : index
    %c0_183 = arith.constant 0 : index
    %302 = vector.load %arg8[%c0_181, %c0_182, %c0_183] : memref<2x2x32xf32, #tpu.memory_space<vmem>>, vector<1x2x32xf32>
    %303 = vector.shape_cast %302 : vector<1x2x32xf32> to vector<2x32xf32>
    %c0_184 = arith.constant 0 : index
    %c0_185 = arith.constant 0 : index
    %c0_186 = arith.constant 0 : index
    %304 = vector.load %arg9[%c0_184, %c0_185, %c0_186] : memref<2x2x32xf32, #tpu.memory_space<vmem>>, vector<1x2x32xf32>
    %305 = vector.shape_cast %304 : vector<1x2x32xf32> to vector<2x32xf32>
    %c0_187 = arith.constant 0 : index
    %c0_188 = arith.constant 0 : index
    %c0_189 = arith.constant 0 : index
    %306 = vector.load %arg4[%c0_187, %c0_188, %c0_189] : memref<2x32x128xf32, #tpu.memory_space<vmem>>, vector<1x32x128xf32>
    %307 = vector.shape_cast %306 : vector<1x32x128xf32> to vector<32x128xf32>
    %cst_190 = arith.constant dense<0.000000e+00> : vector<2x128xf32>
    %308 = tpu.matmul %303, %307, %cst_190 {dimension_numbers = #tpu.dot_dimension_numbers<[1], [0], [0], [1], [0, 0, 1, 1], [], []>} : vector<2x32xf32>, vector<32x128xf32>, vector<2x128xf32> -> vector<2x128xf32>
    %309 = arith.addf %301, %308 : vector<2x128xf32>
    %310 = vector.extract_strided_slice %309 {offsets = [0, 0], sizes = [2, 96], strides = [1, 1]} : vector<2x128xf32> to vector<2x96xf32>
    %311 = arith.negf %310 : vector<2x96xf32>
    %312 = math.exp %311 : vector<2x96xf32>
    %cst_191 = arith.constant 1.000000e+00 : f32
    %313 = vector.broadcast %cst_191 : f32 to vector<2x96xf32>
    %314 = arith.addf %313, %312 : vector<2x96xf32>
    %315 = arith.divf %313, %314 : vector<2x96xf32>
    %316 = vector.extract_strided_slice %315 {offsets = [0, 0], sizes = [2, 32], strides = [1, 1]} : vector<2x96xf32> to vector<2x32xf32>
    %317 = vector.extract_strided_slice %315 {offsets = [0, 32], sizes = [2, 32], strides = [1, 1]} : vector<2x96xf32> to vector<2x32xf32>
    %318 = vector.extract_strided_slice %315 {offsets = [0, 64], sizes = [2, 32], strides = [1, 1]} : vector<2x96xf32> to vector<2x32xf32>
    %319 = vector.extract_strided_slice %309 {offsets = [0, 96], sizes = [2, 32], strides = [1, 1]} : vector<2x128xf32> to vector<2x32xf32>
    %320 = math.tanh %319 : vector<2x32xf32>
    %321 = arith.mulf %317, %305 : vector<2x32xf32>
    %322 = arith.mulf %316, %320 : vector<2x32xf32>
    %323 = arith.addf %321, %322 : vector<2x32xf32>
    %324 = math.tanh %323 : vector<2x32xf32>
    %325 = arith.mulf %318, %324 : vector<2x32xf32>
    %c0_192 = arith.constant 0 : index
    %c0_193 = arith.constant 0 : index
    %c0_194 = arith.constant 0 : index
    %326 = vector.load %arg8[%c0_192, %c0_193, %c0_194] : memref<2x2x32xf32, #tpu.memory_space<vmem>>, vector<1x2x32xf32>
    %327 = vector.shape_cast %326 : vector<1x2x32xf32> to vector<2x32xf32>
    %328 = vector.shape_cast %325 : vector<2x32xf32> to vector<1x2x32xf32>
    tpu.vector_store %arg8[%c0_192, %c0_193, %c0_194], %328 {strides = array<i32>} : memref<2x2x32xf32, #tpu.memory_space<vmem>>, vector<1x2x32xf32>,
    %c0_195 = arith.constant 0 : index
    %c0_196 = arith.constant 0 : index
    %c0_197 = arith.constant 0 : index
    %329 = vector.load %arg9[%c0_195, %c0_196, %c0_197] : memref<2x2x32xf32, #tpu.memory_space<vmem>>, vector<1x2x32xf32>
    %330 = vector.shape_cast %329 : vector<1x2x32xf32> to vector<2x32xf32>
    %331 = vector.shape_cast %323 : vector<2x32xf32> to vector<1x2x32xf32>
    tpu.vector_store %arg9[%c0_195, %c0_196, %c0_197], %331 {strides = array<i32>} : memref<2x2x32xf32, #tpu.memory_space<vmem>>, vector<1x2x32xf32>,
    %c1_198 = arith.constant 1 : index
    %c0_199 = arith.constant 0 : index
    %c0_200 = arith.constant 0 : index
    %332 = vector.load %arg8[%c1_198, %c0_199, %c0_200] : memref<2x2x32xf32, #tpu.memory_space<vmem>>, vector<1x2x32xf32>
    %333 = vector.shape_cast %332 : vector<1x2x32xf32> to vector<2x32xf32>
    %c1_201 = arith.constant 1 : index
    %c0_202 = arith.constant 0 : index
    %c0_203 = arith.constant 0 : index
    %334 = vector.load %arg9[%c1_201, %c0_202, %c0_203] : memref<2x2x32xf32, #tpu.memory_space<vmem>>, vector<1x2x32xf32>
    %335 = vector.shape_cast %334 : vector<1x2x32xf32> to vector<2x32xf32>
    %c0_204 = arith.constant 0 : index
    %c0_205 = arith.constant 0 : index
    %c0_206 = arith.constant 0 : index
    %336 = vector.load %arg5[%c0_204, %c0_205, %c0_206] : memref<1x32x128xf32, #tpu.memory_space<vmem>>, vector<1x32x128xf32>
    %337 = vector.shape_cast %336 : vector<1x32x128xf32> to vector<32x128xf32>
    %cst_207 = arith.constant dense<0.000000e+00> : vector<2x128xf32>
    %338 = tpu.matmul %325, %337, %cst_207 {dimension_numbers = #tpu.dot_dimension_numbers<[1], [0], [0], [1], [0, 0, 1, 1], [], []>} : vector<2x32xf32>, vector<32x128xf32>, vector<2x128xf32> -> vector<2x128xf32>
    %c1_208 = arith.constant 1 : index
    %c0_209 = arith.constant 0 : index
    %c0_210 = arith.constant 0 : index
    %339 = vector.load %arg4[%c1_208, %c0_209, %c0_210] : memref<2x32x128xf32, #tpu.memory_space<vmem>>, vector<1x32x128xf32>
    %340 = vector.shape_cast %339 : vector<1x32x128xf32> to vector<32x128xf32>
    %cst_211 = arith.constant dense<0.000000e+00> : vector<2x128xf32>
    %341 = tpu.matmul %333, %340, %cst_211 {dimension_numbers = #tpu.dot_dimension_numbers<[1], [0], [0], [1], [0, 0, 1, 1], [], []>} : vector<2x32xf32>, vector<32x128xf32>, vector<2x128xf32> -> vector<2x128xf32>
    %342 = arith.addf %338, %341 : vector<2x128xf32>
    %c0_212 = arith.constant 0 : index
    %c0_213 = arith.constant 0 : index
    %c0_214 = arith.constant 0 : index
    %343 = vector.load %arg6[%c0_212, %c0_213, %c0_214] : memref<1x1x128xf32, #tpu.memory_space<vmem>>, vector<1x1x128xf32>
    %344 = vector.shape_cast %343 : vector<1x1x128xf32> to vector<1x128xf32>
    %345 = vector.broadcast %344 : vector<1x128xf32> to vector<2x128xf32>
    %346 = arith.addf %342, %345 : vector<2x128xf32>
    %347 = vector.extract_strided_slice %346 {offsets = [0, 0], sizes = [2, 96], strides = [1, 1]} : vector<2x128xf32> to vector<2x96xf32>
    %348 = arith.negf %347 : vector<2x96xf32>
    %349 = math.exp %348 : vector<2x96xf32>
    %cst_215 = arith.constant 1.000000e+00 : f32
    %350 = vector.broadcast %cst_215 : f32 to vector<2x96xf32>
    %351 = arith.addf %350, %349 : vector<2x96xf32>
    %352 = arith.divf %350, %351 : vector<2x96xf32>
    %353 = vector.extract_strided_slice %352 {offsets = [0, 0], sizes = [2, 32], strides = [1, 1]} : vector<2x96xf32> to vector<2x32xf32>
    %354 = vector.extract_strided_slice %352 {offsets = [0, 32], sizes = [2, 32], strides = [1, 1]} : vector<2x96xf32> to vector<2x32xf32>
    %355 = vector.extract_strided_slice %352 {offsets = [0, 64], sizes = [2, 32], strides = [1, 1]} : vector<2x96xf32> to vector<2x32xf32>
    %356 = vector.extract_strided_slice %346 {offsets = [0, 96], sizes = [2, 32], strides = [1, 1]} : vector<2x128xf32> to vector<2x32xf32>
    %357 = math.tanh %356 : vector<2x32xf32>
    %358 = arith.mulf %354, %335 : vector<2x32xf32>
    %359 = arith.mulf %353, %357 : vector<2x32xf32>
    %360 = arith.addf %358, %359 : vector<2x32xf32>
    %361 = math.tanh %360 : vector<2x32xf32>
    %362 = arith.mulf %355, %361 : vector<2x32xf32>
    %c1_216 = arith.constant 1 : index
    %c0_217 = arith.constant 0 : index
    %c0_218 = arith.constant 0 : index
    %363 = vector.load %arg8[%c1_216, %c0_217, %c0_218] : memref<2x2x32xf32, #tpu.memory_space<vmem>>, vector<1x2x32xf32>
    %364 = vector.shape_cast %363 : vector<1x2x32xf32> to vector<2x32xf32>
    %365 = vector.shape_cast %362 : vector<2x32xf32> to vector<1x2x32xf32>
    tpu.vector_store %arg8[%c1_216, %c0_217, %c0_218], %365 {strides = array<i32>} : memref<2x2x32xf32, #tpu.memory_space<vmem>>, vector<1x2x32xf32>,
    %c1_219 = arith.constant 1 : index
    %c0_220 = arith.constant 0 : index
    %c0_221 = arith.constant 0 : index
    %366 = vector.load %arg9[%c1_219, %c0_220, %c0_221] : memref<2x2x32xf32, #tpu.memory_space<vmem>>, vector<1x2x32xf32>
    %367 = vector.shape_cast %366 : vector<1x2x32xf32> to vector<2x32xf32>
    %368 = vector.shape_cast %360 : vector<2x32xf32> to vector<1x2x32xf32>
    tpu.vector_store %arg9[%c1_219, %c0_220, %c0_221], %368 {strides = array<i32>} : memref<2x2x32xf32, #tpu.memory_space<vmem>>, vector<1x2x32xf32>,
    %369 = arith.index_cast %c4_i32 : i32 to index
    %c0_222 = arith.constant 0 : index
    %c0_223 = arith.constant 0 : index
    %370 = vector.load %arg7[%369, %c0_222, %c0_223] : memref<8x2x32xf32, #tpu.memory_space<vmem>>, vector<1x2x32xf32>
    %371 = vector.shape_cast %370 : vector<1x2x32xf32> to vector<2x32xf32>
    %372 = vector.shape_cast %362 : vector<2x32xf32> to vector<1x2x32xf32>
    tpu.vector_store %arg7[%369, %c0_222, %c0_223], %372 {strides = array<i32>} : memref<8x2x32xf32, #tpu.memory_space<vmem>>, vector<1x2x32xf32>,
    %c5_i32 = arith.constant 5 : i32
    %373 = arith.index_cast %c5_i32 : i32 to index
    %c0_224 = arith.constant 0 : index
    %c0_225 = arith.constant 0 : index
    %374 = vector.load %arg1[%373, %c0_224, %c0_225] : memref<8x2x128xf32, #tpu.memory_space<vmem>>, vector<1x2x128xf32>
    %375 = vector.shape_cast %374 : vector<1x2x128xf32> to vector<2x128xf32>
    %c0_226 = arith.constant 0 : index
    %c0_227 = arith.constant 0 : index
    %c0_228 = arith.constant 0 : index
    %376 = vector.load %arg8[%c0_226, %c0_227, %c0_228] : memref<2x2x32xf32, #tpu.memory_space<vmem>>, vector<1x2x32xf32>
    %377 = vector.shape_cast %376 : vector<1x2x32xf32> to vector<2x32xf32>
    %c0_229 = arith.constant 0 : index
    %c0_230 = arith.constant 0 : index
    %c0_231 = arith.constant 0 : index
    %378 = vector.load %arg9[%c0_229, %c0_230, %c0_231] : memref<2x2x32xf32, #tpu.memory_space<vmem>>, vector<1x2x32xf32>
    %379 = vector.shape_cast %378 : vector<1x2x32xf32> to vector<2x32xf32>
    %c0_232 = arith.constant 0 : index
    %c0_233 = arith.constant 0 : index
    %c0_234 = arith.constant 0 : index
    %380 = vector.load %arg4[%c0_232, %c0_233, %c0_234] : memref<2x32x128xf32, #tpu.memory_space<vmem>>, vector<1x32x128xf32>
    %381 = vector.shape_cast %380 : vector<1x32x128xf32> to vector<32x128xf32>
    %cst_235 = arith.constant dense<0.000000e+00> : vector<2x128xf32>
    %382 = tpu.matmul %377, %381, %cst_235 {dimension_numbers = #tpu.dot_dimension_numbers<[1], [0], [0], [1], [0, 0, 1, 1], [], []>} : vector<2x32xf32>, vector<32x128xf32>, vector<2x128xf32> -> vector<2x128xf32>
    %383 = arith.addf %375, %382 : vector<2x128xf32>
    %384 = vector.extract_strided_slice %383 {offsets = [0, 0], sizes = [2, 96], strides = [1, 1]} : vector<2x128xf32> to vector<2x96xf32>
    %385 = arith.negf %384 : vector<2x96xf32>
    %386 = math.exp %385 : vector<2x96xf32>
    %cst_236 = arith.constant 1.000000e+00 : f32
    %387 = vector.broadcast %cst_236 : f32 to vector<2x96xf32>
    %388 = arith.addf %387, %386 : vector<2x96xf32>
    %389 = arith.divf %387, %388 : vector<2x96xf32>
    %390 = vector.extract_strided_slice %389 {offsets = [0, 0], sizes = [2, 32], strides = [1, 1]} : vector<2x96xf32> to vector<2x32xf32>
    %391 = vector.extract_strided_slice %389 {offsets = [0, 32], sizes = [2, 32], strides = [1, 1]} : vector<2x96xf32> to vector<2x32xf32>
    %392 = vector.extract_strided_slice %389 {offsets = [0, 64], sizes = [2, 32], strides = [1, 1]} : vector<2x96xf32> to vector<2x32xf32>
    %393 = vector.extract_strided_slice %383 {offsets = [0, 96], sizes = [2, 32], strides = [1, 1]} : vector<2x128xf32> to vector<2x32xf32>
    %394 = math.tanh %393 : vector<2x32xf32>
    %395 = arith.mulf %391, %379 : vector<2x32xf32>
    %396 = arith.mulf %390, %394 : vector<2x32xf32>
    %397 = arith.addf %395, %396 : vector<2x32xf32>
    %398 = math.tanh %397 : vector<2x32xf32>
    %399 = arith.mulf %392, %398 : vector<2x32xf32>
    %c0_237 = arith.constant 0 : index
    %c0_238 = arith.constant 0 : index
    %c0_239 = arith.constant 0 : index
    %400 = vector.load %arg8[%c0_237, %c0_238, %c0_239] : memref<2x2x32xf32, #tpu.memory_space<vmem>>, vector<1x2x32xf32>
    %401 = vector.shape_cast %400 : vector<1x2x32xf32> to vector<2x32xf32>
    %402 = vector.shape_cast %399 : vector<2x32xf32> to vector<1x2x32xf32>
    tpu.vector_store %arg8[%c0_237, %c0_238, %c0_239], %402 {strides = array<i32>} : memref<2x2x32xf32, #tpu.memory_space<vmem>>, vector<1x2x32xf32>,
    %c0_240 = arith.constant 0 : index
    %c0_241 = arith.constant 0 : index
    %c0_242 = arith.constant 0 : index
    %403 = vector.load %arg9[%c0_240, %c0_241, %c0_242] : memref<2x2x32xf32, #tpu.memory_space<vmem>>, vector<1x2x32xf32>
    %404 = vector.shape_cast %403 : vector<1x2x32xf32> to vector<2x32xf32>
    %405 = vector.shape_cast %397 : vector<2x32xf32> to vector<1x2x32xf32>
    tpu.vector_store %arg9[%c0_240, %c0_241, %c0_242], %405 {strides = array<i32>} : memref<2x2x32xf32, #tpu.memory_space<vmem>>, vector<1x2x32xf32>,
    %c1_243 = arith.constant 1 : index
    %c0_244 = arith.constant 0 : index
    %c0_245 = arith.constant 0 : index
    %406 = vector.load %arg8[%c1_243, %c0_244, %c0_245] : memref<2x2x32xf32, #tpu.memory_space<vmem>>, vector<1x2x32xf32>
    %407 = vector.shape_cast %406 : vector<1x2x32xf32> to vector<2x32xf32>
    %c1_246 = arith.constant 1 : index
    %c0_247 = arith.constant 0 : index
    %c0_248 = arith.constant 0 : index
    %408 = vector.load %arg9[%c1_246, %c0_247, %c0_248] : memref<2x2x32xf32, #tpu.memory_space<vmem>>, vector<1x2x32xf32>
    %409 = vector.shape_cast %408 : vector<1x2x32xf32> to vector<2x32xf32>
    %c0_249 = arith.constant 0 : index
    %c0_250 = arith.constant 0 : index
    %c0_251 = arith.constant 0 : index
    %410 = vector.load %arg5[%c0_249, %c0_250, %c0_251] : memref<1x32x128xf32, #tpu.memory_space<vmem>>, vector<1x32x128xf32>
    %411 = vector.shape_cast %410 : vector<1x32x128xf32> to vector<32x128xf32>
    %cst_252 = arith.constant dense<0.000000e+00> : vector<2x128xf32>
    %412 = tpu.matmul %399, %411, %cst_252 {dimension_numbers = #tpu.dot_dimension_numbers<[1], [0], [0], [1], [0, 0, 1, 1], [], []>} : vector<2x32xf32>, vector<32x128xf32>, vector<2x128xf32> -> vector<2x128xf32>
    %c1_253 = arith.constant 1 : index
    %c0_254 = arith.constant 0 : index
    %c0_255 = arith.constant 0 : index
    %413 = vector.load %arg4[%c1_253, %c0_254, %c0_255] : memref<2x32x128xf32, #tpu.memory_space<vmem>>, vector<1x32x128xf32>
    %414 = vector.shape_cast %413 : vector<1x32x128xf32> to vector<32x128xf32>
    %cst_256 = arith.constant dense<0.000000e+00> : vector<2x128xf32>
    %415 = tpu.matmul %407, %414, %cst_256 {dimension_numbers = #tpu.dot_dimension_numbers<[1], [0], [0], [1], [0, 0, 1, 1], [], []>} : vector<2x32xf32>, vector<32x128xf32>, vector<2x128xf32> -> vector<2x128xf32>
    %416 = arith.addf %412, %415 : vector<2x128xf32>
    %c0_257 = arith.constant 0 : index
    %c0_258 = arith.constant 0 : index
    %c0_259 = arith.constant 0 : index
    %417 = vector.load %arg6[%c0_257, %c0_258, %c0_259] : memref<1x1x128xf32, #tpu.memory_space<vmem>>, vector<1x1x128xf32>
    %418 = vector.shape_cast %417 : vector<1x1x128xf32> to vector<1x128xf32>
    %419 = vector.broadcast %418 : vector<1x128xf32> to vector<2x128xf32>
    %420 = arith.addf %416, %419 : vector<2x128xf32>
    %421 = vector.extract_strided_slice %420 {offsets = [0, 0], sizes = [2, 96], strides = [1, 1]} : vector<2x128xf32> to vector<2x96xf32>
    %422 = arith.negf %421 : vector<2x96xf32>
    %423 = math.exp %422 : vector<2x96xf32>
    %cst_260 = arith.constant 1.000000e+00 : f32
    %424 = vector.broadcast %cst_260 : f32 to vector<2x96xf32>
    %425 = arith.addf %424, %423 : vector<2x96xf32>
    %426 = arith.divf %424, %425 : vector<2x96xf32>
    %427 = vector.extract_strided_slice %426 {offsets = [0, 0], sizes = [2, 32], strides = [1, 1]} : vector<2x96xf32> to vector<2x32xf32>
    %428 = vector.extract_strided_slice %426 {offsets = [0, 32], sizes = [2, 32], strides = [1, 1]} : vector<2x96xf32> to vector<2x32xf32>
    %429 = vector.extract_strided_slice %426 {offsets = [0, 64], sizes = [2, 32], strides = [1, 1]} : vector<2x96xf32> to vector<2x32xf32>
    %430 = vector.extract_strided_slice %420 {offsets = [0, 96], sizes = [2, 32], strides = [1, 1]} : vector<2x128xf32> to vector<2x32xf32>
    %431 = math.tanh %430 : vector<2x32xf32>
    %432 = arith.mulf %428, %409 : vector<2x32xf32>
    %433 = arith.mulf %427, %431 : vector<2x32xf32>
    %434 = arith.addf %432, %433 : vector<2x32xf32>
    %435 = math.tanh %434 : vector<2x32xf32>
    %436 = arith.mulf %429, %435 : vector<2x32xf32>
    %c1_261 = arith.constant 1 : index
    %c0_262 = arith.constant 0 : index
    %c0_263 = arith.constant 0 : index
    %437 = vector.load %arg8[%c1_261, %c0_262, %c0_263] : memref<2x2x32xf32, #tpu.memory_space<vmem>>, vector<1x2x32xf32>
    %438 = vector.shape_cast %437 : vector<1x2x32xf32> to vector<2x32xf32>
    %439 = vector.shape_cast %436 : vector<2x32xf32> to vector<1x2x32xf32>
    tpu.vector_store %arg8[%c1_261, %c0_262, %c0_263], %439 {strides = array<i32>} : memref<2x2x32xf32, #tpu.memory_space<vmem>>, vector<1x2x32xf32>,
    %c1_264 = arith.constant 1 : index
    %c0_265 = arith.constant 0 : index
    %c0_266 = arith.constant 0 : index
    %440 = vector.load %arg9[%c1_264, %c0_265, %c0_266] : memref<2x2x32xf32, #tpu.memory_space<vmem>>, vector<1x2x32xf32>
    %441 = vector.shape_cast %440 : vector<1x2x32xf32> to vector<2x32xf32>
    %442 = vector.shape_cast %434 : vector<2x32xf32> to vector<1x2x32xf32>
    tpu.vector_store %arg9[%c1_264, %c0_265, %c0_266], %442 {strides = array<i32>} : memref<2x2x32xf32, #tpu.memory_space<vmem>>, vector<1x2x32xf32>,
    %443 = arith.index_cast %c5_i32 : i32 to index
    %c0_267 = arith.constant 0 : index
    %c0_268 = arith.constant 0 : index
    %444 = vector.load %arg7[%443, %c0_267, %c0_268] : memref<8x2x32xf32, #tpu.memory_space<vmem>>, vector<1x2x32xf32>
    %445 = vector.shape_cast %444 : vector<1x2x32xf32> to vector<2x32xf32>
    %446 = vector.shape_cast %436 : vector<2x32xf32> to vector<1x2x32xf32>
    tpu.vector_store %arg7[%443, %c0_267, %c0_268], %446 {strides = array<i32>} : memref<8x2x32xf32, #tpu.memory_space<vmem>>, vector<1x2x32xf32>,
    %c6_i32 = arith.constant 6 : i32
    %447 = arith.index_cast %c6_i32 : i32 to index
    %c0_269 = arith.constant 0 : index
    %c0_270 = arith.constant 0 : index
    %448 = vector.load %arg1[%447, %c0_269, %c0_270] : memref<8x2x128xf32, #tpu.memory_space<vmem>>, vector<1x2x128xf32>
    %449 = vector.shape_cast %448 : vector<1x2x128xf32> to vector<2x128xf32>
    %c0_271 = arith.constant 0 : index
    %c0_272 = arith.constant 0 : index
    %c0_273 = arith.constant 0 : index
    %450 = vector.load %arg8[%c0_271, %c0_272, %c0_273] : memref<2x2x32xf32, #tpu.memory_space<vmem>>, vector<1x2x32xf32>
    %451 = vector.shape_cast %450 : vector<1x2x32xf32> to vector<2x32xf32>
    %c0_274 = arith.constant 0 : index
    %c0_275 = arith.constant 0 : index
    %c0_276 = arith.constant 0 : index
    %452 = vector.load %arg9[%c0_274, %c0_275, %c0_276] : memref<2x2x32xf32, #tpu.memory_space<vmem>>, vector<1x2x32xf32>
    %453 = vector.shape_cast %452 : vector<1x2x32xf32> to vector<2x32xf32>
    %c0_277 = arith.constant 0 : index
    %c0_278 = arith.constant 0 : index
    %c0_279 = arith.constant 0 : index
    %454 = vector.load %arg4[%c0_277, %c0_278, %c0_279] : memref<2x32x128xf32, #tpu.memory_space<vmem>>, vector<1x32x128xf32>
    %455 = vector.shape_cast %454 : vector<1x32x128xf32> to vector<32x128xf32>
    %cst_280 = arith.constant dense<0.000000e+00> : vector<2x128xf32>
    %456 = tpu.matmul %451, %455, %cst_280 {dimension_numbers = #tpu.dot_dimension_numbers<[1], [0], [0], [1], [0, 0, 1, 1], [], []>} : vector<2x32xf32>, vector<32x128xf32>, vector<2x128xf32> -> vector<2x128xf32>
    %457 = arith.addf %449, %456 : vector<2x128xf32>
    %458 = vector.extract_strided_slice %457 {offsets = [0, 0], sizes = [2, 96], strides = [1, 1]} : vector<2x128xf32> to vector<2x96xf32>
    %459 = arith.negf %458 : vector<2x96xf32>
    %460 = math.exp %459 : vector<2x96xf32>
    %cst_281 = arith.constant 1.000000e+00 : f32
    %461 = vector.broadcast %cst_281 : f32 to vector<2x96xf32>
    %462 = arith.addf %461, %460 : vector<2x96xf32>
    %463 = arith.divf %461, %462 : vector<2x96xf32>
    %464 = vector.extract_strided_slice %463 {offsets = [0, 0], sizes = [2, 32], strides = [1, 1]} : vector<2x96xf32> to vector<2x32xf32>
    %465 = vector.extract_strided_slice %463 {offsets = [0, 32], sizes = [2, 32], strides = [1, 1]} : vector<2x96xf32> to vector<2x32xf32>
    %466 = vector.extract_strided_slice %463 {offsets = [0, 64], sizes = [2, 32], strides = [1, 1]} : vector<2x96xf32> to vector<2x32xf32>
    %467 = vector.extract_strided_slice %457 {offsets = [0, 96], sizes = [2, 32], strides = [1, 1]} : vector<2x128xf32> to vector<2x32xf32>
    %468 = math.tanh %467 : vector<2x32xf32>
    %469 = arith.mulf %465, %453 : vector<2x32xf32>
    %470 = arith.mulf %464, %468 : vector<2x32xf32>
    %471 = arith.addf %469, %470 : vector<2x32xf32>
    %472 = math.tanh %471 : vector<2x32xf32>
    %473 = arith.mulf %466, %472 : vector<2x32xf32>
    %c0_282 = arith.constant 0 : index
    %c0_283 = arith.constant 0 : index
    %c0_284 = arith.constant 0 : index
    %474 = vector.load %arg8[%c0_282, %c0_283, %c0_284] : memref<2x2x32xf32, #tpu.memory_space<vmem>>, vector<1x2x32xf32>
    %475 = vector.shape_cast %474 : vector<1x2x32xf32> to vector<2x32xf32>
    %476 = vector.shape_cast %473 : vector<2x32xf32> to vector<1x2x32xf32>
    tpu.vector_store %arg8[%c0_282, %c0_283, %c0_284], %476 {strides = array<i32>} : memref<2x2x32xf32, #tpu.memory_space<vmem>>, vector<1x2x32xf32>,
    %c0_285 = arith.constant 0 : index
    %c0_286 = arith.constant 0 : index
    %c0_287 = arith.constant 0 : index
    %477 = vector.load %arg9[%c0_285, %c0_286, %c0_287] : memref<2x2x32xf32, #tpu.memory_space<vmem>>, vector<1x2x32xf32>
    %478 = vector.shape_cast %477 : vector<1x2x32xf32> to vector<2x32xf32>
    %479 = vector.shape_cast %471 : vector<2x32xf32> to vector<1x2x32xf32>
    tpu.vector_store %arg9[%c0_285, %c0_286, %c0_287], %479 {strides = array<i32>} : memref<2x2x32xf32, #tpu.memory_space<vmem>>, vector<1x2x32xf32>,
    %c1_288 = arith.constant 1 : index
    %c0_289 = arith.constant 0 : index
    %c0_290 = arith.constant 0 : index
    %480 = vector.load %arg8[%c1_288, %c0_289, %c0_290] : memref<2x2x32xf32, #tpu.memory_space<vmem>>, vector<1x2x32xf32>
    %481 = vector.shape_cast %480 : vector<1x2x32xf32> to vector<2x32xf32>
    %c1_291 = arith.constant 1 : index
    %c0_292 = arith.constant 0 : index
    %c0_293 = arith.constant 0 : index
    %482 = vector.load %arg9[%c1_291, %c0_292, %c0_293] : memref<2x2x32xf32, #tpu.memory_space<vmem>>, vector<1x2x32xf32>
    %483 = vector.shape_cast %482 : vector<1x2x32xf32> to vector<2x32xf32>
    %c0_294 = arith.constant 0 : index
    %c0_295 = arith.constant 0 : index
    %c0_296 = arith.constant 0 : index
    %484 = vector.load %arg5[%c0_294, %c0_295, %c0_296] : memref<1x32x128xf32, #tpu.memory_space<vmem>>, vector<1x32x128xf32>
    %485 = vector.shape_cast %484 : vector<1x32x128xf32> to vector<32x128xf32>
    %cst_297 = arith.constant dense<0.000000e+00> : vector<2x128xf32>
    %486 = tpu.matmul %473, %485, %cst_297 {dimension_numbers = #tpu.dot_dimension_numbers<[1], [0], [0], [1], [0, 0, 1, 1], [], []>} : vector<2x32xf32>, vector<32x128xf32>, vector<2x128xf32> -> vector<2x128xf32>
    %c1_298 = arith.constant 1 : index
    %c0_299 = arith.constant 0 : index
    %c0_300 = arith.constant 0 : index
    %487 = vector.load %arg4[%c1_298, %c0_299, %c0_300] : memref<2x32x128xf32, #tpu.memory_space<vmem>>, vector<1x32x128xf32>
    %488 = vector.shape_cast %487 : vector<1x32x128xf32> to vector<32x128xf32>
    %cst_301 = arith.constant dense<0.000000e+00> : vector<2x128xf32>
    %489 = tpu.matmul %481, %488, %cst_301 {dimension_numbers = #tpu.dot_dimension_numbers<[1], [0], [0], [1], [0, 0, 1, 1], [], []>} : vector<2x32xf32>, vector<32x128xf32>, vector<2x128xf32> -> vector<2x128xf32>
    %490 = arith.addf %486, %489 : vector<2x128xf32>
    %c0_302 = arith.constant 0 : index
    %c0_303 = arith.constant 0 : index
    %c0_304 = arith.constant 0 : index
    %491 = vector.load %arg6[%c0_302, %c0_303, %c0_304] : memref<1x1x128xf32, #tpu.memory_space<vmem>>, vector<1x1x128xf32>
    %492 = vector.shape_cast %491 : vector<1x1x128xf32> to vector<1x128xf32>
    %493 = vector.broadcast %492 : vector<1x128xf32> to vector<2x128xf32>
    %494 = arith.addf %490, %493 : vector<2x128xf32>
    %495 = vector.extract_strided_slice %494 {offsets = [0, 0], sizes = [2, 96], strides = [1, 1]} : vector<2x128xf32> to vector<2x96xf32>
    %496 = arith.negf %495 : vector<2x96xf32>
    %497 = math.exp %496 : vector<2x96xf32>
    %cst_305 = arith.constant 1.000000e+00 : f32
    %498 = vector.broadcast %cst_305 : f32 to vector<2x96xf32>
    %499 = arith.addf %498, %497 : vector<2x96xf32>
    %500 = arith.divf %498, %499 : vector<2x96xf32>
    %501 = vector.extract_strided_slice %500 {offsets = [0, 0], sizes = [2, 32], strides = [1, 1]} : vector<2x96xf32> to vector<2x32xf32>
    %502 = vector.extract_strided_slice %500 {offsets = [0, 32], sizes = [2, 32], strides = [1, 1]} : vector<2x96xf32> to vector<2x32xf32>
    %503 = vector.extract_strided_slice %500 {offsets = [0, 64], sizes = [2, 32], strides = [1, 1]} : vector<2x96xf32> to vector<2x32xf32>
    %504 = vector.extract_strided_slice %494 {offsets = [0, 96], sizes = [2, 32], strides = [1, 1]} : vector<2x128xf32> to vector<2x32xf32>
    %505 = math.tanh %504 : vector<2x32xf32>
    %506 = arith.mulf %502, %483 : vector<2x32xf32>
    %507 = arith.mulf %501, %505 : vector<2x32xf32>
    %508 = arith.addf %506, %507 : vector<2x32xf32>
    %509 = math.tanh %508 : vector<2x32xf32>
    %510 = arith.mulf %503, %509 : vector<2x32xf32>
    %c1_306 = arith.constant 1 : index
    %c0_307 = arith.constant 0 : index
    %c0_308 = arith.constant 0 : index
    %511 = vector.load %arg8[%c1_306, %c0_307, %c0_308] : memref<2x2x32xf32, #tpu.memory_space<vmem>>, vector<1x2x32xf32>
    %512 = vector.shape_cast %511 : vector<1x2x32xf32> to vector<2x32xf32>
    %513 = vector.shape_cast %510 : vector<2x32xf32> to vector<1x2x32xf32>
    tpu.vector_store %arg8[%c1_306, %c0_307, %c0_308], %513 {strides = array<i32>} : memref<2x2x32xf32, #tpu.memory_space<vmem>>, vector<1x2x32xf32>,
    %c1_309 = arith.constant 1 : index
    %c0_310 = arith.constant 0 : index
    %c0_311 = arith.constant 0 : index
    %514 = vector.load %arg9[%c1_309, %c0_310, %c0_311] : memref<2x2x32xf32, #tpu.memory_space<vmem>>, vector<1x2x32xf32>
    %515 = vector.shape_cast %514 : vector<1x2x32xf32> to vector<2x32xf32>
    %516 = vector.shape_cast %508 : vector<2x32xf32> to vector<1x2x32xf32>
    tpu.vector_store %arg9[%c1_309, %c0_310, %c0_311], %516 {strides = array<i32>} : memref<2x2x32xf32, #tpu.memory_space<vmem>>, vector<1x2x32xf32>,
    %517 = arith.index_cast %c6_i32 : i32 to index
    %c0_312 = arith.constant 0 : index
    %c0_313 = arith.constant 0 : index
    %518 = vector.load %arg7[%517, %c0_312, %c0_313] : memref<8x2x32xf32, #tpu.memory_space<vmem>>, vector<1x2x32xf32>
    %519 = vector.shape_cast %518 : vector<1x2x32xf32> to vector<2x32xf32>
    %520 = vector.shape_cast %510 : vector<2x32xf32> to vector<1x2x32xf32>
    tpu.vector_store %arg7[%517, %c0_312, %c0_313], %520 {strides = array<i32>} : memref<8x2x32xf32, #tpu.memory_space<vmem>>, vector<1x2x32xf32>,
    %c7_i32 = arith.constant 7 : i32
    %521 = arith.index_cast %c7_i32 : i32 to index
    %c0_314 = arith.constant 0 : index
    %c0_315 = arith.constant 0 : index
    %522 = vector.load %arg1[%521, %c0_314, %c0_315] : memref<8x2x128xf32, #tpu.memory_space<vmem>>, vector<1x2x128xf32>
    %523 = vector.shape_cast %522 : vector<1x2x128xf32> to vector<2x128xf32>
    %c0_316 = arith.constant 0 : index
    %c0_317 = arith.constant 0 : index
    %c0_318 = arith.constant 0 : index
    %524 = vector.load %arg8[%c0_316, %c0_317, %c0_318] : memref<2x2x32xf32, #tpu.memory_space<vmem>>, vector<1x2x32xf32>
    %525 = vector.shape_cast %524 : vector<1x2x32xf32> to vector<2x32xf32>
    %c0_319 = arith.constant 0 : index
    %c0_320 = arith.constant 0 : index
    %c0_321 = arith.constant 0 : index
    %526 = vector.load %arg9[%c0_319, %c0_320, %c0_321] : memref<2x2x32xf32, #tpu.memory_space<vmem>>, vector<1x2x32xf32>
    %527 = vector.shape_cast %526 : vector<1x2x32xf32> to vector<2x32xf32>
    %c0_322 = arith.constant 0 : index
    %c0_323 = arith.constant 0 : index
    %c0_324 = arith.constant 0 : index
    %528 = vector.load %arg4[%c0_322, %c0_323, %c0_324] : memref<2x32x128xf32, #tpu.memory_space<vmem>>, vector<1x32x128xf32>
    %529 = vector.shape_cast %528 : vector<1x32x128xf32> to vector<32x128xf32>
    %cst_325 = arith.constant dense<0.000000e+00> : vector<2x128xf32>
    %530 = tpu.matmul %525, %529, %cst_325 {dimension_numbers = #tpu.dot_dimension_numbers<[1], [0], [0], [1], [0, 0, 1, 1], [], []>} : vector<2x32xf32>, vector<32x128xf32>, vector<2x128xf32> -> vector<2x128xf32>
    %531 = arith.addf %523, %530 : vector<2x128xf32>
    %532 = vector.extract_strided_slice %531 {offsets = [0, 0], sizes = [2, 96], strides = [1, 1]} : vector<2x128xf32> to vector<2x96xf32>
    %533 = arith.negf %532 : vector<2x96xf32>
    %534 = math.exp %533 : vector<2x96xf32>
    %cst_326 = arith.constant 1.000000e+00 : f32
    %535 = vector.broadcast %cst_326 : f32 to vector<2x96xf32>
    %536 = arith.addf %535, %534 : vector<2x96xf32>
    %537 = arith.divf %535, %536 : vector<2x96xf32>
    %538 = vector.extract_strided_slice %537 {offsets = [0, 0], sizes = [2, 32], strides = [1, 1]} : vector<2x96xf32> to vector<2x32xf32>
    %539 = vector.extract_strided_slice %537 {offsets = [0, 32], sizes = [2, 32], strides = [1, 1]} : vector<2x96xf32> to vector<2x32xf32>
    %540 = vector.extract_strided_slice %537 {offsets = [0, 64], sizes = [2, 32], strides = [1, 1]} : vector<2x96xf32> to vector<2x32xf32>
    %541 = vector.extract_strided_slice %531 {offsets = [0, 96], sizes = [2, 32], strides = [1, 1]} : vector<2x128xf32> to vector<2x32xf32>
    %542 = math.tanh %541 : vector<2x32xf32>
    %543 = arith.mulf %539, %527 : vector<2x32xf32>
    %544 = arith.mulf %538, %542 : vector<2x32xf32>
    %545 = arith.addf %543, %544 : vector<2x32xf32>
    %546 = math.tanh %545 : vector<2x32xf32>
    %547 = arith.mulf %540, %546 : vector<2x32xf32>
    %c0_327 = arith.constant 0 : index
    %c0_328 = arith.constant 0 : index
    %c0_329 = arith.constant 0 : index
    %548 = vector.load %arg8[%c0_327, %c0_328, %c0_329] : memref<2x2x32xf32, #tpu.memory_space<vmem>>, vector<1x2x32xf32>
    %549 = vector.shape_cast %548 : vector<1x2x32xf32> to vector<2x32xf32>
    %550 = vector.shape_cast %547 : vector<2x32xf32> to vector<1x2x32xf32>
    tpu.vector_store %arg8[%c0_327, %c0_328, %c0_329], %550 {strides = array<i32>} : memref<2x2x32xf32, #tpu.memory_space<vmem>>, vector<1x2x32xf32>,
    %c0_330 = arith.constant 0 : index
    %c0_331 = arith.constant 0 : index
    %c0_332 = arith.constant 0 : index
    %551 = vector.load %arg9[%c0_330, %c0_331, %c0_332] : memref<2x2x32xf32, #tpu.memory_space<vmem>>, vector<1x2x32xf32>
    %552 = vector.shape_cast %551 : vector<1x2x32xf32> to vector<2x32xf32>
    %553 = vector.shape_cast %545 : vector<2x32xf32> to vector<1x2x32xf32>
    tpu.vector_store %arg9[%c0_330, %c0_331, %c0_332], %553 {strides = array<i32>} : memref<2x2x32xf32, #tpu.memory_space<vmem>>, vector<1x2x32xf32>,
    %c1_333 = arith.constant 1 : index
    %c0_334 = arith.constant 0 : index
    %c0_335 = arith.constant 0 : index
    %554 = vector.load %arg8[%c1_333, %c0_334, %c0_335] : memref<2x2x32xf32, #tpu.memory_space<vmem>>, vector<1x2x32xf32>
    %555 = vector.shape_cast %554 : vector<1x2x32xf32> to vector<2x32xf32>
    %c1_336 = arith.constant 1 : index
    %c0_337 = arith.constant 0 : index
    %c0_338 = arith.constant 0 : index
    %556 = vector.load %arg9[%c1_336, %c0_337, %c0_338] : memref<2x2x32xf32, #tpu.memory_space<vmem>>, vector<1x2x32xf32>
    %557 = vector.shape_cast %556 : vector<1x2x32xf32> to vector<2x32xf32>
    %c0_339 = arith.constant 0 : index
    %c0_340 = arith.constant 0 : index
    %c0_341 = arith.constant 0 : index
    %558 = vector.load %arg5[%c0_339, %c0_340, %c0_341] : memref<1x32x128xf32, #tpu.memory_space<vmem>>, vector<1x32x128xf32>
    %559 = vector.shape_cast %558 : vector<1x32x128xf32> to vector<32x128xf32>
    %cst_342 = arith.constant dense<0.000000e+00> : vector<2x128xf32>
    %560 = tpu.matmul %547, %559, %cst_342 {dimension_numbers = #tpu.dot_dimension_numbers<[1], [0], [0], [1], [0, 0, 1, 1], [], []>} : vector<2x32xf32>, vector<32x128xf32>, vector<2x128xf32> -> vector<2x128xf32>
    %c1_343 = arith.constant 1 : index
    %c0_344 = arith.constant 0 : index
    %c0_345 = arith.constant 0 : index
    %561 = vector.load %arg4[%c1_343, %c0_344, %c0_345] : memref<2x32x128xf32, #tpu.memory_space<vmem>>, vector<1x32x128xf32>
    %562 = vector.shape_cast %561 : vector<1x32x128xf32> to vector<32x128xf32>
    %cst_346 = arith.constant dense<0.000000e+00> : vector<2x128xf32>
    %563 = tpu.matmul %555, %562, %cst_346 {dimension_numbers = #tpu.dot_dimension_numbers<[1], [0], [0], [1], [0, 0, 1, 1], [], []>} : vector<2x32xf32>, vector<32x128xf32>, vector<2x128xf32> -> vector<2x128xf32>
    %564 = arith.addf %560, %563 : vector<2x128xf32>
    %c0_347 = arith.constant 0 : index
    %c0_348 = arith.constant 0 : index
    %c0_349 = arith.constant 0 : index
    %565 = vector.load %arg6[%c0_347, %c0_348, %c0_349] : memref<1x1x128xf32, #tpu.memory_space<vmem>>, vector<1x1x128xf32>
    %566 = vector.shape_cast %565 : vector<1x1x128xf32> to vector<1x128xf32>
    %567 = vector.broadcast %566 : vector<1x128xf32> to vector<2x128xf32>
    %568 = arith.addf %564, %567 : vector<2x128xf32>
    %569 = vector.extract_strided_slice %568 {offsets = [0, 0], sizes = [2, 96], strides = [1, 1]} : vector<2x128xf32> to vector<2x96xf32>
    %570 = arith.negf %569 : vector<2x96xf32>
    %571 = math.exp %570 : vector<2x96xf32>
    %cst_350 = arith.constant 1.000000e+00 : f32
    %572 = vector.broadcast %cst_350 : f32 to vector<2x96xf32>
    %573 = arith.addf %572, %571 : vector<2x96xf32>
    %574 = arith.divf %572, %573 : vector<2x96xf32>
    %575 = vector.extract_strided_slice %574 {offsets = [0, 0], sizes = [2, 32], strides = [1, 1]} : vector<2x96xf32> to vector<2x32xf32>
    %576 = vector.extract_strided_slice %574 {offsets = [0, 32], sizes = [2, 32], strides = [1, 1]} : vector<2x96xf32> to vector<2x32xf32>
    %577 = vector.extract_strided_slice %574 {offsets = [0, 64], sizes = [2, 32], strides = [1, 1]} : vector<2x96xf32> to vector<2x32xf32>
    %578 = vector.extract_strided_slice %568 {offsets = [0, 96], sizes = [2, 32], strides = [1, 1]} : vector<2x128xf32> to vector<2x32xf32>
    %579 = math.tanh %578 : vector<2x32xf32>
    %580 = arith.mulf %576, %557 : vector<2x32xf32>
    %581 = arith.mulf %575, %579 : vector<2x32xf32>
    %582 = arith.addf %580, %581 : vector<2x32xf32>
    %583 = math.tanh %582 : vector<2x32xf32>
    %584 = arith.mulf %577, %583 : vector<2x32xf32>
    %c1_351 = arith.constant 1 : index
    %c0_352 = arith.constant 0 : index
    %c0_353 = arith.constant 0 : index
    %585 = vector.load %arg8[%c1_351, %c0_352, %c0_353] : memref<2x2x32xf32, #tpu.memory_space<vmem>>, vector<1x2x32xf32>
    %586 = vector.shape_cast %585 : vector<1x2x32xf32> to vector<2x32xf32>
    %587 = vector.shape_cast %584 : vector<2x32xf32> to vector<1x2x32xf32>
    tpu.vector_store %arg8[%c1_351, %c0_352, %c0_353], %587 {strides = array<i32>} : memref<2x2x32xf32, #tpu.memory_space<vmem>>, vector<1x2x32xf32>,
    %c1_354 = arith.constant 1 : index
    %c0_355 = arith.constant 0 : index
    %c0_356 = arith.constant 0 : index
    %588 = vector.load %arg9[%c1_354, %c0_355, %c0_356] : memref<2x2x32xf32, #tpu.memory_space<vmem>>, vector<1x2x32xf32>
    %589 = vector.shape_cast %588 : vector<1x2x32xf32> to vector<2x32xf32>
    %590 = vector.shape_cast %582 : vector<2x32xf32> to vector<1x2x32xf32>
    tpu.vector_store %arg9[%c1_354, %c0_355, %c0_356], %590 {strides = array<i32>} : memref<2x2x32xf32, #tpu.memory_space<vmem>>, vector<1x2x32xf32>,
    %591 = arith.index_cast %c7_i32 : i32 to index
    %c0_357 = arith.constant 0 : index
    %c0_358 = arith.constant 0 : index
    %592 = vector.load %arg7[%591, %c0_357, %c0_358] : memref<8x2x32xf32, #tpu.memory_space<vmem>>, vector<1x2x32xf32>
    %593 = vector.shape_cast %592 : vector<1x2x32xf32> to vector<2x32xf32>
    %594 = vector.shape_cast %584 : vector<2x32xf32> to vector<1x2x32xf32>
    tpu.vector_store %arg7[%591, %c0_357, %c0_358], %594 {strides = array<i32>} : memref<8x2x32xf32, #tpu.memory_space<vmem>>, vector<1x2x32xf32>,
    %c8_i32 = arith.constant 8 : i32
    return
  }
  func.func @transform_0(%arg0: i32) -> (i32, i32, i32) {
    %c0_i32 = arith.constant 0 : i32
    %c0_i32_0 = arith.constant 0 : i32
    %c0_i32_1 = arith.constant 0 : i32
    return %arg0, %c0_i32, %c0_i32_0 : i32, i32, i32
  }
  func.func @transform_1(%arg0: i32) -> (i32, i32, i32) {
    %c0_i32 = arith.constant 0 : i32
    %c0_i32_0 = arith.constant 0 : i32
    %c0_i32_1 = arith.constant 0 : i32
    %c0_i32_2 = arith.constant 0 : i32
    return %c0_i32, %c0_i32_0, %c0_i32_1 : i32, i32, i32
  }
  func.func @transform_2(%arg0: i32) -> (i32, i32, i32) {
    %c0_i32 = arith.constant 0 : i32
    %c0_i32_0 = arith.constant 0 : i32
    %c0_i32_1 = arith.constant 0 : i32
    %c0_i32_2 = arith.constant 0 : i32
    return %c0_i32, %c0_i32_0, %c0_i32_1 : i32, i32, i32
  }
  func.func @transform_3(%arg0: i32) -> (i32, i32, i32) {
    %c0_i32 = arith.constant 0 : i32
    %c0_i32_0 = arith.constant 0 : i32
    %c0_i32_1 = arith.constant 0 : i32
    %c0_i32_2 = arith.constant 0 : i32
    return %c0_i32, %c0_i32_0, %c0_i32_1 : i32, i32, i32
  }
  func.func @transform_4(%arg0: i32) -> (i32, i32, i32) {
    %c0_i32 = arith.constant 0 : i32
    %c0_i32_0 = arith.constant 0 : i32
    %c0_i32_1 = arith.constant 0 : i32
    %c0_i32_2 = arith.constant 0 : i32
    return %c0_i32, %c0_i32_0, %c0_i32_1 : i32, i32, i32
  }
  func.func @transform_5(%arg0: i32) -> (i32, i32, i32) {
    %c0_i32 = arith.constant 0 : i32
    %c0_i32_0 = arith.constant 0 : i32
    %c0_i32_1 = arith.constant 0 : i32
    %c0_i32_2 = arith.constant 0 : i32
    return %c0_i32, %c0_i32_0, %c0_i32_1 : i32, i32, i32
  }
  func.func @transform_6(%arg0: i32) -> (i32, i32, i32) {
    %c0_i32 = arith.constant 0 : i32
    %c0_i32_0 = arith.constant 0 : i32
    %c0_i32_1 = arith.constant 0 : i32
    return %arg0, %c0_i32, %c0_i32_0 : i32, i32, i32
  }
}

</mosaic_0001>

<llo_original>
// kernel: tpu_custom_call.1
$region0: #{tpu_custom_call.1}
  #allocation0 [shape = 'u32[]', space=smem, size = 0x4, offset = 0x4, fixed_abs, tag = 'smem constant byte address 0x4 - core index']
  #allocation1 [shape = 'u32[72,128]{1,0:T(1,128)}', space=vmem, size = 0x9000, scoped, tag = 'internal scratch']
  #allocation2 [shape = 'f32[2,2,32]{2,1,0:T(2,128)}', space=vmem, size = 0x800, scoped, tag = 'scratch operand']
  #allocation3 [shape = 'f32[2,2,32]{2,1,0:T(2,128)}', space=vmem, size = 0x800, scoped, tag = 'scratch operand']
  %s0 = inlined_call_operand.hbm [shape: f32[8,2,128], index: 0, kind: input, shape index: {}]
  %s1 = inlined_call_operand.hbm [shape: f32[2,2,32], index: 1, kind: input, shape index: {}]
  %s2 = inlined_call_operand.hbm [shape: f32[2,2,32], index: 2, kind: input, shape index: {}]
  %s3 = inlined_call_operand.hbm [shape: f32[2,32,128], index: 3, kind: input, shape index: {}]
  %s4 = inlined_call_operand.hbm [shape: f32[1,32,128], index: 4, kind: input, shape index: {}]
  %s5 = inlined_call_operand.vmem [shape: f32[1,1,128], index: 5, kind: input, shape index: {}]
  %s6 = inlined_call_operand.hbm [shape: f32[8,2,32], index: 6, kind: output, shape index: {}]
  %s7 = sld [smem:[#allocation0]]
  $region58: #{tpu_custom_call.1} parent=0
    _
  %s9 = ssub.s32 1, %s7
  %s10 = scalar_select 0, %s9, %s7
  $region1: #{tpu_custom_call.1} parent=0
    #allocation4 [shape = 'u8[8192]{0}', space=vmem, size = 0x2000, scoped, tag = 'input window, operand 0, single buffered']
    #allocation5 [shape = 's32[1]{0}', space=sflag, size = 0x4, scoped, tag = 'scoped memory for tpu_custom_call.1']
    #allocation6 [shape = 's32[1]{0}', space=sflag, size = 0x4, scoped, tag = 'scoped memory for tpu_custom_call.1']
    #allocation7 [shape = 'u8[2048]{0}', space=vmem, size = 0x800, scoped, tag = 'input window, operand 1, single buffered']
    #allocation8 [shape = 's32[1]{0}', space=sflag, size = 0x4, scoped, tag = 'scoped memory for tpu_custom_call.1']
    #allocation9 [shape = 'u8[2048]{0}', space=vmem, size = 0x800, scoped, tag = 'input window, operand 2, single buffered']
    #allocation10 [shape = 'u8[32768]{0}', space=vmem, size = 0x8000, scoped, tag = 'input window, operand 3, single buffered']
    #allocation11 [shape = 's32[1]{0}', space=sflag, size = 0x4, scoped, tag = 'scoped memory for tpu_custom_call.1']
    #allocation12 [shape = 'u8[16384]{0}', space=vmem, size = 0x4000, scoped, tag = 'input window, operand 4, single buffered']
    #allocation13 [shape = 'u8[8192]{0}', space=vmem, size = 0x2000, scoped, tag = 'output window, operand 0, single buffered']
    %11 = vsyncpa [#allocation5], 0
    %12 = vsyncpa [#allocation8], 0
    %13 = vsyncpa [#allocation11], 0
    %14 = vsyncpa [#allocation6], 0
    // Predicated region
    $region2: #{tpu_custom_call.1} parent=1 // pred_check
      _
    $region3: #{tpu_custom_call.1} parent=1 // pred_check_branch
      %16 = sbr.rel (0) target = $region5
    $region4: #{tpu_custom_call.1} parent=1 // pred_region
      %18 = vsyncadd [#allocation5], 0
      %s19 = sshll.u32 %s0, 4
      %s20 = int_to_ptr.hbm [resolvable:$true] %s19
      %s21 = sshll.u32 [#allocation4], 4
      %s22 = int_to_ptr.vmem [resolvable:$true] %s21
      %27 = dma.hbm_to_vmem [thread:$0]  %s20, 256, %s22, [#allocation5], 32, 32, 2
    $region5: #{tpu_custom_call.1} parent=1 // pred_fallthru
      _
    // Predicated region
    $region6: #{tpu_custom_call.1} parent=1 // pred_check
      _
    $region7: #{tpu_custom_call.1} parent=1 // pred_check_branch
      %29 = sbr.rel (0) target = $region9
    $region8: #{tpu_custom_call.1} parent=1 // pred_region
      %31 = vsyncadd [#allocation8], 0
      %s32 = sshll.u32 %s1, 4
      %s33 = int_to_ptr.hbm [resolvable:$true] %s32
      %s34 = sshll.u32 [#allocation7], 4
      %s35 = int_to_ptr.vmem [resolvable:$true] %s34
      %40 = dma.hbm_to_vmem [thread:$0]  %s33, 64, %s35, [#allocation8], 32, 32, 2
    $region9: #{tpu_custom_call.1} parent=1 // pred_fallthru
      _
    // Predicated region
    $region10: #{tpu_custom_call.1} parent=1 // pred_check
      _
    $region11: #{tpu_custom_call.1} parent=1 // pred_check_branch
      %42 = sbr.rel (0) target = $region13
    $region12: #{tpu_custom_call.1} parent=1 // pred_region
      %44 = vsyncadd [#allocation8], 0
      %s45 = sshll.u32 %s2, 4
      %s46 = int_to_ptr.hbm [resolvable:$true] %s45
      %s47 = sshll.u32 [#allocation9], 4
      %s48 = int_to_ptr.vmem [resolvable:$true] %s47
      %53 = dma.hbm_to_vmem [thread:$0]  %s46, 64, %s48, [#allocation8], 32, 32, 2
    $region13: #{tpu_custom_call.1} parent=1 // pred_fallthru
      _
    // Predicated region
    $region14: #{tpu_custom_call.1} parent=1 // pred_check
      _
    $region15: #{tpu_custom_call.1} parent=1 // pred_check_branch
      %55 = sbr.rel (0) target = $region17
    $region16: #{tpu_custom_call.1} parent=1 // pred_region
      %57 = vsyncadd [#allocation11], 0
      %s58 = sshll.u32 %s3, 4
      %s59 = int_to_ptr.hbm [resolvable:$true] %s58
      %s60 = sshll.u32 [#allocation10], 4
      %s61 = int_to_ptr.vmem [resolvable:$true] %s60
      %66 = dma.hbm_to_vmem [thread:$0]  %s59, 1024, %s61, [#allocation11], 128, 128, 8
    $region17: #{tpu_custom_call.1} parent=1 // pred_fallthru
      _
    // Predicated region
    $region18: #{tpu_custom_call.1} parent=1 // pred_check
      _
    $region19: #{tpu_custom_call.1} parent=1 // pred_check_branch
      %68 = sbr.rel (0) target = $region21
    $region20: #{tpu_custom_call.1} parent=1 // pred_region
      %70 = vsyncadd [#allocation11], 0
      %s71 = sshll.u32 %s4, 4
      %s72 = int_to_ptr.hbm [resolvable:$true] %s71
      %s73 = sshll.u32 [#allocation12], 4
      %s74 = int_to_ptr.vmem [resolvable:$true] %s73
      %79 = dma.hbm_to_vmem [thread:$0]  %s72, 512, %s74, [#allocation11], 128, 128, 8
    $region21: #{tpu_custom_call.1} parent=1 // pred_fallthru
      _
    // Predicated region
    $region22: #{tpu_custom_call.1} parent=1 // pred_check
      _
    $region23: #{tpu_custom_call.1} parent=1 // pred_check_branch
      %81 = sbr.rel (0) target = $region25
    $region24: #{tpu_custom_call.1} parent=1 // pred_region
      _
    $region25: #{tpu_custom_call.1} parent=1 // pred_fallthru
      _
    // Predicated region
    $region26: #{tpu_custom_call.1} parent=1 // pred_check
      _
    $region27: #{tpu_custom_call.1} parent=1 // pred_check_branch
      %83 = sbr.rel (0) target = $region29
    $region28: #{tpu_custom_call.1} parent=1 // pred_region
      %85 = dma.done [#allocation5], 256
    $region29: #{tpu_custom_call.1} parent=1 // pred_fallthru
      _
    // Predicated region
    $region30: #{tpu_custom_call.1} parent=1 // pred_check
      _
    $region31: #{tpu_custom_call.1} parent=1 // pred_check_branch
      %87 = sbr.rel (0) target = $region33
    $region32: #{tpu_custom_call.1} parent=1 // pred_region
      %89 = dma.done [#allocation8], 64
    $region33: #{tpu_custom_call.1} parent=1 // pred_fallthru
      _
    // Predicated region
    $region34: #{tpu_custom_call.1} parent=1 // pred_check
      _
    $region35: #{tpu_custom_call.1} parent=1 // pred_check_branch
      %91 = sbr.rel (0) target = $region37
    $region36: #{tpu_custom_call.1} parent=1 // pred_region
      %93 = dma.done [#allocation8], 64
    $region37: #{tpu_custom_call.1} parent=1 // pred_fallthru
      _
    // Predicated region
    $region38: #{tpu_custom_call.1} parent=1 // pred_check
      _
    $region39: #{tpu_custom_call.1} parent=1 // pred_check_branch
      %95 = sbr.rel (0) target = $region41
    $region40: #{tpu_custom_call.1} parent=1 // pred_region
      %97 = dma.done [#allocation11], 1024
    $region41: #{tpu_custom_call.1} parent=1 // pred_fallthru
      _
    // Predicated region
    $region42: #{tpu_custom_call.1} parent=1 // pred_check
      _
    $region43: #{tpu_custom_call.1} parent=1 // pred_check_branch
      %99 = sbr.rel (0) target = $region45
    $region44: #{tpu_custom_call.1} parent=1 // pred_region
      %101 = dma.done [#allocation11], 512
    $region45: #{tpu_custom_call.1} parent=1 // pred_fallthru
      _
    %p102 = scmp.eq.s32.totalorder 0, 0
    // Predicated region
    $region46: #{tpu_custom_call.1} parent=1 // pred_check
      %p103 = pneg %p102
    $region47: #{tpu_custom_call.1} parent=1 // pred_check_branch
      %105 = sbr.rel (%p103) target = $region49
    $region48: #{tpu_custom_call.1} parent=1 // pred_region
      %v106 = vld [vmem:[#allocation7] sm:$0x3]
      %v107 = vld [vmem:[#allocation7 + $0x2] sm:$0x3]
      %vm108 = vcmask 254976
      %109 = vst.msk [vmem:[#allocation2] sm:$0x3] %vm108, %v106
      %110 = vst.msk [vmem:[#allocation2 + $0x2] sm:$0x3] %vm108, %v107
      %v111 = vld [vmem:[#allocation9] sm:$0x3]
      %v112 = vld [vmem:[#allocation9 + $0x2] sm:$0x3]
      %113 = vst.msk [vmem:[#allocation3] sm:$0x3] %vm108, %v111
      %114 = vst.msk [vmem:[#allocation3 + $0x2] sm:$0x3] %vm108, %v112
    $region49: #{tpu_custom_call.1} parent=1 // pred_fallthru
      _
    %v115 = vld [vmem:[#allocation4] sm:$0x3]
    %v116 = vld [vmem:[#allocation2] sm:$0x3]
    %v117 = vld [vmem:[#allocation3] sm:$0x3]
    %v118 = vld [vmem:[#allocation10] sm:$0xff]
    %v119 = vld [vmem:[#allocation10 + $0x8] sm:$0xff]
    %v120 = vld [vmem:[#allocation10 + $0x10] sm:$0xff]
    %v121 = vld [vmem:[#allocation10 + $0x18] sm:$0xff]
    %vm122 = vcmask 261120
    %v124 = vsel %vm122, %v116, 0
    %126 = vmatpush.msra.mxu0 0.0
    %127 = vmatpush.msra.mxu0 0.0
    %128 = vmatpush.msra.mxu0 0.0
    %129 = vmatpush.msra.mxu0 0.0
    %130 = vmatpush.msra.mxu0 0.0
    %131 = vmatpush.msra.mxu0 0.0
    %132 = vmatpush.msra.mxu0 0.0
    %133 = vmatpush.msra.mxu0 0.0
    %134 = vmatpush.msra.mxu0 0.0
    %135 = vmatpush.msra.mxu0 0.0
    %136 = vmatpush.msra.mxu0 0.0
    %137 = vmatpush.msra.mxu0 0.0
    %138 = vmatpush.msra.mxu0 %v121
    %139 = vmatpush.msra.mxu0 %v120
    %140 = vmatpush.msra.mxu0 %v119
    %141 = vmatpush.msra.mxu0 %v118
    %142 = vmatmul.f32.gmra.mxu0 %v124
    %v143 = vpop.f32.mrf.mxu0
    %v144 = vadd.f32 0.0, %v143
    %145 = vdwg.mxu0
    %v146 = vadd.f32 %v115, %v144
    %v147 = vxor.u32 %v146, 2147483648
    %v148 = vmul.f32 %v147, 1.442695
    %v149 = vpow.pop %v148
    %v150 = vadd.f32 %v149, 1.0
    %v151 = vrcp.pop %v150
    %v152 = vmul.f32 %v150, %v151
    %v153 = vsub.f32 1.0, %v152
    %v154 = vmul.f32 %v151, %v153
    %v155 = vadd.f32 %v151, %v154
    %vm156 = vweird.f32 %v150
    %vm157 = vweird.f32 %v151
    %vm158 = vmor %vm156, %vm157
    %v159 = vsel %vm158, %v151, %v155
    %v160 = vand.u32 2147483647, %v150
    %vm161 = vcmp.eq.f32.partialorder %v160, 8.507059e+37
    %v162 = vand.u32 %v150, 2147483648
    %v163 = vor.u32 1.1754944e-38, %v162
    %v164 = vsel %vm161, %v163, %v159
    %v165 = vmul.f32 1.0, %v164
    %v166 = vtanh.pop %v146
    %168 = vrot.lane.b32.xlu0 %v117, 32
    %v169 = vpop.permute.xlu0 %168
    %v171 = vmul.f32 %v165, %v169
    %173 = vrot.lane.b32.xlu0 %v166, 32
    %v174 = vpop.permute.xlu0 %173
    %v176 = vmul.f32 %v165, %v174
    %178 = vrot.lane.b32.xlu0 %v176, 32
    %v179 = vpop.permute.xlu0 %178
    %v181 = vadd.f32 %v171, %v179
    %v182 = vtanh.pop %v181
    %184 = vrot.lane.b32.xlu0 %v182, 32
    %v185 = vpop.permute.xlu0 %184
    %v187 = vmul.f32 %v165, %v185
    %189 = vrot.lane.b32.xlu0 %v187, 64
    %v190 = vpop.permute.xlu0 %189
    %vm192 = vcmask 254976
    %193 = vst.msk [vmem:[#allocation2] sm:$0x3] %vm192, %v190
    %195 = vrot.lane.b32.xlu0 %v181, 96
    %v196 = vpop.permute.xlu0 %195
    %198 = vst.msk [vmem:[#allocation3] sm:$0x3] %vm192, %v196
    %s199 = scalar_lea.vmem [#allocation2], 2
    %v200 = vld [vmem:[%s199] sm:$0x3]
    %s201 = scalar_lea.vmem [#allocation3], 2
    %v202 = vld [vmem:[%s201] sm:$0x3]
    %v203 = vld [vmem:[#allocation12] sm:$0xff]
    %v204 = vld [vmem:[#allocation12 + $0x8] sm:$0xff]
    %v205 = vld [vmem:[#allocation12 + $0x10] sm:$0xff]
    %v206 = vld [vmem:[#allocation12 + $0x18] sm:$0xff]
    %s207 = scalar_lea.vmem [#allocation10], 32
    %v208 = vld [vmem:[%s207] sm:$0xff]
    %v209 = vld [vmem:[%s207 + $0x8] sm:$0xff]
    %v210 = vld [vmem:[%s207 + $0x10] sm:$0xff]
    %v211 = vld [vmem:[%s207 + $0x18] sm:$0xff]
    %v213 = vsel %vm122, %v200, 0
    %215 = vmatpush.msra.mxu0 0.0
    %216 = vmatpush.msra.mxu0 0.0
    %217 = vmatpush.msra.mxu0 0.0
    %218 = vmatpush.msra.mxu0 0.0
    %219 = vmatpush.msra.mxu0 0.0
    %220 = vmatpush.msra.mxu0 0.0
    %221 = vmatpush.msra.mxu0 0.0
    %222 = vmatpush.msra.mxu0 0.0
    %223 = vmatpush.msra.mxu0 0.0
    %224 = vmatpush.msra.mxu0 0.0
    %225 = vmatpush.msra.mxu0 0.0
    %226 = vmatpush.msra.mxu0 0.0
    %227 = vmatpush.msra.mxu0 %v211
    %228 = vmatpush.msra.mxu0 %v210
    %229 = vmatpush.msra.mxu0 %v209
    %230 = vmatpush.msra.mxu0 %v208
    %231 = vmatmul.f32.gmra.mxu0 %v213
    %v232 = vpop.f32.mrf.mxu0
    %v233 = vadd.f32 0.0, %v232
    %234 = vdwg.mxu0
    %v235 = vsel %vm122, %v190, 0
    %237 = vmatpush.msra.mxu0 0.0
    %238 = vmatpush.msra.mxu0 0.0
    %239 = vmatpush.msra.mxu0 0.0
    %240 = vmatpush.msra.mxu0 0.0
    %241 = vmatpush.msra.mxu0 0.0
    %242 = vmatpush.msra.mxu0 0.0
    %243 = vmatpush.msra.mxu0 0.0
    %244 = vmatpush.msra.mxu0 0.0
    %245 = vmatpush.msra.mxu0 0.0
    %246 = vmatpush.msra.mxu0 0.0
    %247 = vmatpush.msra.mxu0 0.0
    %248 = vmatpush.msra.mxu0 0.0
    %249 = vmatpush.msra.mxu0 %v206
    %250 = vmatpush.msra.mxu0 %v205
    %251 = vmatpush.msra.mxu0 %v204
    %252 = vmatpush.msra.mxu0 %v203
    %253 = vmatmul.f32.gmra.mxu0 %v235
    %v254 = vpop.f32.mrf.mxu0
    %v255 = vadd.f32 %v233, %v254
    %256 = vdwg.mxu0
    %v257 = vld [vmem:[%s5] sm:$0x1]
    %v259 = vperm.slane %v257, 0
    %v261 = vadd.f32 %v255, %v259
    %v262 = vxor.u32 %v261, 2147483648
    %v263 = vmul.f32 %v262, 1.442695
    %v264 = vpow.pop %v263
    %v265 = vadd.f32 %v264, 1.0
    %v266 = vrcp.pop %v265
    %v267 = vmul.f32 %v265, %v266
    %v268 = vsub.f32 1.0, %v267
    %v269 = vmul.f32 %v266, %v268
    %v270 = vadd.f32 %v266, %v269
    %vm271 = vweird.f32 %v265
    %vm272 = vweird.f32 %v266
    %vm273 = vmor %vm271, %vm272
    %v274 = vsel %vm273, %v266, %v270
    %v275 = vand.u32 2147483647, %v265
    %vm276 = vcmp.eq.f32.partialorder %v275, 8.507059e+37
    %v277 = vand.u32 %v265, 2147483648
    %v278 = vor.u32 1.1754944e-38, %v277
    %v279 = vsel %vm276, %v278, %v274
    %v280 = vmul.f32 1.0, %v279
    %v281 = vtanh.pop %v261
    %283 = vrot.lane.b32.xlu0 %v202, 32
    %v284 = vpop.permute.xlu0 %283
    %v286 = vmul.f32 %v280, %v284
    %288 = vrot.lane.b32.xlu0 %v281, 32
    %v289 = vpop.permute.xlu0 %288
    %v291 = vmul.f32 %v280, %v289
    %293 = vrot.lane.b32.xlu0 %v291, 32
    %v294 = vpop.permute.xlu0 %293
    %v296 = vadd.f32 %v286, %v294
    %v297 = vtanh.pop %v296
    %299 = vrot.lane.b32.xlu0 %v297, 32
    %v300 = vpop.permute.xlu0 %299
    %v302 = vmul.f32 %v280, %v300
    %304 = vrot.lane.b32.xlu0 %v302, 64
    %v305 = vpop.permute.xlu0 %304
    %307 = vst.msk [vmem:[%s199] sm:$0x3] %vm192, %v305
    %309 = vrot.lane.b32.xlu0 %v296, 96
    %v310 = vpop.permute.xlu0 %309
    %312 = vst.msk [vmem:[%s201] sm:$0x3] %vm192, %v310
    %313 = vst.msk [vmem:[#allocation13] sm:$0x3] %vm192, %v305
    %s314 = scalar_lea.vmem [#allocation4], 2
    %v315 = vld [vmem:[%s314] sm:$0x3]
    %v316 = vld [vmem:[#allocation2] sm:$0x3]
    %v317 = vld [vmem:[#allocation3] sm:$0x3]
    %v318 = vld [vmem:[#allocation10] sm:$0xff]
    %v319 = vld [vmem:[#allocation10 + $0x8] sm:$0xff]
    %v320 = vld [vmem:[#allocation10 + $0x10] sm:$0xff]
    %v321 = vld [vmem:[#allocation10 + $0x18] sm:$0xff]
    %v323 = vsel %vm122, %v316, 0
    %325 = vmatpush.msra.mxu0 0.0
    %326 = vmatpush.msra.mxu0 0.0
    %327 = vmatpush.msra.mxu0 0.0
    %328 = vmatpush.msra.mxu0 0.0
    %329 = vmatpush.msra.mxu0 0.0
    %330 = vmatpush.msra.mxu0 0.0
    %331 = vmatpush.msra.mxu0 0.0
    %332 = vmatpush.msra.mxu0 0.0
    %333 = vmatpush.msra.mxu0 0.0
    %334 = vmatpush.msra.mxu0 0.0
    %335 = vmatpush.msra.mxu0 0.0
    %336 = vmatpush.msra.mxu0 0.0
    %337 = vmatpush.msra.mxu0 %v321
    %338 = vmatpush.msra.mxu0 %v320
    %339 = vmatpush.msra.mxu0 %v319
    %340 = vmatpush.msra.mxu0 %v318
    %341 = vmatmul.f32.gmra.mxu0 %v323
    %v342 = vpop.f32.mrf.mxu0
    %v343 = vadd.f32 0.0, %v342
    %344 = vdwg.mxu0
    %v345 = vadd.f32 %v315, %v343
    %v346 = vxor.u32 %v345, 2147483648
    %v347 = vmul.f32 %v346, 1.442695
    %v348 = vpow.pop %v347
    %v349 = vadd.f32 %v348, 1.0
    %v350 = vrcp.pop %v349
    %v351 = vmul.f32 %v349, %v350
    %v352 = vsub.f32 1.0, %v351
    %v353 = vmul.f32 %v350, %v352
    %v354 = vadd.f32 %v350, %v353
    %vm355 = vweird.f32 %v349
    %vm356 = vweird.f32 %v350
    %vm357 = vmor %vm355, %vm356
    %v358 = vsel %vm357, %v350, %v354
    %v359 = vand.u32 2147483647, %v349
    %vm360 = vcmp.eq.f32.partialorder %v359, 8.507059e+37
    %v361 = vand.u32 %v349, 2147483648
    %v362 = vor.u32 1.1754944e-38, %v361
    %v363 = vsel %vm360, %v362, %v358
    %v364 = vmul.f32 1.0, %v363
    %v365 = vtanh.pop %v345
    %367 = vrot.lane.b32.xlu0 %v317, 32
    %v368 = vpop.permute.xlu0 %367
    %v370 = vmul.f32 %v364, %v368
    %372 = vrot.lane.b32.xlu0 %v365, 32
    %v373 = vpop.permute.xlu0 %372
    %v375 = vmul.f32 %v364, %v373
    %377 = vrot.lane.b32.xlu0 %v375, 32
    %v378 = vpop.permute.xlu0 %377
    %v380 = vadd.f32 %v370, %v378
    %v381 = vtanh.pop %v380
    %383 = vrot.lane.b32.xlu0 %v381, 32
    %v384 = vpop.permute.xlu0 %383
    %v386 = vmul.f32 %v364, %v384
    %388 = vrot.lane.b32.xlu0 %v386, 64
    %v389 = vpop.permute.xlu0 %388
    %391 = vst.msk [vmem:[#allocation2] sm:$0x3] %vm192, %v389
    %393 = vrot.lane.b32.xlu0 %v380, 96
    %v394 = vpop.permute.xlu0 %393
    %396 = vst.msk [vmem:[#allocation3] sm:$0x3] %vm192, %v394
    %v397 = vld [vmem:[%s199] sm:$0x3]
    %v398 = vld [vmem:[%s201] sm:$0x3]
    %v399 = vld [vmem:[#allocation12] sm:$0xff]
    %v400 = vld [vmem:[#allocation12 + $0x8] sm:$0xff]
    %v401 = vld [vmem:[#allocation12 + $0x10] sm:$0xff]
    %v402 = vld [vmem:[#allocation12 + $0x18] sm:$0xff]
    %v403 = vld [vmem:[%s207] sm:$0xff]
    %v404 = vld [vmem:[%s207 + $0x8] sm:$0xff]
    %v405 = vld [vmem:[%s207 + $0x10] sm:$0xff]
    %v406 = vld [vmem:[%s207 + $0x18] sm:$0xff]
    %v408 = vsel %vm122, %v397, 0
    %410 = vmatpush.msra.mxu0 0.0
    %411 = vmatpush.msra.mxu0 0.0
    %412 = vmatpush.msra.mxu0 0.0
    %413 = vmatpush.msra.mxu0 0.0
    %414 = vmatpush.msra.mxu0 0.0
    %415 = vmatpush.msra.mxu0 0.0
    %416 = vmatpush.msra.mxu0 0.0
    %417 = vmatpush.msra.mxu0 0.0
    %418 = vmatpush.msra.mxu0 0.0
    %419 = vmatpush.msra.mxu0 0.0
    %420 = vmatpush.msra.mxu0 0.0
    %421 = vmatpush.msra.mxu0 0.0
    %422 = vmatpush.msra.mxu0 %v406
    %423 = vmatpush.msra.mxu0 %v405
    %424 = vmatpush.msra.mxu0 %v404
    %425 = vmatpush.msra.mxu0 %v403
    %426 = vmatmul.f32.gmra.mxu0 %v408
    %v427 = vpop.f32.mrf.mxu0
    %v428 = vadd.f32 0.0, %v427
    %429 = vdwg.mxu0
    %v430 = vsel %vm122, %v389, 0
    %432 = vmatpush.msra.mxu0 0.0
    %433 = vmatpush.msra.mxu0 0.0
    %434 = vmatpush.msra.mxu0 0.0
    %435 = vmatpush.msra.mxu0 0.0
    %436 = vmatpush.msra.mxu0 0.0
    %437 = vmatpush.msra.mxu0 0.0
    %438 = vmatpush.msra.mxu0 0.0
    %439 = vmatpush.msra.mxu0 0.0
    %440 = vmatpush.msra.mxu0 0.0
    %441 = vmatpush.msra.mxu0 0.0
    %442 = vmatpush.msra.mxu0 0.0
    %443 = vmatpush.msra.mxu0 0.0
    %444 = vmatpush.msra.mxu0 %v402
    %445 = vmatpush.msra.mxu0 %v401
    %446 = vmatpush.msra.mxu0 %v400
    %447 = vmatpush.msra.mxu0 %v399
    %448 = vmatmul.f32.gmra.mxu0 %v430
    %v449 = vpop.f32.mrf.mxu0
    %v450 = vadd.f32 %v428, %v449
    %451 = vdwg.mxu0
    %v452 = vld [vmem:[%s5] sm:$0x1]
    %v454 = vperm.slane %v452, 0
    %v456 = vadd.f32 %v450, %v454
    %v457 = vxor.u32 %v456, 2147483648
    %v458 = vmul.f32 %v457, 1.442695
    %v459 = vpow.pop %v458
    %v460 = vadd.f32 %v459, 1.0
    %v461 = vrcp.pop %v460
    %v462 = vmul.f32 %v460, %v461
    %v463 = vsub.f32 1.0, %v462
    %v464 = vmul.f32 %v461, %v463
    %v465 = vadd.f32 %v461, %v464
    %vm466 = vweird.f32 %v460
    %vm467 = vweird.f32 %v461
    %vm468 = vmor %vm466, %vm467
    %v469 = vsel %vm468, %v461, %v465
    %v470 = vand.u32 2147483647, %v460
    %vm471 = vcmp.eq.f32.partialorder %v470, 8.507059e+37
    %v472 = vand.u32 %v460, 2147483648
    %v473 = vor.u32 1.1754944e-38, %v472
    %v474 = vsel %vm471, %v473, %v469
    %v475 = vmul.f32 1.0, %v474
    %v476 = vtanh.pop %v456
    %478 = vrot.lane.b32.xlu0 %v398, 32
    %v479 = vpop.permute.xlu0 %478
    %v481 = vmul.f32 %v475, %v479
    %483 = vrot.lane.b32.xlu0 %v476, 32
    %v484 = vpop.permute.xlu0 %483
    %v486 = vmul.f32 %v475, %v484
    %488 = vrot.lane.b32.xlu0 %v486, 32
    %v489 = vpop.permute.xlu0 %488
    %v491 = vadd.f32 %v481, %v489
    %v492 = vtanh.pop %v491
    %494 = vrot.lane.b32.xlu0 %v492, 32
    %v495 = vpop.permute.xlu0 %494
    %v497 = vmul.f32 %v475, %v495
    %499 = vrot.lane.b32.xlu0 %v497, 64
    %v500 = vpop.permute.xlu0 %499
    %502 = vst.msk [vmem:[%s199] sm:$0x3] %vm192, %v500
    %504 = vrot.lane.b32.xlu0 %v491, 96
    %v505 = vpop.permute.xlu0 %504
    %507 = vst.msk [vmem:[%s201] sm:$0x3] %vm192, %v505
    %s508 = scalar_lea.vmem [#allocation13], 2
    %509 = vst.msk [vmem:[%s508] sm:$0x3] %vm192, %v500
    %s510 = scalar_lea.vmem [#allocation4], 4
    %v511 = vld [vmem:[%s510] sm:$0x3]
    %v512 = vld [vmem:[#allocation2] sm:$0x3]
    %v513 = vld [vmem:[#allocation3] sm:$0x3]
    %v514 = vld [vmem:[#allocation10] sm:$0xff]
    %v515 = vld [vmem:[#allocation10 + $0x8] sm:$0xff]
    %v516 = vld [vmem:[#allocation10 + $0x10] sm:$0xff]
    %v517 = vld [vmem:[#allocation10 + $0x18] sm:$0xff]
    %v519 = vsel %vm122, %v512, 0
    %521 = vmatpush.msra.mxu0 0.0
    %522 = vmatpush.msra.mxu0 0.0
    %523 = vmatpush.msra.mxu0 0.0
    %524 = vmatpush.msra.mxu0 0.0
    %525 = vmatpush.msra.mxu0 0.0
    %526 = vmatpush.msra.mxu0 0.0
    %527 = vmatpush.msra.mxu0 0.0
    %528 = vmatpush.msra.mxu0 0.0
    %529 = vmatpush.msra.mxu0 0.0
    %530 = vmatpush.msra.mxu0 0.0
    %531 = vmatpush.msra.mxu0 0.0
    %532 = vmatpush.msra.mxu0 0.0
    %533 = vmatpush.msra.mxu0 %v517
    %534 = vmatpush.msra.mxu0 %v516
    %535 = vmatpush.msra.mxu0 %v515
    %536 = vmatpush.msra.mxu0 %v514
    %537 = vmatmul.f32.gmra.mxu0 %v519
    %v538 = vpop.f32.mrf.mxu0
    %v539 = vadd.f32 0.0, %v538
    %540 = vdwg.mxu0
    %v541 = vadd.f32 %v511, %v539
    %v542 = vxor.u32 %v541, 2147483648
    %v543 = vmul.f32 %v542, 1.442695
    %v544 = vpow.pop %v543
    %v545 = vadd.f32 %v544, 1.0
    %v546 = vrcp.pop %v545
    %v547 = vmul.f32 %v545, %v546
    %v548 = vsub.f32 1.0, %v547
    %v549 = vmul.f32 %v546, %v548
    %v550 = vadd.f32 %v546, %v549
    %vm551 = vweird.f32 %v545
    %vm552 = vweird.f32 %v546
    %vm553 = vmor %vm551, %vm552
    %v554 = vsel %vm553, %v546, %v550
    %v555 = vand.u32 2147483647, %v545
    %vm556 = vcmp.eq.f32.partialorder %v555, 8.507059e+37
    %v557 = vand.u32 %v545, 2147483648
    %v558 = vor.u32 1.1754944e-38, %v557
    %v559 = vsel %vm556, %v558, %v554
    %v560 = vmul.f32 1.0, %v559
    %v561 = vtanh.pop %v541
    %563 = vrot.lane.b32.xlu0 %v513, 32
    %v564 = vpop.permute.xlu0 %563
    %v566 = vmul.f32 %v560, %v564
    %568 = vrot.lane.b32.xlu0 %v561, 32
    %v569 = vpop.permute.xlu0 %568
    %v571 = vmul.f32 %v560, %v569
    %573 = vrot.lane.b32.xlu0 %v571, 32
    %v574 = vpop.permute.xlu0 %573
    %v576 = vadd.f32 %v566, %v574
    %v577 = vtanh.pop %v576
    %579 = vrot.lane.b32.xlu0 %v577, 32
    %v580 = vpop.permute.xlu0 %579
    %v582 = vmul.f32 %v560, %v580
    %584 = vrot.lane.b32.xlu0 %v582, 64
    %v585 = vpop.permute.xlu0 %584
    %587 = vst.msk [vmem:[#allocation2] sm:$0x3] %vm192, %v585
    %589 = vrot.lane.b32.xlu0 %v576, 96
    %v590 = vpop.permute.xlu0 %589
    %592 = vst.msk [vmem:[#allocation3] sm:$0x3] %vm192, %v590
    %v593 = vld [vmem:[%s199] sm:$0x3]
    %v594 = vld [vmem:[%s201] sm:$0x3]
    %v595 = vld [vmem:[#allocation12] sm:$0xff]
    %v596 = vld [vmem:[#allocation12 + $0x8] sm:$0xff]
    %v597 = vld [vmem:[#allocation12 + $0x10] sm:$0xff]
    %v598 = vld [vmem:[#allocation12 + $0x18] sm:$0xff]
    %v599 = vld [vmem:[%s207] sm:$0xff]
    %v600 = vld [vmem:[%s207 + $0x8] sm:$0xff]
    %v601 = vld [vmem:[%s207 + $0x10] sm:$0xff]
    %v602 = vld [vmem:[%s207 + $0x18] sm:$0xff]
    %v604 = vsel %vm122, %v593, 0
    %606 = vmatpush.msra.mxu0 0.0
    %607 = vmatpush.msra.mxu0 0.0
    %608 = vmatpush.msra.mxu0 0.0
    %609 = vmatpush.msra.mxu0 0.0
    %610 = vmatpush.msra.mxu0 0.0
    %611 = vmatpush.msra.mxu0 0.0
    %612 = vmatpush.msra.mxu0 0.0
    %613 = vmatpush.msra.mxu0 0.0
    %614 = vmatpush.msra.mxu0 0.0
    %615 = vmatpush.msra.mxu0 0.0
    %616 = vmatpush.msra.mxu0 0.0
    %617 = vmatpush.msra.mxu0 0.0
    %618 = vmatpush.msra.mxu0 %v602
    %619 = vmatpush.msra.mxu0 %v601
    %620 = vmatpush.msra.mxu0 %v600
    %621 = vmatpush.msra.mxu0 %v599
    %622 = vmatmul.f32.gmra.mxu0 %v604
    %v623 = vpop.f32.mrf.mxu0
    %v624 = vadd.f32 0.0, %v623
    %625 = vdwg.mxu0
    %v626 = vsel %vm122, %v585, 0
    %628 = vmatpush.msra.mxu0 0.0
    %629 = vmatpush.msra.mxu0 0.0
    %630 = vmatpush.msra.mxu0 0.0
    %631 = vmatpush.msra.mxu0 0.0
    %632 = vmatpush.msra.mxu0 0.0
    %633 = vmatpush.msra.mxu0 0.0
    %634 = vmatpush.msra.mxu0 0.0
    %635 = vmatpush.msra.mxu0 0.0
    %636 = vmatpush.msra.mxu0 0.0
    %637 = vmatpush.msra.mxu0 0.0
    %638 = vmatpush.msra.mxu0 0.0
    %639 = vmatpush.msra.mxu0 0.0
    %640 = vmatpush.msra.mxu0 %v598
    %641 = vmatpush.msra.mxu0 %v597
    %642 = vmatpush.msra.mxu0 %v596
    %643 = vmatpush.msra.mxu0 %v595
    %644 = vmatmul.f32.gmra.mxu0 %v626
    %v645 = vpop.f32.mrf.mxu0
    %v646 = vadd.f32 %v624, %v645
    %647 = vdwg.mxu0
    %v648 = vld [vmem:[%s5] sm:$0x1]
    %v650 = vperm.slane %v648, 0
    %v652 = vadd.f32 %v646, %v650
    %v653 = vxor.u32 %v652, 2147483648
    %v654 = vmul.f32 %v653, 1.442695
    %v655 = vpow.pop %v654
    %v656 = vadd.f32 %v655, 1.0
    %v657 = vrcp.pop %v656
    %v658 = vmul.f32 %v656, %v657
    %v659 = vsub.f32 1.0, %v658
    %v660 = vmul.f32 %v657, %v659
    %v661 = vadd.f32 %v657, %v660
    %vm662 = vweird.f32 %v656
    %vm663 = vweird.f32 %v657
    %vm664 = vmor %vm662, %vm663
    %v665 = vsel %vm664, %v657, %v661
    %v666 = vand.u32 2147483647, %v656
    %vm667 = vcmp.eq.f32.partialorder %v666, 8.507059e+37
    %v668 = vand.u32 %v656, 2147483648
    %v669 = vor.u32 1.1754944e-38, %v668
    %v670 = vsel %vm667, %v669, %v665
    %v671 = vmul.f32 1.0, %v670
    %v672 = vtanh.pop %v652
    %674 = vrot.lane.b32.xlu0 %v594, 32
    %v675 = vpop.permute.xlu0 %674
    %v677 = vmul.f32 %v671, %v675
    %679 = vrot.lane.b32.xlu0 %v672, 32
    %v680 = vpop.permute.xlu0 %679
    %v682 = vmul.f32 %v671, %v680
    %684 = vrot.lane.b32.xlu0 %v682, 32
    %v685 = vpop.permute.xlu0 %684
    %v687 = vadd.f32 %v677, %v685
    %v688 = vtanh.pop %v687
    %690 = vrot.lane.b32.xlu0 %v688, 32
    %v691 = vpop.permute.xlu0 %690
    %v693 = vmul.f32 %v671, %v691
    %695 = vrot.lane.b32.xlu0 %v693, 64
    %v696 = vpop.permute.xlu0 %695
    %698 = vst.msk [vmem:[%s199] sm:$0x3] %vm192, %v696
    %700 = vrot.lane.b32.xlu0 %v687, 96
    %v701 = vpop.permute.xlu0 %700
    %703 = vst.msk [vmem:[%s201] sm:$0x3] %vm192, %v701
    %s704 = scalar_lea.vmem [#allocation13], 4
    %705 = vst.msk [vmem:[%s704] sm:$0x3] %vm192, %v696
    %s706 = scalar_lea.vmem [#allocation4], 6
    %v707 = vld [vmem:[%s706] sm:$0x3]
    %v708 = vld [vmem:[#allocation2] sm:$0x3]
    %v709 = vld [vmem:[#allocation3] sm:$0x3]
    %v710 = vld [vmem:[#allocation10] sm:$0xff]
    %v711 = vld [vmem:[#allocation10 + $0x8] sm:$0xff]
    %v712 = vld [vmem:[#allocation10 + $0x10] sm:$0xff]
    %v713 = vld [vmem:[#allocation10 + $0x18] sm:$0xff]
    %v715 = vsel %vm122, %v708, 0
    %717 = vmatpush.msra.mxu0 0.0
    %718 = vmatpush.msra.mxu0 0.0
    %719 = vmatpush.msra.mxu0 0.0
    %720 = vmatpush.msra.mxu0 0.0
    %721 = vmatpush.msra.mxu0 0.0
    %722 = vmatpush.msra.mxu0 0.0
    %723 = vmatpush.msra.mxu0 0.0
    %724 = vmatpush.msra.mxu0 0.0
    %725 = vmatpush.msra.mxu0 0.0
    %726 = vmatpush.msra.mxu0 0.0
    %727 = vmatpush.msra.mxu0 0.0
    %728 = vmatpush.msra.mxu0 0.0
    %729 = vmatpush.msra.mxu0 %v713
    %730 = vmatpush.msra.mxu0 %v712
    %731 = vmatpush.msra.mxu0 %v711
    %732 = vmatpush.msra.mxu0 %v710
    %733 = vmatmul.f32.gmra.mxu0 %v715
    %v734 = vpop.f32.mrf.mxu0
    %v735 = vadd.f32 0.0, %v734
    %736 = vdwg.mxu0
    %v737 = vadd.f32 %v707, %v735
    %v738 = vxor.u32 %v737, 2147483648
    %v739 = vmul.f32 %v738, 1.442695
    %v740 = vpow.pop %v739
    %v741 = vadd.f32 %v740, 1.0
    %v742 = vrcp.pop %v741
    %v743 = vmul.f32 %v741, %v742
    %v744 = vsub.f32 1.0, %v743
    %v745 = vmul.f32 %v742, %v744
    %v746 = vadd.f32 %v742, %v745
    %vm747 = vweird.f32 %v741
    %vm748 = vweird.f32 %v742
    %vm749 = vmor %vm747, %vm748
    %v750 = vsel %vm749, %v742, %v746
    %v751 = vand.u32 2147483647, %v741
    %vm752 = vcmp.eq.f32.partialorder %v751, 8.507059e+37
    %v753 = vand.u32 %v741, 2147483648
    %v754 = vor.u32 1.1754944e-38, %v753
    %v755 = vsel %vm752, %v754, %v750
    %v756 = vmul.f32 1.0, %v755
    %v757 = vtanh.pop %v737
    %759 = vrot.lane.b32.xlu0 %v709, 32
    %v760 = vpop.permute.xlu0 %759
    %v762 = vmul.f32 %v756, %v760
    %764 = vrot.lane.b32.xlu0 %v757, 32
    %v765 = vpop.permute.xlu0 %764
    %v767 = vmul.f32 %v756, %v765
    %769 = vrot.lane.b32.xlu0 %v767, 32
    %v770 = vpop.permute.xlu0 %769
    %v772 = vadd.f32 %v762, %v770
    %v773 = vtanh.pop %v772
    %775 = vrot.lane.b32.xlu0 %v773, 32
    %v776 = vpop.permute.xlu0 %775
    %v778 = vmul.f32 %v756, %v776
    %780 = vrot.lane.b32.xlu0 %v778, 64
    %v781 = vpop.permute.xlu0 %780
    %783 = vst.msk [vmem:[#allocation2] sm:$0x3] %vm192, %v781
    %785 = vrot.lane.b32.xlu0 %v772, 96
    %v786 = vpop.permute.xlu0 %785
    %788 = vst.msk [vmem:[#allocation3] sm:$0x3] %vm192, %v786
    %v789 = vld [vmem:[%s199] sm:$0x3]
    %v790 = vld [vmem:[%s201] sm:$0x3]
    %v791 = vld [vmem:[#allocation12] sm:$0xff]
    %v792 = vld [vmem:[#allocation12 + $0x8] sm:$0xff]
    %v793 = vld [vmem:[#allocation12 + $0x10] sm:$0xff]
    %v794 = vld [vmem:[#allocation12 + $0x18] sm:$0xff]
    %v795 = vld [vmem:[%s207] sm:$0xff]
    %v796 = vld [vmem:[%s207 + $0x8] sm:$0xff]
    %v797 = vld [vmem:[%s207 + $0x10] sm:$0xff]
    %v798 = vld [vmem:[%s207 + $0x18] sm:$0xff]
    %v800 = vsel %vm122, %v789, 0
    %802 = vmatpush.msra.mxu0 0.0
    %803 = vmatpush.msra.mxu0 0.0
    %804 = vmatpush.msra.mxu0 0.0
    %805 = vmatpush.msra.mxu0 0.0
    %806 = vmatpush.msra.mxu0 0.0
    %807 = vmatpush.msra.mxu0 0.0
    %808 = vmatpush.msra.mxu0 0.0
    %809 = vmatpush.msra.mxu0 0.0
    %810 = vmatpush.msra.mxu0 0.0
    %811 = vmatpush.msra.mxu0 0.0
    %812 = vmatpush.msra.mxu0 0.0
    %813 = vmatpush.msra.mxu0 0.0
    %814 = vmatpush.msra.mxu0 %v798
    %815 = vmatpush.msra.mxu0 %v797
    %816 = vmatpush.msra.mxu0 %v796
    %817 = vmatpush.msra.mxu0 %v795
    %818 = vmatmul.f32.gmra.mxu0 %v800
    %v819 = vpop.f32.mrf.mxu0
    %v820 = vadd.f32 0.0, %v819
    %821 = vdwg.mxu0
    %v822 = vsel %vm122, %v781, 0
    %824 = vmatpush.msra.mxu0 0.0
    %825 = vmatpush.msra.mxu0 0.0
    %826 = vmatpush.msra.mxu0 0.0
    %827 = vmatpush.msra.mxu0 0.0
    %828 = vmatpush.msra.mxu0 0.0
    %829 = vmatpush.msra.mxu0 0.0
    %830 = vmatpush.msra.mxu0 0.0
    %831 = vmatpush.msra.mxu0 0.0
    %832 = vmatpush.msra.mxu0 0.0
    %833 = vmatpush.msra.mxu0 0.0
    %834 = vmatpush.msra.mxu0 0.0
    %835 = vmatpush.msra.mxu0 0.0
    %836 = vmatpush.msra.mxu0 %v794
    %837 = vmatpush.msra.mxu0 %v793
    %838 = vmatpush.msra.mxu0 %v792
    %839 = vmatpush.msra.mxu0 %v791
    %840 = vmatmul.f32.gmra.mxu0 %v822
    %v841 = vpop.f32.mrf.mxu0
    %v842 = vadd.f32 %v820, %v841
    %843 = vdwg.mxu0
    %v844 = vld [vmem:[%s5] sm:$0x1]
    %v846 = vperm.slane %v844, 0
    %v848 = vadd.f32 %v842, %v846
    %v849 = vxor.u32 %v848, 2147483648
    %v850 = vmul.f32 %v849, 1.442695
    %v851 = vpow.pop %v850
    %v852 = vadd.f32 %v851, 1.0
    %v853 = vrcp.pop %v852
    %v854 = vmul.f32 %v852, %v853
    %v855 = vsub.f32 1.0, %v854
    %v856 = vmul.f32 %v853, %v855
    %v857 = vadd.f32 %v853, %v856
    %vm858 = vweird.f32 %v852
    %vm859 = vweird.f32 %v853
    %vm860 = vmor %vm858, %vm859
    %v861 = vsel %vm860, %v853, %v857
    %v862 = vand.u32 2147483647, %v852
    %vm863 = vcmp.eq.f32.partialorder %v862, 8.507059e+37
    %v864 = vand.u32 %v852, 2147483648
    %v865 = vor.u32 1.1754944e-38, %v864
    %v866 = vsel %vm863, %v865, %v861
    %v867 = vmul.f32 1.0, %v866
    %v868 = vtanh.pop %v848
    %870 = vrot.lane.b32.xlu0 %v790, 32
    %v871 = vpop.permute.xlu0 %870
    %v873 = vmul.f32 %v867, %v871
    %875 = vrot.lane.b32.xlu0 %v868, 32
    %v876 = vpop.permute.xlu0 %875
    %v878 = vmul.f32 %v867, %v876
    %880 = vrot.lane.b32.xlu0 %v878, 32
    %v881 = vpop.permute.xlu0 %880
    %v883 = vadd.f32 %v873, %v881
    %v884 = vtanh.pop %v883
    %886 = vrot.lane.b32.xlu0 %v884, 32
    %v887 = vpop.permute.xlu0 %886
    %v889 = vmul.f32 %v867, %v887
    %891 = vrot.lane.b32.xlu0 %v889, 64
    %v892 = vpop.permute.xlu0 %891
    %894 = vst.msk [vmem:[%s199] sm:$0x3] %vm192, %v892
    %896 = vrot.lane.b32.xlu0 %v883, 96
    %v897 = vpop.permute.xlu0 %896
    %899 = vst.msk [vmem:[%s201] sm:$0x3] %vm192, %v897
    %s900 = scalar_lea.vmem [#allocation13], 6
    %901 = vst.msk [vmem:[%s900] sm:$0x3] %vm192, %v892
    %s902 = scalar_lea.vmem [#allocation4], 8
    %v903 = vld [vmem:[%s902] sm:$0x3]
    %v904 = vld [vmem:[#allocation2] sm:$0x3]
    %v905 = vld [vmem:[#allocation3] sm:$0x3]
    %v906 = vld [vmem:[#allocation10] sm:$0xff]
    %v907 = vld [vmem:[#allocation10 + $0x8] sm:$0xff]
    %v908 = vld [vmem:[#allocation10 + $0x10] sm:$0xff]
    %v909 = vld [vmem:[#allocation10 + $0x18] sm:$0xff]
    %v911 = vsel %vm122, %v904, 0
    %913 = vmatpush.msra.mxu0 0.0
    %914 = vmatpush.msra.mxu0 0.0
    %915 = vmatpush.msra.mxu0 0.0
    %916 = vmatpush.msra.mxu0 0.0
    %917 = vmatpush.msra.mxu0 0.0
    %918 = vmatpush.msra.mxu0 0.0
    %919 = vmatpush.msra.mxu0 0.0
    %920 = vmatpush.msra.mxu0 0.0
    %921 = vmatpush.msra.mxu0 0.0
    %922 = vmatpush.msra.mxu0 0.0
    %923 = vmatpush.msra.mxu0 0.0
    %924 = vmatpush.msra.mxu0 0.0
    %925 = vmatpush.msra.mxu0 %v909
    %926 = vmatpush.msra.mxu0 %v908
    %927 = vmatpush.msra.mxu0 %v907
    %928 = vmatpush.msra.mxu0 %v906
    %929 = vmatmul.f32.gmra.mxu0 %v911
    %v930 = vpop.f32.mrf.mxu0
    %v931 = vadd.f32 0.0, %v930
    %932 = vdwg.mxu0
    %v933 = vadd.f32 %v903, %v931
    %v934 = vxor.u32 %v933, 2147483648
    %v935 = vmul.f32 %v934, 1.442695
    %v936 = vpow.pop %v935
    %v937 = vadd.f32 %v936, 1.0
    %v938 = vrcp.pop %v937
    %v939 = vmul.f32 %v937, %v938
    %v940 = vsub.f32 1.0, %v939
    %v941 = vmul.f32 %v938, %v940
    %v942 = vadd.f32 %v938, %v941
    %vm943 = vweird.f32 %v937
    %vm944 = vweird.f32 %v938
    %vm945 = vmor %vm943, %vm944
    %v946 = vsel %vm945, %v938, %v942
    %v947 = vand.u32 2147483647, %v937
    %vm948 = vcmp.eq.f32.partialorder %v947, 8.507059e+37
    %v949 = vand.u32 %v937, 2147483648
    %v950 = vor.u32 1.1754944e-38, %v949
    %v951 = vsel %vm948, %v950, %v946
    %v952 = vmul.f32 1.0, %v951
    %v953 = vtanh.pop %v933
    %955 = vrot.lane.b32.xlu0 %v905, 32
    %v956 = vpop.permute.xlu0 %955
    %v958 = vmul.f32 %v952, %v956
    %960 = vrot.lane.b32.xlu0 %v953, 32
    %v961 = vpop.permute.xlu0 %960
    %v963 = vmul.f32 %v952, %v961
    %965 = vrot.lane.b32.xlu0 %v963, 32
    %v966 = vpop.permute.xlu0 %965
    %v968 = vadd.f32 %v958, %v966
    %v969 = vtanh.pop %v968
    %971 = vrot.lane.b32.xlu0 %v969, 32
    %v972 = vpop.permute.xlu0 %971
    %v974 = vmul.f32 %v952, %v972
    %976 = vrot.lane.b32.xlu0 %v974, 64
    %v977 = vpop.permute.xlu0 %976
    %979 = vst.msk [vmem:[#allocation2] sm:$0x3] %vm192, %v977
    %981 = vrot.lane.b32.xlu0 %v968, 96
    %v982 = vpop.permute.xlu0 %981
    %984 = vst.msk [vmem:[#allocation3] sm:$0x3] %vm192, %v982
    %v985 = vld [vmem:[%s199] sm:$0x3]
    %v986 = vld [vmem:[%s201] sm:$0x3]
    %v987 = vld [vmem:[#allocation12] sm:$0xff]
    %v988 = vld [vmem:[#allocation12 + $0x8] sm:$0xff]
    %v989 = vld [vmem:[#allocation12 + $0x10] sm:$0xff]
    %v990 = vld [vmem:[#allocation12 + $0x18] sm:$0xff]
    %v991 = vld [vmem:[%s207] sm:$0xff]
    %v992 = vld [vmem:[%s207 + $0x8] sm:$0xff]
    %v993 = vld [vmem:[%s207 + $0x10] sm:$0xff]
    %v994 = vld [vmem:[%s207 + $0x18] sm:$0xff]
    %v996 = vsel %vm122, %v985, 0
    %998 = vmatpush.msra.mxu0 0.0
    %999 = vmatpush.msra.mxu0 0.0
    %1000 = vmatpush.msra.mxu0 0.0
    %1001 = vmatpush.msra.mxu0 0.0
    %1002 = vmatpush.msra.mxu0 0.0
    %1003 = vmatpush.msra.mxu0 0.0
    %1004 = vmatpush.msra.mxu0 0.0
    %1005 = vmatpush.msra.mxu0 0.0
    %1006 = vmatpush.msra.mxu0 0.0
    %1007 = vmatpush.msra.mxu0 0.0
    %1008 = vmatpush.msra.mxu0 0.0
    %1009 = vmatpush.msra.mxu0 0.0
    %1010 = vmatpush.msra.mxu0 %v994
    %1011 = vmatpush.msra.mxu0 %v993
    %1012 = vmatpush.msra.mxu0 %v992
    %1013 = vmatpush.msra.mxu0 %v991
    %1014 = vmatmul.f32.gmra.mxu0 %v996
    %v1015 = vpop.f32.mrf.mxu0
    %v1016 = vadd.f32 0.0, %v1015
    %1017 = vdwg.mxu0
    %v1018 = vsel %vm122, %v977, 0
    %1020 = vmatpush.msra.mxu0 0.0
    %1021 = vmatpush.msra.mxu0 0.0
    %1022 = vmatpush.msra.mxu0 0.0
    %1023 = vmatpush.msra.mxu0 0.0
    %1024 = vmatpush.msra.mxu0 0.0
    %1025 = vmatpush.msra.mxu0 0.0
    %1026 = vmatpush.msra.mxu0 0.0
    %1027 = vmatpush.msra.mxu0 0.0
    %1028 = vmatpush.msra.mxu0 0.0
    %1029 = vmatpush.msra.mxu0 0.0
    %1030 = vmatpush.msra.mxu0 0.0
    %1031 = vmatpush.msra.mxu0 0.0
    %1032 = vmatpush.msra.mxu0 %v990
    %1033 = vmatpush.msra.mxu0 %v989
    %1034 = vmatpush.msra.mxu0 %v988
    %1035 = vmatpush.msra.mxu0 %v987
    %1036 = vmatmul.f32.gmra.mxu0 %v1018
    %v1037 = vpop.f32.mrf.mxu0
    %v1038 = vadd.f32 %v1016, %v1037
    %1039 = vdwg.mxu0
    %v1040 = vld [vmem:[%s5] sm:$0x1]
    %v1042 = vperm.slane %v1040, 0
    %v1044 = vadd.f32 %v1038, %v1042
    %v1045 = vxor.u32 %v1044, 2147483648
    %v1046 = vmul.f32 %v1045, 1.442695
    %v1047 = vpow.pop %v1046
    %v1048 = vadd.f32 %v1047, 1.0
    %v1049 = vrcp.pop %v1048
    %v1050 = vmul.f32 %v1048, %v1049
    %v1051 = vsub.f32 1.0, %v1050
    %v1052 = vmul.f32 %v1049, %v1051
    %v1053 = vadd.f32 %v1049, %v1052
    %vm1054 = vweird.f32 %v1048
    %vm1055 = vweird.f32 %v1049
    %vm1056 = vmor %vm1054, %vm1055
    %v1057 = vsel %vm1056, %v1049, %v1053
    %v1058 = vand.u32 2147483647, %v1048
    %vm1059 = vcmp.eq.f32.partialorder %v1058, 8.507059e+37
    %v1060 = vand.u32 %v1048, 2147483648
    %v1061 = vor.u32 1.1754944e-38, %v1060
    %v1062 = vsel %vm1059, %v1061, %v1057
    %v1063 = vmul.f32 1.0, %v1062
    %v1064 = vtanh.pop %v1044
    %1066 = vrot.lane.b32.xlu0 %v986, 32
    %v1067 = vpop.permute.xlu0 %1066
    %v1069 = vmul.f32 %v1063, %v1067
    %1071 = vrot.lane.b32.xlu0 %v1064, 32
    %v1072 = vpop.permute.xlu0 %1071
    %v1074 = vmul.f32 %v1063, %v1072
    %1076 = vrot.lane.b32.xlu0 %v1074, 32
    %v1077 = vpop.permute.xlu0 %1076
    %v1079 = vadd.f32 %v1069, %v1077
    %v1080 = vtanh.pop %v1079
    %1082 = vrot.lane.b32.xlu0 %v1080, 32
    %v1083 = vpop.permute.xlu0 %1082
    %v1085 = vmul.f32 %v1063, %v1083
    %1087 = vrot.lane.b32.xlu0 %v1085, 64
    %v1088 = vpop.permute.xlu0 %1087
    %1090 = vst.msk [vmem:[%s199] sm:$0x3] %vm192, %v1088
    %1092 = vrot.lane.b32.xlu0 %v1079, 96
    %v1093 = vpop.permute.xlu0 %1092
    %1095 = vst.msk [vmem:[%s201] sm:$0x3] %vm192, %v1093
    %s1096 = scalar_lea.vmem [#allocation13], 8
    %1097 = vst.msk [vmem:[%s1096] sm:$0x3] %vm192, %v1088
    %s1098 = scalar_lea.vmem [#allocation4], 10
    %v1099 = vld [vmem:[%s1098] sm:$0x3]
    %v1100 = vld [vmem:[#allocation2] sm:$0x3]
    %v1101 = vld [vmem:[#allocation3] sm:$0x3]
    %v1102 = vld [vmem:[#allocation10] sm:$0xff]
    %v1103 = vld [vmem:[#allocation10 + $0x8] sm:$0xff]
    %v1104 = vld [vmem:[#allocation10 + $0x10] sm:$0xff]
    %v1105 = vld [vmem:[#allocation10 + $0x18] sm:$0xff]
    %v1107 = vsel %vm122, %v1100, 0
    %1109 = vmatpush.msra.mxu0 0.0
    %1110 = vmatpush.msra.mxu0 0.0
    %1111 = vmatpush.msra.mxu0 0.0
    %1112 = vmatpush.msra.mxu0 0.0
    %1113 = vmatpush.msra.mxu0 0.0
    %1114 = vmatpush.msra.mxu0 0.0
    %1115 = vmatpush.msra.mxu0 0.0
    %1116 = vmatpush.msra.mxu0 0.0
    %1117 = vmatpush.msra.mxu0 0.0
    %1118 = vmatpush.msra.mxu0 0.0
    %1119 = vmatpush.msra.mxu0 0.0
    %1120 = vmatpush.msra.mxu0 0.0
    %1121 = vmatpush.msra.mxu0 %v1105
    %1122 = vmatpush.msra.mxu0 %v1104
    %1123 = vmatpush.msra.mxu0 %v1103
    %1124 = vmatpush.msra.mxu0 %v1102
    %1125 = vmatmul.f32.gmra.mxu0 %v1107
    %v1126 = vpop.f32.mrf.mxu0
    %v1127 = vadd.f32 0.0, %v1126
    %1128 = vdwg.mxu0
    %v1129 = vadd.f32 %v1099, %v1127
    %v1130 = vxor.u32 %v1129, 2147483648
    %v1131 = vmul.f32 %v1130, 1.442695
    %v1132 = vpow.pop %v1131
    %v1133 = vadd.f32 %v1132, 1.0
    %v1134 = vrcp.pop %v1133
    %v1135 = vmul.f32 %v1133, %v1134
    %v1136 = vsub.f32 1.0, %v1135
    %v1137 = vmul.f32 %v1134, %v1136
    %v1138 = vadd.f32 %v1134, %v1137
    %vm1139 = vweird.f32 %v1133
    %vm1140 = vweird.f32 %v1134
    %vm1141 = vmor %vm1139, %vm1140
    %v1142 = vsel %vm1141, %v1134, %v1138
    %v1143 = vand.u32 2147483647, %v1133
    %vm1144 = vcmp.eq.f32.partialorder %v1143, 8.507059e+37
    %v1145 = vand.u32 %v1133, 2147483648
    %v1146 = vor.u32 1.1754944e-38, %v1145
    %v1147 = vsel %vm1144, %v1146, %v1142
    %v1148 = vmul.f32 1.0, %v1147
    %v1149 = vtanh.pop %v1129
    %1151 = vrot.lane.b32.xlu0 %v1101, 32
    %v1152 = vpop.permute.xlu0 %1151
    %v1154 = vmul.f32 %v1148, %v1152
    %1156 = vrot.lane.b32.xlu0 %v1149, 32
    %v1157 = vpop.permute.xlu0 %1156
    %v1159 = vmul.f32 %v1148, %v1157
    %1161 = vrot.lane.b32.xlu0 %v1159, 32
    %v1162 = vpop.permute.xlu0 %1161
    %v1164 = vadd.f32 %v1154, %v1162
    %v1165 = vtanh.pop %v1164
    %1167 = vrot.lane.b32.xlu0 %v1165, 32
    %v1168 = vpop.permute.xlu0 %1167
    %v1170 = vmul.f32 %v1148, %v1168
    %1172 = vrot.lane.b32.xlu0 %v1170, 64
    %v1173 = vpop.permute.xlu0 %1172
    %1175 = vst.msk [vmem:[#allocation2] sm:$0x3] %vm192, %v1173
    %1177 = vrot.lane.b32.xlu0 %v1164, 96
    %v1178 = vpop.permute.xlu0 %1177
    %1180 = vst.msk [vmem:[#allocation3] sm:$0x3] %vm192, %v1178
    %v1181 = vld [vmem:[%s199] sm:$0x3]
    %v1182 = vld [vmem:[%s201] sm:$0x3]
    %v1183 = vld [vmem:[#allocation12] sm:$0xff]
    %v1184 = vld [vmem:[#allocation12 + $0x8] sm:$0xff]
    %v1185 = vld [vmem:[#allocation12 + $0x10] sm:$0xff]
    %v1186 = vld [vmem:[#allocation12 + $0x18] sm:$0xff]
    %v1187 = vld [vmem:[%s207] sm:$0xff]
    %v1188 = vld [vmem:[%s207 + $0x8] sm:$0xff]
    %v1189 = vld [vmem:[%s207 + $0x10] sm:$0xff]
    %v1190 = vld [vmem:[%s207 + $0x18] sm:$0xff]
    %v1192 = vsel %vm122, %v1181, 0
    %1194 = vmatpush.msra.mxu0 0.0
    %1195 = vmatpush.msra.mxu0 0.0
    %1196 = vmatpush.msra.mxu0 0.0
    %1197 = vmatpush.msra.mxu0 0.0
    %1198 = vmatpush.msra.mxu0 0.0
    %1199 = vmatpush.msra.mxu0 0.0
    %1200 = vmatpush.msra.mxu0 0.0
    %1201 = vmatpush.msra.mxu0 0.0
    %1202 = vmatpush.msra.mxu0 0.0
    %1203 = vmatpush.msra.mxu0 0.0
    %1204 = vmatpush.msra.mxu0 0.0
    %1205 = vmatpush.msra.mxu0 0.0
    %1206 = vmatpush.msra.mxu0 %v1190
    %1207 = vmatpush.msra.mxu0 %v1189
    %1208 = vmatpush.msra.mxu0 %v1188
    %1209 = vmatpush.msra.mxu0 %v1187
    %1210 = vmatmul.f32.gmra.mxu0 %v1192
    %v1211 = vpop.f32.mrf.mxu0
    %v1212 = vadd.f32 0.0, %v1211
    %1213 = vdwg.mxu0
    %v1214 = vsel %vm122, %v1173, 0
    %1216 = vmatpush.msra.mxu0 0.0
    %1217 = vmatpush.msra.mxu0 0.0
    %1218 = vmatpush.msra.mxu0 0.0
    %1219 = vmatpush.msra.mxu0 0.0
    %1220 = vmatpush.msra.mxu0 0.0
    %1221 = vmatpush.msra.mxu0 0.0
    %1222 = vmatpush.msra.mxu0 0.0
    %1223 = vmatpush.msra.mxu0 0.0
    %1224 = vmatpush.msra.mxu0 0.0
    %1225 = vmatpush.msra.mxu0 0.0
    %1226 = vmatpush.msra.mxu0 0.0
    %1227 = vmatpush.msra.mxu0 0.0
    %1228 = vmatpush.msra.mxu0 %v1186
    %1229 = vmatpush.msra.mxu0 %v1185
    %1230 = vmatpush.msra.mxu0 %v1184
    %1231 = vmatpush.msra.mxu0 %v1183
    %1232 = vmatmul.f32.gmra.mxu0 %v1214
    %v1233 = vpop.f32.mrf.mxu0
    %v1234 = vadd.f32 %v1212, %v1233
    %1235 = vdwg.mxu0
    %v1236 = vld [vmem:[%s5] sm:$0x1]
    %v1238 = vperm.slane %v1236, 0
    %v1240 = vadd.f32 %v1234, %v1238
    %v1241 = vxor.u32 %v1240, 2147483648
    %v1242 = vmul.f32 %v1241, 1.442695
    %v1243 = vpow.pop %v1242
    %v1244 = vadd.f32 %v1243, 1.0
    %v1245 = vrcp.pop %v1244
    %v1246 = vmul.f32 %v1244, %v1245
    %v1247 = vsub.f32 1.0, %v1246
    %v1248 = vmul.f32 %v1245, %v1247
    %v1249 = vadd.f32 %v1245, %v1248
    %vm1250 = vweird.f32 %v1244
    %vm1251 = vweird.f32 %v1245
    %vm1252 = vmor %vm1250, %vm1251
    %v1253 = vsel %vm1252, %v1245, %v1249
    %v1254 = vand.u32 2147483647, %v1244
    %vm1255 = vcmp.eq.f32.partialorder %v1254, 8.507059e+37
    %v1256 = vand.u32 %v1244, 2147483648
    %v1257 = vor.u32 1.1754944e-38, %v1256
    %v1258 = vsel %vm1255, %v1257, %v1253
    %v1259 = vmul.f32 1.0, %v1258
    %v1260 = vtanh.pop %v1240
    %1262 = vrot.lane.b32.xlu0 %v1182, 32
    %v1263 = vpop.permute.xlu0 %1262
    %v1265 = vmul.f32 %v1259, %v1263
    %1267 = vrot.lane.b32.xlu0 %v1260, 32
    %v1268 = vpop.permute.xlu0 %1267
    %v1270 = vmul.f32 %v1259, %v1268
    %1272 = vrot.lane.b32.xlu0 %v1270, 32
    %v1273 = vpop.permute.xlu0 %1272
    %v1275 = vadd.f32 %v1265, %v1273
    %v1276 = vtanh.pop %v1275
    %1278 = vrot.lane.b32.xlu0 %v1276, 32
    %v1279 = vpop.permute.xlu0 %1278
    %v1281 = vmul.f32 %v1259, %v1279
    %1283 = vrot.lane.b32.xlu0 %v1281, 64
    %v1284 = vpop.permute.xlu0 %1283
    %1286 = vst.msk [vmem:[%s199] sm:$0x3] %vm192, %v1284
    %1288 = vrot.lane.b32.xlu0 %v1275, 96
    %v1289 = vpop.permute.xlu0 %1288
    %1291 = vst.msk [vmem:[%s201] sm:$0x3] %vm192, %v1289
    %s1292 = scalar_lea.vmem [#allocation13], 10
    %1293 = vst.msk [vmem:[%s1292] sm:$0x3] %vm192, %v1284
    %s1294 = scalar_lea.vmem [#allocation4], 12
    %v1295 = vld [vmem:[%s1294] sm:$0x3]
    %v1296 = vld [vmem:[#allocation2] sm:$0x3]
    %v1297 = vld [vmem:[#allocation3] sm:$0x3]
    %v1298 = vld [vmem:[#allocation10] sm:$0xff]
    %v1299 = vld [vmem:[#allocation10 + $0x8] sm:$0xff]
    %v1300 = vld [vmem:[#allocation10 + $0x10] sm:$0xff]
    %v1301 = vld [vmem:[#allocation10 + $0x18] sm:$0xff]
    %v1303 = vsel %vm122, %v1296, 0
    %1305 = vmatpush.msra.mxu0 0.0
    %1306 = vmatpush.msra.mxu0 0.0
    %1307 = vmatpush.msra.mxu0 0.0
    %1308 = vmatpush.msra.mxu0 0.0
    %1309 = vmatpush.msra.mxu0 0.0
    %1310 = vmatpush.msra.mxu0 0.0
    %1311 = vmatpush.msra.mxu0 0.0
    %1312 = vmatpush.msra.mxu0 0.0
    %1313 = vmatpush.msra.mxu0 0.0
    %1314 = vmatpush.msra.mxu0 0.0
    %1315 = vmatpush.msra.mxu0 0.0
    %1316 = vmatpush.msra.mxu0 0.0
    %1317 = vmatpush.msra.mxu0 %v1301
    %1318 = vmatpush.msra.mxu0 %v1300
    %1319 = vmatpush.msra.mxu0 %v1299
    %1320 = vmatpush.msra.mxu0 %v1298
    %1321 = vmatmul.f32.gmra.mxu0 %v1303
    %v1322 = vpop.f32.mrf.mxu0
    %v1323 = vadd.f32 0.0, %v1322
    %1324 = vdwg.mxu0
    %v1325 = vadd.f32 %v1295, %v1323
    %v1326 = vxor.u32 %v1325, 2147483648
    %v1327 = vmul.f32 %v1326, 1.442695
    %v1328 = vpow.pop %v1327
    %v1329 = vadd.f32 %v1328, 1.0
    %v1330 = vrcp.pop %v1329
    %v1331 = vmul.f32 %v1329, %v1330
    %v1332 = vsub.f32 1.0, %v1331
    %v1333 = vmul.f32 %v1330, %v1332
    %v1334 = vadd.f32 %v1330, %v1333
    %vm1335 = vweird.f32 %v1329
    %vm1336 = vweird.f32 %v1330
    %vm1337 = vmor %vm1335, %vm1336
    %v1338 = vsel %vm1337, %v1330, %v1334
    %v1339 = vand.u32 2147483647, %v1329
    %vm1340 = vcmp.eq.f32.partialorder %v1339, 8.507059e+37
    %v1341 = vand.u32 %v1329, 2147483648
    %v1342 = vor.u32 1.1754944e-38, %v1341
    %v1343 = vsel %vm1340, %v1342, %v1338
    %v1344 = vmul.f32 1.0, %v1343
    %v1345 = vtanh.pop %v1325
    %1347 = vrot.lane.b32.xlu0 %v1297, 32
    %v1348 = vpop.permute.xlu0 %1347
    %v1350 = vmul.f32 %v1344, %v1348
    %1352 = vrot.lane.b32.xlu0 %v1345, 32
    %v1353 = vpop.permute.xlu0 %1352
    %v1355 = vmul.f32 %v1344, %v1353
    %1357 = vrot.lane.b32.xlu0 %v1355, 32
    %v1358 = vpop.permute.xlu0 %1357
    %v1360 = vadd.f32 %v1350, %v1358
    %v1361 = vtanh.pop %v1360
    %1363 = vrot.lane.b32.xlu0 %v1361, 32
    %v1364 = vpop.permute.xlu0 %1363
    %v1366 = vmul.f32 %v1344, %v1364
    %1368 = vrot.lane.b32.xlu0 %v1366, 64
    %v1369 = vpop.permute.xlu0 %1368
    %1371 = vst.msk [vmem:[#allocation2] sm:$0x3] %vm192, %v1369
    %1373 = vrot.lane.b32.xlu0 %v1360, 96
    %v1374 = vpop.permute.xlu0 %1373
    %1376 = vst.msk [vmem:[#allocation3] sm:$0x3] %vm192, %v1374
    %v1377 = vld [vmem:[%s199] sm:$0x3]
    %v1378 = vld [vmem:[%s201] sm:$0x3]
    %v1379 = vld [vmem:[#allocation12] sm:$0xff]
    %v1380 = vld [vmem:[#allocation12 + $0x8] sm:$0xff]
    %v1381 = vld [vmem:[#allocation12 + $0x10] sm:$0xff]
    %v1382 = vld [vmem:[#allocation12 + $0x18] sm:$0xff]
    %v1383 = vld [vmem:[%s207] sm:$0xff]
    %v1384 = vld [vmem:[%s207 + $0x8] sm:$0xff]
    %v1385 = vld [vmem:[%s207 + $0x10] sm:$0xff]
    %v1386 = vld [vmem:[%s207 + $0x18] sm:$0xff]
    %v1388 = vsel %vm122, %v1377, 0
    %1390 = vmatpush.msra.mxu0 0.0
    %1391 = vmatpush.msra.mxu0 0.0
    %1392 = vmatpush.msra.mxu0 0.0
    %1393 = vmatpush.msra.mxu0 0.0
    %1394 = vmatpush.msra.mxu0 0.0
    %1395 = vmatpush.msra.mxu0 0.0
    %1396 = vmatpush.msra.mxu0 0.0
    %1397 = vmatpush.msra.mxu0 0.0
    %1398 = vmatpush.msra.mxu0 0.0
    %1399 = vmatpush.msra.mxu0 0.0
    %1400 = vmatpush.msra.mxu0 0.0
    %1401 = vmatpush.msra.mxu0 0.0
    %1402 = vmatpush.msra.mxu0 %v1386
    %1403 = vmatpush.msra.mxu0 %v1385
    %1404 = vmatpush.msra.mxu0 %v1384
    %1405 = vmatpush.msra.mxu0 %v1383
    %1406 = vmatmul.f32.gmra.mxu0 %v1388
    %v1407 = vpop.f32.mrf.mxu0
    %v1408 = vadd.f32 0.0, %v1407
    %1409 = vdwg.mxu0
    %v1410 = vsel %vm122, %v1369, 0
    %1412 = vmatpush.msra.mxu0 0.0
    %1413 = vmatpush.msra.mxu0 0.0
    %1414 = vmatpush.msra.mxu0 0.0
    %1415 = vmatpush.msra.mxu0 0.0
    %1416 = vmatpush.msra.mxu0 0.0
    %1417 = vmatpush.msra.mxu0 0.0
    %1418 = vmatpush.msra.mxu0 0.0
    %1419 = vmatpush.msra.mxu0 0.0
    %1420 = vmatpush.msra.mxu0 0.0
    %1421 = vmatpush.msra.mxu0 0.0
    %1422 = vmatpush.msra.mxu0 0.0
    %1423 = vmatpush.msra.mxu0 0.0
    %1424 = vmatpush.msra.mxu0 %v1382
    %1425 = vmatpush.msra.mxu0 %v1381
    %1426 = vmatpush.msra.mxu0 %v1380
    %1427 = vmatpush.msra.mxu0 %v1379
    %1428 = vmatmul.f32.gmra.mxu0 %v1410
    %v1429 = vpop.f32.mrf.mxu0
    %v1430 = vadd.f32 %v1408, %v1429
    %1431 = vdwg.mxu0
    %v1432 = vld [vmem:[%s5] sm:$0x1]
    %v1434 = vperm.slane %v1432, 0
    %v1436 = vadd.f32 %v1430, %v1434
    %v1437 = vxor.u32 %v1436, 2147483648
    %v1438 = vmul.f32 %v1437, 1.442695
    %v1439 = vpow.pop %v1438
    %v1440 = vadd.f32 %v1439, 1.0
    %v1441 = vrcp.pop %v1440
    %v1442 = vmul.f32 %v1440, %v1441
    %v1443 = vsub.f32 1.0, %v1442
    %v1444 = vmul.f32 %v1441, %v1443
    %v1445 = vadd.f32 %v1441, %v1444
    %vm1446 = vweird.f32 %v1440
    %vm1447 = vweird.f32 %v1441
    %vm1448 = vmor %vm1446, %vm1447
    %v1449 = vsel %vm1448, %v1441, %v1445
    %v1450 = vand.u32 2147483647, %v1440
    %vm1451 = vcmp.eq.f32.partialorder %v1450, 8.507059e+37
    %v1452 = vand.u32 %v1440, 2147483648
    %v1453 = vor.u32 1.1754944e-38, %v1452
    %v1454 = vsel %vm1451, %v1453, %v1449
    %v1455 = vmul.f32 1.0, %v1454
    %v1456 = vtanh.pop %v1436
    %1458 = vrot.lane.b32.xlu0 %v1378, 32
    %v1459 = vpop.permute.xlu0 %1458
    %v1461 = vmul.f32 %v1455, %v1459
    %1463 = vrot.lane.b32.xlu0 %v1456, 32
    %v1464 = vpop.permute.xlu0 %1463
    %v1466 = vmul.f32 %v1455, %v1464
    %1468 = vrot.lane.b32.xlu0 %v1466, 32
    %v1469 = vpop.permute.xlu0 %1468
    %v1471 = vadd.f32 %v1461, %v1469
    %v1472 = vtanh.pop %v1471
    %1474 = vrot.lane.b32.xlu0 %v1472, 32
    %v1475 = vpop.permute.xlu0 %1474
    %v1477 = vmul.f32 %v1455, %v1475
    %1479 = vrot.lane.b32.xlu0 %v1477, 64
    %v1480 = vpop.permute.xlu0 %1479
    %1482 = vst.msk [vmem:[%s199] sm:$0x3] %vm192, %v1480
    %1484 = vrot.lane.b32.xlu0 %v1471, 96
    %v1485 = vpop.permute.xlu0 %1484
    %1487 = vst.msk [vmem:[%s201] sm:$0x3] %vm192, %v1485
    %s1488 = scalar_lea.vmem [#allocation13], 12
    %1489 = vst.msk [vmem:[%s1488] sm:$0x3] %vm192, %v1480
    %s1490 = scalar_lea.vmem [#allocation4], 14
    %v1491 = vld [vmem:[%s1490] sm:$0x3]
    %v1492 = vld [vmem:[#allocation2] sm:$0x3]
    %v1493 = vld [vmem:[#allocation3] sm:$0x3]
    %v1494 = vld [vmem:[#allocation10] sm:$0xff]
    %v1495 = vld [vmem:[#allocation10 + $0x8] sm:$0xff]
    %v1496 = vld [vmem:[#allocation10 + $0x10] sm:$0xff]
    %v1497 = vld [vmem:[#allocation10 + $0x18] sm:$0xff]
    %v1499 = vsel %vm122, %v1492, 0
    %1501 = vmatpush.msra.mxu0 0.0
    %1502 = vmatpush.msra.mxu0 0.0
    %1503 = vmatpush.msra.mxu0 0.0
    %1504 = vmatpush.msra.mxu0 0.0
    %1505 = vmatpush.msra.mxu0 0.0
    %1506 = vmatpush.msra.mxu0 0.0
    %1507 = vmatpush.msra.mxu0 0.0
    %1508 = vmatpush.msra.mxu0 0.0
    %1509 = vmatpush.msra.mxu0 0.0
    %1510 = vmatpush.msra.mxu0 0.0
    %1511 = vmatpush.msra.mxu0 0.0
    %1512 = vmatpush.msra.mxu0 0.0
    %1513 = vmatpush.msra.mxu0 %v1497
    %1514 = vmatpush.msra.mxu0 %v1496
    %1515 = vmatpush.msra.mxu0 %v1495
    %1516 = vmatpush.msra.mxu0 %v1494
    %1517 = vmatmul.f32.gmra.mxu0 %v1499
    %v1518 = vpop.f32.mrf.mxu0
    %v1519 = vadd.f32 0.0, %v1518
    %1520 = vdwg.mxu0
    %v1521 = vadd.f32 %v1491, %v1519
    %v1522 = vxor.u32 %v1521, 2147483648
    %v1523 = vmul.f32 %v1522, 1.442695
    %v1524 = vpow.pop %v1523
    %v1525 = vadd.f32 %v1524, 1.0
    %v1526 = vrcp.pop %v1525
    %v1527 = vmul.f32 %v1525, %v1526
    %v1528 = vsub.f32 1.0, %v1527
    %v1529 = vmul.f32 %v1526, %v1528
    %v1530 = vadd.f32 %v1526, %v1529
    %vm1531 = vweird.f32 %v1525
    %vm1532 = vweird.f32 %v1526
    %vm1533 = vmor %vm1531, %vm1532
    %v1534 = vsel %vm1533, %v1526, %v1530
    %v1535 = vand.u32 2147483647, %v1525
    %vm1536 = vcmp.eq.f32.partialorder %v1535, 8.507059e+37
    %v1537 = vand.u32 %v1525, 2147483648
    %v1538 = vor.u32 1.1754944e-38, %v1537
    %v1539 = vsel %vm1536, %v1538, %v1534
    %v1540 = vmul.f32 1.0, %v1539
    %v1541 = vtanh.pop %v1521
    %1543 = vrot.lane.b32.xlu0 %v1493, 32
    %v1544 = vpop.permute.xlu0 %1543
    %v1546 = vmul.f32 %v1540, %v1544
    %1548 = vrot.lane.b32.xlu0 %v1541, 32
    %v1549 = vpop.permute.xlu0 %1548
    %v1551 = vmul.f32 %v1540, %v1549
    %1553 = vrot.lane.b32.xlu0 %v1551, 32
    %v1554 = vpop.permute.xlu0 %1553
    %v1556 = vadd.f32 %v1546, %v1554
    %v1557 = vtanh.pop %v1556
    %1559 = vrot.lane.b32.xlu0 %v1557, 32
    %v1560 = vpop.permute.xlu0 %1559
    %v1562 = vmul.f32 %v1540, %v1560
    %1564 = vrot.lane.b32.xlu0 %v1562, 64
    %v1565 = vpop.permute.xlu0 %1564
    %1567 = vst.msk [vmem:[#allocation2] sm:$0x3] %vm192, %v1565
    %1569 = vrot.lane.b32.xlu0 %v1556, 96
    %v1570 = vpop.permute.xlu0 %1569
    %1572 = vst.msk [vmem:[#allocation3] sm:$0x3] %vm192, %v1570
    %v1573 = vld [vmem:[%s199] sm:$0x3]
    %v1574 = vld [vmem:[%s201] sm:$0x3]
    %v1575 = vld [vmem:[#allocation12] sm:$0xff]
    %v1576 = vld [vmem:[#allocation12 + $0x8] sm:$0xff]
    %v1577 = vld [vmem:[#allocation12 + $0x10] sm:$0xff]
    %v1578 = vld [vmem:[#allocation12 + $0x18] sm:$0xff]
    %v1579 = vld [vmem:[%s207] sm:$0xff]
    %v1580 = vld [vmem:[%s207 + $0x8] sm:$0xff]
    %v1581 = vld [vmem:[%s207 + $0x10] sm:$0xff]
    %v1582 = vld [vmem:[%s207 + $0x18] sm:$0xff]
    %v1584 = vsel %vm122, %v1573, 0
    %1586 = vmatpush.msra.mxu0 0.0
    %1587 = vmatpush.msra.mxu0 0.0
    %1588 = vmatpush.msra.mxu0 0.0
    %1589 = vmatpush.msra.mxu0 0.0
    %1590 = vmatpush.msra.mxu0 0.0
    %1591 = vmatpush.msra.mxu0 0.0
    %1592 = vmatpush.msra.mxu0 0.0
    %1593 = vmatpush.msra.mxu0 0.0
    %1594 = vmatpush.msra.mxu0 0.0
    %1595 = vmatpush.msra.mxu0 0.0
    %1596 = vmatpush.msra.mxu0 0.0
    %1597 = vmatpush.msra.mxu0 0.0
    %1598 = vmatpush.msra.mxu0 %v1582
    %1599 = vmatpush.msra.mxu0 %v1581
    %1600 = vmatpush.msra.mxu0 %v1580
    %1601 = vmatpush.msra.mxu0 %v1579
    %1602 = vmatmul.f32.gmra.mxu0 %v1584
    %v1603 = vpop.f32.mrf.mxu0
    %v1604 = vadd.f32 0.0, %v1603
    %1605 = vdwg.mxu0
    %v1606 = vsel %vm122, %v1565, 0
    %1608 = vmatpush.msra.mxu0 0.0
    %1609 = vmatpush.msra.mxu0 0.0
    %1610 = vmatpush.msra.mxu0 0.0
    %1611 = vmatpush.msra.mxu0 0.0
    %1612 = vmatpush.msra.mxu0 0.0
    %1613 = vmatpush.msra.mxu0 0.0
    %1614 = vmatpush.msra.mxu0 0.0
    %1615 = vmatpush.msra.mxu0 0.0
    %1616 = vmatpush.msra.mxu0 0.0
    %1617 = vmatpush.msra.mxu0 0.0
    %1618 = vmatpush.msra.mxu0 0.0
    %1619 = vmatpush.msra.mxu0 0.0
    %1620 = vmatpush.msra.mxu0 %v1578
    %1621 = vmatpush.msra.mxu0 %v1577
    %1622 = vmatpush.msra.mxu0 %v1576
    %1623 = vmatpush.msra.mxu0 %v1575
    %1624 = vmatmul.f32.gmra.mxu0 %v1606
    %v1625 = vpop.f32.mrf.mxu0
    %v1626 = vadd.f32 %v1604, %v1625
    %1627 = vdwg.mxu0
    %v1628 = vld [vmem:[%s5] sm:$0x1]
    %v1630 = vperm.slane %v1628, 0
    %v1632 = vadd.f32 %v1626, %v1630
    %v1633 = vxor.u32 %v1632, 2147483648
    %v1634 = vmul.f32 %v1633, 1.442695
    %v1635 = vpow.pop %v1634
    %v1636 = vadd.f32 %v1635, 1.0
    %v1637 = vrcp.pop %v1636
    %v1638 = vmul.f32 %v1636, %v1637
    %v1639 = vsub.f32 1.0, %v1638
    %v1640 = vmul.f32 %v1637, %v1639
    %v1641 = vadd.f32 %v1637, %v1640
    %vm1642 = vweird.f32 %v1636
    %vm1643 = vweird.f32 %v1637
    %vm1644 = vmor %vm1642, %vm1643
    %v1645 = vsel %vm1644, %v1637, %v1641
    %v1646 = vand.u32 2147483647, %v1636
    %vm1647 = vcmp.eq.f32.partialorder %v1646, 8.507059e+37
    %v1648 = vand.u32 %v1636, 2147483648
    %v1649 = vor.u32 1.1754944e-38, %v1648
    %v1650 = vsel %vm1647, %v1649, %v1645
    %v1651 = vmul.f32 1.0, %v1650
    %v1652 = vtanh.pop %v1632
    %1654 = vrot.lane.b32.xlu0 %v1574, 32
    %v1655 = vpop.permute.xlu0 %1654
    %v1657 = vmul.f32 %v1651, %v1655
    %1659 = vrot.lane.b32.xlu0 %v1652, 32
    %v1660 = vpop.permute.xlu0 %1659
    %v1662 = vmul.f32 %v1651, %v1660
    %1664 = vrot.lane.b32.xlu0 %v1662, 32
    %v1665 = vpop.permute.xlu0 %1664
    %v1667 = vadd.f32 %v1657, %v1665
    %v1668 = vtanh.pop %v1667
    %1670 = vrot.lane.b32.xlu0 %v1668, 32
    %v1671 = vpop.permute.xlu0 %1670
    %v1673 = vmul.f32 %v1651, %v1671
    %1675 = vrot.lane.b32.xlu0 %v1673, 64
    %v1676 = vpop.permute.xlu0 %1675
    %1678 = vst.msk [vmem:[%s199] sm:$0x3] %vm192, %v1676
    %1680 = vrot.lane.b32.xlu0 %v1667, 96
    %v1681 = vpop.permute.xlu0 %1680
    %1683 = vst.msk [vmem:[%s201] sm:$0x3] %vm192, %v1681
    %s1684 = scalar_lea.vmem [#allocation13], 14
    %1685 = vst.msk [vmem:[%s1684] sm:$0x3] %vm192, %v1676
    // Predicated region
    $region50: #{tpu_custom_call.1} parent=1 // pred_check
      _
    $region51: #{tpu_custom_call.1} parent=1 // pred_check_branch
      %1687 = sbr.rel (0) target = $region53
    $region52: #{tpu_custom_call.1} parent=1 // pred_region
      %1689 = vsyncadd [#allocation6], 0
      %s1690 = sshll.u32 [#allocation13], 4
      %s1691 = int_to_ptr.vmem [resolvable:$true] %s1690
      %s1692 = sshll.u32 %s6, 4
      %s1693 = int_to_ptr.hbm [resolvable:$true] %s1692
      %1698 = dma.vmem_to_hbm [thread:$0]  %s1691, 256, %s1693, [#allocation6], 32, 32, 2
    $region53: #{tpu_custom_call.1} parent=1 // pred_fallthru
      _
    // Predicated region
    $region54: #{tpu_custom_call.1} parent=1 // pred_check
      _
    $region55: #{tpu_custom_call.1} parent=1 // pred_check_branch
      %1700 = sbr.rel (0) target = $region57
    $region56: #{tpu_custom_call.1} parent=1 // pred_region
      %1702 = dma.done [#allocation6], 256
    $region57: #{tpu_custom_call.1} parent=1 // pred_fallthru
      _
    %1703 = vsyncpa [#allocation5], 1
    %1704 = vsyncpa [#allocation8], 1
    %1705 = vsyncpa [#allocation11], 1
    %1706 = vsyncpa [#allocation6], 1

</llo_original>
